<compile_context>
chip_gen: v6e
topology: v6e:2x2x1
jax: 0.10.0
libtpu: 0.0.40
codegen_flags: <defaults>
</compile_context>

<pallas_src>
import math

import jax
import jax.numpy as jnp
from jax.experimental import pallas as pl
from jax.experimental.pallas import tpu as pltpu

# Globals of the original script.
N_SERIES = 8
RNN_HID_SIZE = 32
SEQ_LEN = 8
BATCH = 4


def _rits_kernel(data_ref, lab_ref, p128_ref, p32_ref, p8_ref,
                 out_ref,
                 gh_s, gp_s, al_s, oma_s, zp_s, ms_s):
    N = data_ref.shape[1]
    TB = data_ref.shape[0] // 3            # T * Bp rows per sequence tensor
    Bp = lab_ref.shape[0]                  # padded batch (full sublane tile)
    T = TB // Bp
    H = p32_ref.shape[1]
    f32 = jnp.float32

    # ---- unpack parameter slabs (one-time, prologue) -------------------------
    wihx = p128_ref[0:N, :]                        # (N, 4H) LSTM W_ih, c_c half (pre-T)
    wihm = p128_ref[N:2 * N, :]                    # (N, 4H) LSTM W_ih, mask half (pre-T)
    whh = p128_ref[2 * N:2 * N + H, :]             # (H, 4H) LSTM W_hh (pre-T)
    bgate = p128_ref[2 * N + H:2 * N + H + 1, :]   # (1, 4H) b_ih + b_hh

    wgh = p32_ref[0:N, :]                          # (N, H)  temp_decay_h weight (pre-T)
    bgh = p32_ref[N:N + 1, :]                      # (1, H)
    wout = p32_ref[N + 1:N + 2, :]                 # (1, H)  out.weight as a row

    whist = p8_ref[0:H, :]                         # (H, N)  hist_reg (pre-T)
    wfeat = p8_ref[H:H + N, :]                     # (N, N)  feat_reg (W*(1-I)) pre-T
    wcombg = p8_ref[H + N:H + 2 * N, :]            # (N, N)  weight_combine, gamma_x half
    wcombm = p8_ref[H + 2 * N:H + 3 * N, :]        # (N, N)  weight_combine, mask half
    r = H + 3 * N
    wgx = p8_ref[r + 0:r + 1, :]                   # (1, N)  diag of temp_decay_x W
    bgx = p8_ref[r + 1:r + 2, :]                   # (1, N)
    bhist = p8_ref[r + 2:r + 3, :]                 # (1, N)
    bfeat = p8_ref[r + 3:r + 4, :]                 # (1, N)
    bcomb = p8_ref[r + 4:r + 5, :]                 # (1, N)
    bout = p8_ref[r + 5:r + 6, 0:1]                # (1, 1)

    # ---- prologue: all h/c-independent work in a few big (TB, .) ops ---------
    values = data_ref[0:TB, :]                     # (TB, N)
    masks = data_ref[TB:2 * TB, :]                 # (TB, N)
    deltas = data_ref[2 * TB:3 * TB, :]            # (TB, N)

    mx_all = masks * values                                                        # m*x
    gamma_h_all = jnp.exp(-jnp.maximum(
        jnp.dot(deltas, wgh, preferred_element_type=f32) + bgh, 0.0))              # (TB, H)
    gamma_x_all = jnp.exp(-jnp.maximum(deltas * wgx + bgx, 0.0))                   # (TB, N)
    # alpha = weight_combine([gamma_x, m]); the reference module applies NO sigmoid.
    alpha_all = (jnp.dot(gamma_x_all, wcombg, preferred_element_type=f32)
                 + jnp.dot(masks, wcombm, preferred_element_type=f32) + bcomb)     # (TB, N)
    # h/c-independent part of the LSTM gate pre-activation:
    #   [c_c, m] @ W_ih + b  =  (m*x)@Wihx + ((1-m)*c_h)@Wihx + m@Wihm + b
    gate_pre_all = (jnp.dot(masks, wihm, preferred_element_type=f32)
                    + jnp.dot(mx_all, wihx, preferred_element_type=f32) + bgate)   # (TB, 4H)
    # h-independent part of feat_reg:  x_c@Wfeat = (m*x)@Wfeat + ((1-m)*x_h)@Wfeat
    zpre_all = jnp.dot(mx_all, wfeat, preferred_element_type=f32) + bfeat          # (TB, N)

    # Park hoisted results in VMEM scratch; slice-load per step (avoids keeping
    # ~70 mostly-empty vregs live across the unrolled recurrence).
    gh_s[...] = gamma_h_all
    gp_s[...] = gate_pre_all
    al_s[...] = alpha_all
    oma_s[...] = 1.0 - alpha_all
    zp_s[...] = zpre_all
    # Per-timestep mask pre-scaled by 1/(sum(m_t)+1e-5): hoists the T reduces
    # and divides out of the recurrence (padded rows have m=0 -> no effect).
    for t in range(T):
        r0 = t * Bp
        mt = masks[r0:r0 + Bp, :]
        ms_s[r0:r0 + Bp, :] = mt * (1.0 / (jnp.sum(mt) + 1e-5))

    bhist_b = jnp.broadcast_to(bhist, (Bp, N))     # hoist broadcast out of the unrolled loop

    # ---- recurrence (fully unrolled, T is a compile-time constant) -----------
    h = jnp.zeros((Bp, H), f32)
    c = jnp.zeros((Bp, H), f32)
    acc = jnp.zeros((Bp, N), f32)                  # vector x_loss accumulator
    imput_rows = []

    for t in range(T):
        r0 = t * Bp
        x = data_ref[r0:r0 + Bp, :]                # (Bp, N)
        m = data_ref[TB + r0:TB + r0 + Bp, :]      # (Bp, N)
        gh = gh_s[r0:r0 + Bp, :]                   # (Bp, H)
        gp = gp_s[r0:r0 + Bp, :]                   # (Bp, 4H)
        al = al_s[r0:r0 + Bp, :]                   # (Bp, N)
        oma = oma_s[r0:r0 + Bp, :]                 # (Bp, N)
        zp = zp_s[r0:r0 + Bp, :]                   # (Bp, N)
        msc = ms_s[r0:r0 + Bp, :]                  # (Bp, N)

        omm = 1.0 - m
        mx = m * x

        # temporal decay on the hidden state
        h = h * gh

        # history-based regression
        x_h = jnp.dot(h, whist, preferred_element_type=f32) + bhist_b
        # feature-based regression: x_c@Wfeat + bfeat, with the (m*x) half hoisted
        z_h = jnp.dot(omm * x_h, wfeat, preferred_element_type=f32) + zp
        # combine
        c_h = al * z_h + oma * x_h
        omm_ch = omm * c_h
        c_c = mx + omm_ch
        imput_rows.append(c_c)

        # x_loss accumulation (mask already scaled by 1/(sum(m_t)+eps))
        acc = acc + (jnp.abs(x - x_h) + jnp.abs(x - z_h) + jnp.abs(x - c_h)) * msc

        # LSTM cell (nn.LSTMCell gate order i, f, g, o); mask half + biases and
        # the (m*x)@Wihx half are precomputed in gp.
        gates = (jnp.dot(omm_ch, wihx, preferred_element_type=f32)
                 + jnp.dot(h, whh, preferred_element_type=f32) + gp)
        s = jax.nn.sigmoid(gates)                  # one EUP pass over the full (Bp,128) vreg
        g = jnp.tanh(gates[:, 2 * H:3 * H])
        i_g = s[:, 0 * H:1 * H]
        f_g = s[:, 1 * H:2 * H]
        o_g = s[:, 3 * H:4 * H]
        c = f_g * c + i_g * g
        h = o_g * jnp.tanh(c)

    # ---- epilogue: single output store + classifier head + losses ------------
    imput = jnp.concatenate(imput_rows, axis=0)    # (TB, N)
    x_loss = jnp.sum(acc)

    labels = lab_ref[:, 0:1]                       # (Bp, 1)
    is_train = lab_ref[:, 1:2]                     # (Bp, 1)
    y_h = jnp.sum(h * wout, axis=1, keepdims=True) + bout   # (Bp, 1)
    max_val = jnp.maximum(-y_h, 0.0)
    bce = (y_h - y_h * labels + max_val
           + jnp.log(jnp.exp(-max_val) + jnp.exp(-y_h - max_val)))
    y_loss = jnp.sum(bce * is_train) / (jnp.sum(is_train) + 1e-5)
    total = x_loss / jnp.float32(T) + 0.1 * y_loss

    preds = jax.nn.sigmoid(y_h)                    # (Bp, 1)
    col = jax.lax.broadcasted_iota(jnp.int32, (Bp, N), 1)
    tail = jnp.where(col == 0, preds,
                     jnp.where(col == 1, jnp.broadcast_to(total, (Bp, N)), 0.0))

    out_ref[0:TB, :] = imput                       # imputations (time-major flat)
    out_ref[TB:TB + Bp, :] = tail                  # col0 = predictions, col1 = loss


def init_params(key):
    """Deterministic init matching the module's shapes, packed into three
    kernel-ready slabs (pre-transposed / pre-masked / pre-split by lane width)."""
    N, H = N_SERIES, RNN_HID_SIZE
    ks = jax.random.split(key, 16)

    def unif(k, shape, scale):
        return jax.random.uniform(k, shape, jnp.float32, -scale, scale)

    s = 1.0 / math.sqrt(H)
    w_gh = unif(ks[0], (H, N), s)
    b_gh = unif(ks[1], (H,), s)
    s = 1.0 / math.sqrt(N)
    w_gx = unif(ks[2], (N, N), s)
    b_gx = unif(ks[3], (N,), s)
    s = 1.0 / math.sqrt(H)
    w_hist = unif(ks[4], (N, H), s)
    b_hist = unif(ks[5], (N,), s)
    s = 1.0 / math.sqrt(N)
    w_feat = unif(ks[6], (N, N), s)
    b_feat = unif(ks[7], (N,), s)
    s = 1.0 / math.sqrt(2 * N)
    w_comb = unif(ks[8], (N, 2 * N), s)
    b_comb = unif(ks[9], (N,), s)
    s = 1.0 / math.sqrt(H)
    w_ih = unif(ks[10], (4 * H, 2 * N), s)
    w_hh = unif(ks[11], (4 * H, H), s)
    b_ih = unif(ks[12], (4 * H,), s)
    b_hh = unif(ks[13], (4 * H,), s)
    w_out = unif(ks[14], (1, H), s)
    b_out = unif(ks[15], (1,), s)

    eye = jnp.eye(N, dtype=jnp.float32)

    # Slab of 128-lane weights: LSTM input/hidden weights + fused gate bias.
    p128 = jnp.concatenate([
        w_ih[:, :N].T,                     # wihx  (N, 4H)
        w_ih[:, N:].T,                     # wihm  (N, 4H)
        w_hh.T,                            # whh   (H, 4H)
        (b_ih + b_hh).reshape(1, 4 * H),   # bgate (1, 4H)
    ], axis=0)                             # (2N+H+1, 4H) = (49, 128)

    # Slab of 32-lane weights: temporal decay (h) + output head.
    p32 = jnp.concatenate([
        w_gh.T,                            # (N, H)
        b_gh.reshape(1, H),                # (1, H)
        w_out,                             # (1, H)
    ], axis=0)                             # (N+2, H) = (10, 32)

    # Slab of 8-lane weights / biases.
    bout_row = jnp.zeros((1, N), jnp.float32).at[0, 0].set(b_out[0])
    p8 = jnp.concatenate([
        w_hist.T,                          # (H, N)
        (w_feat * (1.0 - eye)).T,          # (N, N) off-diagonal feat_reg
        w_comb[:, :N].T,                   # (N, N) gamma_x half
        w_comb[:, N:].T,                   # (N, N) mask half
        jnp.diag(w_gx).reshape(1, N),      # diag of temp_decay_x W
        b_gx.reshape(1, N),
        b_hist.reshape(1, N),
        b_feat.reshape(1, N),
        b_comb.reshape(1, N),
        bout_row,                          # out bias in column 0
    ], axis=0)                             # (H+3N+6, N) = (62, 8)

    return (p128, p32, p8)


@jax.jit
def rits_forward(values, masks, deltas, labels, is_train, params):
    """values/masks/deltas: (B, T, N) f32; labels/is_train: (B, 1) f32."""
    B, T, N = values.shape
    Bp = max(8, ((B + 7) // 8) * 8)        # pad batch to a full sublane tile
    pad = Bp - B

    def tmf(x):  # time-major flatten with zero-padding of the batch dim
        x = jnp.transpose(x.astype(jnp.float32), (1, 0, 2))   # (T, B, N)
        x = jnp.pad(x, ((0, 0), (0, pad), (0, 0)))
        return x.reshape(T * Bp, N)

    # Single sequence-data slab: rows [0:TB)=values, [TB:2TB)=masks, [2TB:3TB)=deltas.
    data = jnp.concatenate([tmf(values), tmf(masks), tmf(deltas)], axis=0)
    # labels | is_train slab (padded rows: label=0, is_train=0 -> no loss contribution).
    lab = jnp.concatenate(
        [jnp.pad(labels.astype(jnp.float32), ((0, pad), (0, 0))),
         jnp.pad(is_train.astype(jnp.float32), ((0, pad), (0, 0)))], axis=1)

    p128, p32, p8 = params
    H = p32.shape[1]
    TB = T * Bp
    vmem = pltpu.MemorySpace.VMEM

    out = pl.pallas_call(
        _rits_kernel,
        out_shape=jax.ShapeDtypeStruct((TB + Bp, N), jnp.float32),
        in_specs=[pl.BlockSpec(memory_space=vmem)] * 5,
        out_specs=pl.BlockSpec(memory_space=vmem),
        scratch_shapes=[
            pltpu.VMEM((TB, H), jnp.float32),       # gamma_h
            pltpu.VMEM((TB, 4 * H), jnp.float32),   # hoisted gate pre-activation
            pltpu.VMEM((TB, N), jnp.float32),       # alpha
            pltpu.VMEM((TB, N), jnp.float32),       # 1 - alpha
            pltpu.VMEM((TB, N), jnp.float32),       # (m*x)@Wfeat + bfeat
            pltpu.VMEM((TB, N), jnp.float32),       # m / (sum(m_t) + 1e-5)
        ],
    )(data, lab, p128, p32, p8)

    imput = out[0:TB, :].reshape(T, Bp, N)[:, :B, :]      # drop padded rows
    imputations = jnp.transpose(imput, (1, 0, 2))         # (B, T, N)
    predictions = out[TB:TB + B, 0:1]                     # (B, 1)
    loss = out[TB, 1]

    return {
        'loss': loss,
        'predictions': predictions,
        'imputations': imputations,
        'labels': labels,
        'is_train': is_train,
    }


if __name__ == "__main__":
    key = jax.random.PRNGKey(0)
    k_par, k_v, k_m, k_d, k_l = jax.random.split(key, 5)

    params = init_params(k_par)

    B, T, N = BATCH, SEQ_LEN, N_SERIES
    values = jax.random.normal(k_v, (B, T, N), jnp.float32)
    masks = (jax.random.uniform(k_m, (B, T, N)) > 0.3).astype(jnp.float32)
    deltas = jax.random.uniform(k_d, (B, T, N), jnp.float32, 0.0, 2.0)
    labels = (jax.random.uniform(k_l, (B, 1)) > 0.5).astype(jnp.float32)
    is_train = jnp.ones((B, 1), jnp.float32)
    # evals / eval_masks are forward pass-throughs in the torch module.
    evals = values
    eval_masks = 1.0 - masks

    out = rits_forward(values, masks, deltas, labels, is_train, params)
    out['evals'] = evals
    out['eval_masks'] = eval_masks
    jax.block_until_ready(out['loss'])
    jax.block_until_ready(out['predictions'])
    jax.block_until_ready(out['imputations'])

    # TODO(synk): nn.Dropout(p=0.25) is defined in __init__ but never used in
    # forward, and run_on_batch's optimizer step is training glue — omitted.
    print("KERNEL_OK")
</pallas_src>

<mosaic_0001>
module attributes {stable_mosaic.version = 11 : i64} {
  func.func @_rits_kernel(%arg0: memref<192x8xf32, #tpu.memory_space<vmem>>, %arg1: memref<8x2xf32, #tpu.memory_space<vmem>>, %arg2: memref<49x128xf32, #tpu.memory_space<vmem>>, %arg3: memref<10x32xf32, #tpu.memory_space<vmem>>, %arg4: memref<62x8xf32, #tpu.memory_space<vmem>>, %arg5: memref<72x8xf32, #tpu.memory_space<vmem>>, %arg6: memref<64x32xf32, #tpu.memory_space<vmem>>, %arg7: memref<64x128xf32, #tpu.memory_space<vmem>>, %arg8: memref<64x8xf32, #tpu.memory_space<vmem>>, %arg9: memref<64x8xf32, #tpu.memory_space<vmem>>, %arg10: memref<64x8xf32, #tpu.memory_space<vmem>>, %arg11: memref<64x8xf32, #tpu.memory_space<vmem>>) attributes {dimension_semantics = [], scalar_prefetch = 0 : i64, scratch_operands = 6 : i64, tpu.core_type = #tpu.core_type<tc>} {
    %c0 = arith.constant 0 : index
    %c0_0 = arith.constant 0 : index
    %0 = vector.load %arg2[%c0, %c0_0] : memref<49x128xf32, #tpu.memory_space<vmem>>, vector<8x128xf32>
    %c8 = arith.constant 8 : index
    %c0_1 = arith.constant 0 : index
    %1 = vector.load %arg2[%c8, %c0_1] : memref<49x128xf32, #tpu.memory_space<vmem>>, vector<8x128xf32>
    %c16 = arith.constant 16 : index
    %c0_2 = arith.constant 0 : index
    %2 = vector.load %arg2[%c16, %c0_2] : memref<49x128xf32, #tpu.memory_space<vmem>>, vector<32x128xf32>
    %c48 = arith.constant 48 : index
    %c0_3 = arith.constant 0 : index
    %3 = vector.load %arg2[%c48, %c0_3] : memref<49x128xf32, #tpu.memory_space<vmem>>, vector<1x128xf32>
    %c0_4 = arith.constant 0 : index
    %c0_5 = arith.constant 0 : index
    %4 = vector.load %arg3[%c0_4, %c0_5] : memref<10x32xf32, #tpu.memory_space<vmem>>, vector<8x32xf32>
    %c8_6 = arith.constant 8 : index
    %c0_7 = arith.constant 0 : index
    %5 = vector.load %arg3[%c8_6, %c0_7] : memref<10x32xf32, #tpu.memory_space<vmem>>, vector<1x32xf32>
    %c9 = arith.constant 9 : index
    %c0_8 = arith.constant 0 : index
    %6 = vector.load %arg3[%c9, %c0_8] : memref<10x32xf32, #tpu.memory_space<vmem>>, vector<1x32xf32>
    %c0_9 = arith.constant 0 : index
    %c0_10 = arith.constant 0 : index
    %7 = vector.load %arg4[%c0_9, %c0_10] : memref<62x8xf32, #tpu.memory_space<vmem>>, vector<32x8xf32>
    %c32 = arith.constant 32 : index
    %c0_11 = arith.constant 0 : index
    %8 = vector.load %arg4[%c32, %c0_11] : memref<62x8xf32, #tpu.memory_space<vmem>>, vector<8x8xf32>
    %c40 = arith.constant 40 : index
    %c0_12 = arith.constant 0 : index
    %9 = vector.load %arg4[%c40, %c0_12] : memref<62x8xf32, #tpu.memory_space<vmem>>, vector<8x8xf32>
    %c48_13 = arith.constant 48 : index
    %c0_14 = arith.constant 0 : index
    %10 = vector.load %arg4[%c48_13, %c0_14] : memref<62x8xf32, #tpu.memory_space<vmem>>, vector<8x8xf32>
    %c56 = arith.constant 56 : index
    %c0_15 = arith.constant 0 : index
    %11 = vector.load %arg4[%c56, %c0_15] : memref<62x8xf32, #tpu.memory_space<vmem>>, vector<1x8xf32>
    %c57 = arith.constant 57 : index
    %c0_16 = arith.constant 0 : index
    %12 = vector.load %arg4[%c57, %c0_16] : memref<62x8xf32, #tpu.memory_space<vmem>>, vector<1x8xf32>
    %c58 = arith.constant 58 : index
    %c0_17 = arith.constant 0 : index
    %13 = vector.load %arg4[%c58, %c0_17] : memref<62x8xf32, #tpu.memory_space<vmem>>, vector<1x8xf32>
    %c59 = arith.constant 59 : index
    %c0_18 = arith.constant 0 : index
    %14 = vector.load %arg4[%c59, %c0_18] : memref<62x8xf32, #tpu.memory_space<vmem>>, vector<1x8xf32>
    %c60 = arith.constant 60 : index
    %c0_19 = arith.constant 0 : index
    %15 = vector.load %arg4[%c60, %c0_19] : memref<62x8xf32, #tpu.memory_space<vmem>>, vector<1x8xf32>
    %c61 = arith.constant 61 : index
    %c0_20 = arith.constant 0 : index
    %16 = vector.load %arg4[%c61, %c0_20] : memref<62x8xf32, #tpu.memory_space<vmem>>, vector<1x1xf32>
    %c0_21 = arith.constant 0 : index
    %c0_22 = arith.constant 0 : index
    %17 = vector.load %arg0[%c0_21, %c0_22] : memref<192x8xf32, #tpu.memory_space<vmem>>, vector<64x8xf32>
    %c64 = arith.constant 64 : index
    %c0_23 = arith.constant 0 : index
    %18 = vector.load %arg0[%c64, %c0_23] : memref<192x8xf32, #tpu.memory_space<vmem>>, vector<64x8xf32>
    %c128 = arith.constant 128 : index
    %c0_24 = arith.constant 0 : index
    %19 = vector.load %arg0[%c128, %c0_24] : memref<192x8xf32, #tpu.memory_space<vmem>>, vector<64x8xf32>
    %20 = arith.mulf %18, %17 : vector<64x8xf32>
    %cst = arith.constant dense<0.000000e+00> : vector<64x32xf32>
    %21 = tpu.matmul %19, %4, %cst {dimension_numbers = #tpu.dot_dimension_numbers<[1], [0], [0], [1], [0, 0, 1, 1], [], []>} : vector<64x8xf32>, vector<8x32xf32>, vector<64x32xf32> -> vector<64x32xf32>
    %22 = vector.broadcast %5 : vector<1x32xf32> to vector<64x32xf32>
    %23 = arith.addf %21, %22 : vector<64x32xf32>
    %cst_25 = arith.constant 0.000000e+00 : f32
    %24 = vector.broadcast %cst_25 : f32 to vector<64x32xf32>
    %25 = arith.maximumf %23, %24 : vector<64x32xf32>
    %cst_26 = arith.constant 0.000000e+00 : f32
    %26 = vector.broadcast %cst_26 : f32 to vector<64x32xf32>
    %27 = arith.subf %26, %25 : vector<64x32xf32>
    %28 = math.exp %27 : vector<64x32xf32>
    %29 = vector.broadcast %11 : vector<1x8xf32> to vector<64x8xf32>
    %30 = arith.mulf %19, %29 : vector<64x8xf32>
    %31 = vector.broadcast %12 : vector<1x8xf32> to vector<64x8xf32>
    %32 = arith.addf %30, %31 : vector<64x8xf32>
    %cst_27 = arith.constant 0.000000e+00 : f32
    %33 = vector.broadcast %cst_27 : f32 to vector<64x8xf32>
    %34 = arith.maximumf %32, %33 : vector<64x8xf32>
    %cst_28 = arith.constant 0.000000e+00 : f32
    %35 = vector.broadcast %cst_28 : f32 to vector<64x8xf32>
    %36 = arith.subf %35, %34 : vector<64x8xf32>
    %37 = math.exp %36 : vector<64x8xf32>
    %cst_29 = arith.constant dense<0.000000e+00> : vector<64x8xf32>
    %38 = tpu.matmul %37, %9, %cst_29 {dimension_numbers = #tpu.dot_dimension_numbers<[1], [0], [0], [1], [0, 0, 1, 1], [], []>} : vector<64x8xf32>, vector<8x8xf32>, vector<64x8xf32> -> vector<64x8xf32>
    %cst_30 = arith.constant dense<0.000000e+00> : vector<64x8xf32>
    %39 = tpu.matmul %18, %10, %cst_30 {dimension_numbers = #tpu.dot_dimension_numbers<[1], [0], [0], [1], [0, 0, 1, 1], [], []>} : vector<64x8xf32>, vector<8x8xf32>, vector<64x8xf32> -> vector<64x8xf32>
    %40 = arith.addf %38, %39 : vector<64x8xf32>
    %41 = vector.broadcast %15 : vector<1x8xf32> to vector<64x8xf32>
    %42 = arith.addf %40, %41 : vector<64x8xf32>
    %cst_31 = arith.constant dense<0.000000e+00> : vector<64x128xf32>
    %43 = tpu.matmul %18, %1, %cst_31 {dimension_numbers = #tpu.dot_dimension_numbers<[1], [0], [0], [1], [0, 0, 1, 1], [], []>} : vector<64x8xf32>, vector<8x128xf32>, vector<64x128xf32> -> vector<64x128xf32>
    %cst_32 = arith.constant dense<0.000000e+00> : vector<64x128xf32>
    %44 = tpu.matmul %20, %0, %cst_32 {dimension_numbers = #tpu.dot_dimension_numbers<[1], [0], [0], [1], [0, 0, 1, 1], [], []>} : vector<64x8xf32>, vector<8x128xf32>, vector<64x128xf32> -> vector<64x128xf32>
    %45 = arith.addf %43, %44 : vector<64x128xf32>
    %46 = vector.broadcast %3 : vector<1x128xf32> to vector<64x128xf32>
    %47 = arith.addf %45, %46 : vector<64x128xf32>
    %cst_33 = arith.constant dense<0.000000e+00> : vector<64x8xf32>
    %48 = tpu.matmul %20, %8, %cst_33 {dimension_numbers = #tpu.dot_dimension_numbers<[1], [0], [0], [1], [0, 0, 1, 1], [], []>} : vector<64x8xf32>, vector<8x8xf32>, vector<64x8xf32> -> vector<64x8xf32>
    %49 = vector.broadcast %14 : vector<1x8xf32> to vector<64x8xf32>
    %50 = arith.addf %48, %49 : vector<64x8xf32>
    %c0_34 = arith.constant 0 : index
    %c0_35 = arith.constant 0 : index
    %51 = vector.load %arg6[%c0_34, %c0_35] : memref<64x32xf32, #tpu.memory_space<vmem>>, vector<64x32xf32>
    tpu.vector_store %arg6[%c0_34, %c0_35], %28 {strides = array<i32>} : memref<64x32xf32, #tpu.memory_space<vmem>>, vector<64x32xf32>,
    %c0_36 = arith.constant 0 : index
    %c0_37 = arith.constant 0 : index
    %52 = vector.load %arg7[%c0_36, %c0_37] : memref<64x128xf32, #tpu.memory_space<vmem>>, vector<64x128xf32>
    tpu.vector_store %arg7[%c0_36, %c0_37], %47 {strides = array<i32>} : memref<64x128xf32, #tpu.memory_space<vmem>>, vector<64x128xf32>,
    %c0_38 = arith.constant 0 : index
    %c0_39 = arith.constant 0 : index
    %53 = vector.load %arg8[%c0_38, %c0_39] : memref<64x8xf32, #tpu.memory_space<vmem>>, vector<64x8xf32>
    tpu.vector_store %arg8[%c0_38, %c0_39], %42 {strides = array<i32>} : memref<64x8xf32, #tpu.memory_space<vmem>>, vector<64x8xf32>,
    %cst_40 = arith.constant 1.000000e+00 : f32
    %54 = vector.broadcast %cst_40 : f32 to vector<64x8xf32>
    %55 = arith.subf %54, %42 : vector<64x8xf32>
    %c0_41 = arith.constant 0 : index
    %c0_42 = arith.constant 0 : index
    %56 = vector.load %arg9[%c0_41, %c0_42] : memref<64x8xf32, #tpu.memory_space<vmem>>, vector<64x8xf32>
    tpu.vector_store %arg9[%c0_41, %c0_42], %55 {strides = array<i32>} : memref<64x8xf32, #tpu.memory_space<vmem>>, vector<64x8xf32>,
    %c0_43 = arith.constant 0 : index
    %c0_44 = arith.constant 0 : index
    %57 = vector.load %arg10[%c0_43, %c0_44] : memref<64x8xf32, #tpu.memory_space<vmem>>, vector<64x8xf32>
    tpu.vector_store %arg10[%c0_43, %c0_44], %50 {strides = array<i32>} : memref<64x8xf32, #tpu.memory_space<vmem>>, vector<64x8xf32>,
    %58 = vector.extract_strided_slice %18 {offsets = [0, 0], sizes = [8, 8], strides = [1, 1]} : vector<64x8xf32> to vector<8x8xf32>
    %59 = vector.shape_cast %58 : vector<8x8xf32> to vector<1x8x8xf32>
    %cst_45 = arith.constant dense<0.000000e+00> : vector<1xf32>
    %60 = vector.multi_reduction <add>, %59, %cst_45 [1, 2] : vector<1x8x8xf32> to vector<1xf32>
    %61 = vector.shape_cast %60 : vector<1xf32> to vector<1x1x1xf32>
    %62 = vector.extract %61[0, 0, 0] : f32 from vector<1x1x1xf32>
    %cst_46 = arith.constant 9.99999974E-6 : f32
    %63 = arith.addf %62, %cst_46 : f32
    %cst_47 = arith.constant 1.000000e+00 : f32
    %64 = arith.divf %cst_47, %63 : f32
    %65 = vector.broadcast %64 : f32 to vector<8x8xf32>
    %66 = arith.mulf %58, %65 : vector<8x8xf32>
    %c0_48 = arith.constant 0 : index
    %c0_49 = arith.constant 0 : index
    %67 = vector.load %arg11[%c0_48, %c0_49] : memref<64x8xf32, #tpu.memory_space<vmem>>, vector<8x8xf32>
    tpu.vector_store %arg11[%c0_48, %c0_49], %66 {strides = array<i32>} : memref<64x8xf32, #tpu.memory_space<vmem>>, vector<8x8xf32>,
    %68 = vector.extract_strided_slice %18 {offsets = [8, 0], sizes = [8, 8], strides = [1, 1]} : vector<64x8xf32> to vector<8x8xf32>
    %69 = vector.shape_cast %68 : vector<8x8xf32> to vector<1x8x8xf32>
    %cst_50 = arith.constant dense<0.000000e+00> : vector<1xf32>
    %70 = vector.multi_reduction <add>, %69, %cst_50 [1, 2] : vector<1x8x8xf32> to vector<1xf32>
    %71 = vector.shape_cast %70 : vector<1xf32> to vector<1x1x1xf32>
    %72 = vector.extract %71[0, 0, 0] : f32 from vector<1x1x1xf32>
    %cst_51 = arith.constant 9.99999974E-6 : f32
    %73 = arith.addf %72, %cst_51 : f32
    %cst_52 = arith.constant 1.000000e+00 : f32
    %74 = arith.divf %cst_52, %73 : f32
    %75 = vector.broadcast %74 : f32 to vector<8x8xf32>
    %76 = arith.mulf %68, %75 : vector<8x8xf32>
    %c8_53 = arith.constant 8 : index
    %c0_54 = arith.constant 0 : index
    %77 = vector.load %arg11[%c8_53, %c0_54] : memref<64x8xf32, #tpu.memory_space<vmem>>, vector<8x8xf32>
    tpu.vector_store %arg11[%c8_53, %c0_54], %76 {strides = array<i32>} : memref<64x8xf32, #tpu.memory_space<vmem>>, vector<8x8xf32>,
    %78 = vector.extract_strided_slice %18 {offsets = [16, 0], sizes = [8, 8], strides = [1, 1]} : vector<64x8xf32> to vector<8x8xf32>
    %79 = vector.shape_cast %78 : vector<8x8xf32> to vector<1x8x8xf32>
    %cst_55 = arith.constant dense<0.000000e+00> : vector<1xf32>
    %80 = vector.multi_reduction <add>, %79, %cst_55 [1, 2] : vector<1x8x8xf32> to vector<1xf32>
    %81 = vector.shape_cast %80 : vector<1xf32> to vector<1x1x1xf32>
    %82 = vector.extract %81[0, 0, 0] : f32 from vector<1x1x1xf32>
    %cst_56 = arith.constant 9.99999974E-6 : f32
    %83 = arith.addf %82, %cst_56 : f32
    %cst_57 = arith.constant 1.000000e+00 : f32
    %84 = arith.divf %cst_57, %83 : f32
    %85 = vector.broadcast %84 : f32 to vector<8x8xf32>
    %86 = arith.mulf %78, %85 : vector<8x8xf32>
    %c16_58 = arith.constant 16 : index
    %c0_59 = arith.constant 0 : index
    %87 = vector.load %arg11[%c16_58, %c0_59] : memref<64x8xf32, #tpu.memory_space<vmem>>, vector<8x8xf32>
    tpu.vector_store %arg11[%c16_58, %c0_59], %86 {strides = array<i32>} : memref<64x8xf32, #tpu.memory_space<vmem>>, vector<8x8xf32>,
    %88 = vector.extract_strided_slice %18 {offsets = [24, 0], sizes = [8, 8], strides = [1, 1]} : vector<64x8xf32> to vector<8x8xf32>
    %89 = vector.shape_cast %88 : vector<8x8xf32> to vector<1x8x8xf32>
    %cst_60 = arith.constant dense<0.000000e+00> : vector<1xf32>
    %90 = vector.multi_reduction <add>, %89, %cst_60 [1, 2] : vector<1x8x8xf32> to vector<1xf32>
    %91 = vector.shape_cast %90 : vector<1xf32> to vector<1x1x1xf32>
    %92 = vector.extract %91[0, 0, 0] : f32 from vector<1x1x1xf32>
    %cst_61 = arith.constant 9.99999974E-6 : f32
    %93 = arith.addf %92, %cst_61 : f32
    %cst_62 = arith.constant 1.000000e+00 : f32
    %94 = arith.divf %cst_62, %93 : f32
    %95 = vector.broadcast %94 : f32 to vector<8x8xf32>
    %96 = arith.mulf %88, %95 : vector<8x8xf32>
    %c24 = arith.constant 24 : index
    %c0_63 = arith.constant 0 : index
    %97 = vector.load %arg11[%c24, %c0_63] : memref<64x8xf32, #tpu.memory_space<vmem>>, vector<8x8xf32>
    tpu.vector_store %arg11[%c24, %c0_63], %96 {strides = array<i32>} : memref<64x8xf32, #tpu.memory_space<vmem>>, vector<8x8xf32>,
    %98 = vector.extract_strided_slice %18 {offsets = [32, 0], sizes = [8, 8], strides = [1, 1]} : vector<64x8xf32> to vector<8x8xf32>
    %99 = vector.shape_cast %98 : vector<8x8xf32> to vector<1x8x8xf32>
    %cst_64 = arith.constant dense<0.000000e+00> : vector<1xf32>
    %100 = vector.multi_reduction <add>, %99, %cst_64 [1, 2] : vector<1x8x8xf32> to vector<1xf32>
    %101 = vector.shape_cast %100 : vector<1xf32> to vector<1x1x1xf32>
    %102 = vector.extract %101[0, 0, 0] : f32 from vector<1x1x1xf32>
    %cst_65 = arith.constant 9.99999974E-6 : f32
    %103 = arith.addf %102, %cst_65 : f32
    %cst_66 = arith.constant 1.000000e+00 : f32
    %104 = arith.divf %cst_66, %103 : f32
    %105 = vector.broadcast %104 : f32 to vector<8x8xf32>
    %106 = arith.mulf %98, %105 : vector<8x8xf32>
    %c32_67 = arith.constant 32 : index
    %c0_68 = arith.constant 0 : index
    %107 = vector.load %arg11[%c32_67, %c0_68] : memref<64x8xf32, #tpu.memory_space<vmem>>, vector<8x8xf32>
    tpu.vector_store %arg11[%c32_67, %c0_68], %106 {strides = array<i32>} : memref<64x8xf32, #tpu.memory_space<vmem>>, vector<8x8xf32>,
    %108 = vector.extract_strided_slice %18 {offsets = [40, 0], sizes = [8, 8], strides = [1, 1]} : vector<64x8xf32> to vector<8x8xf32>
    %109 = vector.shape_cast %108 : vector<8x8xf32> to vector<1x8x8xf32>
    %cst_69 = arith.constant dense<0.000000e+00> : vector<1xf32>
    %110 = vector.multi_reduction <add>, %109, %cst_69 [1, 2] : vector<1x8x8xf32> to vector<1xf32>
    %111 = vector.shape_cast %110 : vector<1xf32> to vector<1x1x1xf32>
    %112 = vector.extract %111[0, 0, 0] : f32 from vector<1x1x1xf32>
    %cst_70 = arith.constant 9.99999974E-6 : f32
    %113 = arith.addf %112, %cst_70 : f32
    %cst_71 = arith.constant 1.000000e+00 : f32
    %114 = arith.divf %cst_71, %113 : f32
    %115 = vector.broadcast %114 : f32 to vector<8x8xf32>
    %116 = arith.mulf %108, %115 : vector<8x8xf32>
    %c40_72 = arith.constant 40 : index
    %c0_73 = arith.constant 0 : index
    %117 = vector.load %arg11[%c40_72, %c0_73] : memref<64x8xf32, #tpu.memory_space<vmem>>, vector<8x8xf32>
    tpu.vector_store %arg11[%c40_72, %c0_73], %116 {strides = array<i32>} : memref<64x8xf32, #tpu.memory_space<vmem>>, vector<8x8xf32>,
    %118 = vector.extract_strided_slice %18 {offsets = [48, 0], sizes = [8, 8], strides = [1, 1]} : vector<64x8xf32> to vector<8x8xf32>
    %119 = vector.shape_cast %118 : vector<8x8xf32> to vector<1x8x8xf32>
    %cst_74 = arith.constant dense<0.000000e+00> : vector<1xf32>
    %120 = vector.multi_reduction <add>, %119, %cst_74 [1, 2] : vector<1x8x8xf32> to vector<1xf32>
    %121 = vector.shape_cast %120 : vector<1xf32> to vector<1x1x1xf32>
    %122 = vector.extract %121[0, 0, 0] : f32 from vector<1x1x1xf32>
    %cst_75 = arith.constant 9.99999974E-6 : f32
    %123 = arith.addf %122, %cst_75 : f32
    %cst_76 = arith.constant 1.000000e+00 : f32
    %124 = arith.divf %cst_76, %123 : f32
    %125 = vector.broadcast %124 : f32 to vector<8x8xf32>
    %126 = arith.mulf %118, %125 : vector<8x8xf32>
    %c48_77 = arith.constant 48 : index
    %c0_78 = arith.constant 0 : index
    %127 = vector.load %arg11[%c48_77, %c0_78] : memref<64x8xf32, #tpu.memory_space<vmem>>, vector<8x8xf32>
    tpu.vector_store %arg11[%c48_77, %c0_78], %126 {strides = array<i32>} : memref<64x8xf32, #tpu.memory_space<vmem>>, vector<8x8xf32>,
    %128 = vector.extract_strided_slice %18 {offsets = [56, 0], sizes = [8, 8], strides = [1, 1]} : vector<64x8xf32> to vector<8x8xf32>
    %129 = vector.shape_cast %128 : vector<8x8xf32> to vector<1x8x8xf32>
    %cst_79 = arith.constant dense<0.000000e+00> : vector<1xf32>
    %130 = vector.multi_reduction <add>, %129, %cst_79 [1, 2] : vector<1x8x8xf32> to vector<1xf32>
    %131 = vector.shape_cast %130 : vector<1xf32> to vector<1x1x1xf32>
    %132 = vector.extract %131[0, 0, 0] : f32 from vector<1x1x1xf32>
    %cst_80 = arith.constant 9.99999974E-6 : f32
    %133 = arith.addf %132, %cst_80 : f32
    %cst_81 = arith.constant 1.000000e+00 : f32
    %134 = arith.divf %cst_81, %133 : f32
    %135 = vector.broadcast %134 : f32 to vector<8x8xf32>
    %136 = arith.mulf %128, %135 : vector<8x8xf32>
    %c56_82 = arith.constant 56 : index
    %c0_83 = arith.constant 0 : index
    %137 = vector.load %arg11[%c56_82, %c0_83] : memref<64x8xf32, #tpu.memory_space<vmem>>, vector<8x8xf32>
    tpu.vector_store %arg11[%c56_82, %c0_83], %136 {strides = array<i32>} : memref<64x8xf32, #tpu.memory_space<vmem>>, vector<8x8xf32>,
    %138 = vector.shape_cast %13 : vector<1x8xf32> to vector<1x8xf32>
    %139 = vector.broadcast %138 : vector<1x8xf32> to vector<8x8xf32>
    %cst_84 = arith.constant 0.000000e+00 : f32
    %140 = vector.broadcast %cst_84 : f32 to vector<8x32xf32>
    %cst_85 = arith.constant 0.000000e+00 : f32
    %141 = vector.broadcast %cst_85 : f32 to vector<8x32xf32>
    %cst_86 = arith.constant 0.000000e+00 : f32
    %142 = vector.broadcast %cst_86 : f32 to vector<8x8xf32>
    %c0_87 = arith.constant 0 : index
    %c0_88 = arith.constant 0 : index
    %143 = vector.load %arg0[%c0_87, %c0_88] : memref<192x8xf32, #tpu.memory_space<vmem>>, vector<8x8xf32>
    %c64_89 = arith.constant 64 : index
    %c0_90 = arith.constant 0 : index
    %144 = vector.load %arg0[%c64_89, %c0_90] : memref<192x8xf32, #tpu.memory_space<vmem>>, vector<8x8xf32>
    %c0_91 = arith.constant 0 : index
    %c0_92 = arith.constant 0 : index
    %145 = vector.load %arg6[%c0_91, %c0_92] : memref<64x32xf32, #tpu.memory_space<vmem>>, vector<8x32xf32>
    %c0_93 = arith.constant 0 : index
    %c0_94 = arith.constant 0 : index
    %146 = vector.load %arg7[%c0_93, %c0_94] : memref<64x128xf32, #tpu.memory_space<vmem>>, vector<8x128xf32>
    %c0_95 = arith.constant 0 : index
    %c0_96 = arith.constant 0 : index
    %147 = vector.load %arg8[%c0_95, %c0_96] : memref<64x8xf32, #tpu.memory_space<vmem>>, vector<8x8xf32>
    %c0_97 = arith.constant 0 : index
    %c0_98 = arith.constant 0 : index
    %148 = vector.load %arg9[%c0_97, %c0_98] : memref<64x8xf32, #tpu.memory_space<vmem>>, vector<8x8xf32>
    %c0_99 = arith.constant 0 : index
    %c0_100 = arith.constant 0 : index
    %149 = vector.load %arg10[%c0_99, %c0_100] : memref<64x8xf32, #tpu.memory_space<vmem>>, vector<8x8xf32>
    %c0_101 = arith.constant 0 : index
    %c0_102 = arith.constant 0 : index
    %150 = vector.load %arg11[%c0_101, %c0_102] : memref<64x8xf32, #tpu.memory_space<vmem>>, vector<8x8xf32>
    %cst_103 = arith.constant 1.000000e+00 : f32
    %151 = vector.broadcast %cst_103 : f32 to vector<8x8xf32>
    %152 = arith.subf %151, %144 : vector<8x8xf32>
    %153 = arith.mulf %144, %143 : vector<8x8xf32>
    %154 = arith.mulf %140, %145 : vector<8x32xf32>
    %cst_104 = arith.constant dense<0.000000e+00> : vector<8x8xf32>
    %155 = tpu.matmul %154, %7, %cst_104 {dimension_numbers = #tpu.dot_dimension_numbers<[1], [0], [0], [1], [0, 0, 1, 1], [], []>} : vector<8x32xf32>, vector<32x8xf32>, vector<8x8xf32> -> vector<8x8xf32>
    %156 = arith.addf %155, %139 : vector<8x8xf32>
    %157 = arith.mulf %152, %156 : vector<8x8xf32>
    %cst_105 = arith.constant dense<0.000000e+00> : vector<8x8xf32>
    %158 = tpu.matmul %157, %8, %cst_105 {dimension_numbers = #tpu.dot_dimension_numbers<[1], [0], [0], [1], [0, 0, 1, 1], [], []>} : vector<8x8xf32>, vector<8x8xf32>, vector<8x8xf32> -> vector<8x8xf32>
    %159 = arith.addf %158, %149 : vector<8x8xf32>
    %160 = arith.mulf %147, %159 : vector<8x8xf32>
    %161 = arith.mulf %148, %156 : vector<8x8xf32>
    %162 = arith.addf %160, %161 : vector<8x8xf32>
    %163 = arith.mulf %152, %162 : vector<8x8xf32>
    %164 = arith.addf %153, %163 : vector<8x8xf32>
    %165 = arith.subf %143, %156 : vector<8x8xf32>
    %166 = math.absf %165 : vector<8x8xf32>
    %167 = arith.subf %143, %159 : vector<8x8xf32>
    %168 = math.absf %167 : vector<8x8xf32>
    %169 = arith.addf %166, %168 : vector<8x8xf32>
    %170 = arith.subf %143, %162 : vector<8x8xf32>
    %171 = math.absf %170 : vector<8x8xf32>
    %172 = arith.addf %169, %171 : vector<8x8xf32>
    %173 = arith.mulf %172, %150 : vector<8x8xf32>
    %174 = arith.addf %142, %173 : vector<8x8xf32>
    %cst_106 = arith.constant dense<0.000000e+00> : vector<8x128xf32>
    %175 = tpu.matmul %163, %0, %cst_106 {dimension_numbers = #tpu.dot_dimension_numbers<[1], [0], [0], [1], [0, 0, 1, 1], [], []>} : vector<8x8xf32>, vector<8x128xf32>, vector<8x128xf32> -> vector<8x128xf32>
    %cst_107 = arith.constant dense<0.000000e+00> : vector<8x128xf32>
    %176 = tpu.matmul %154, %2, %cst_107 {dimension_numbers = #tpu.dot_dimension_numbers<[1], [0], [0], [1], [0, 0, 1, 1], [], []>} : vector<8x32xf32>, vector<32x128xf32>, vector<8x128xf32> -> vector<8x128xf32>
    %177 = arith.addf %175, %176 : vector<8x128xf32>
    %178 = arith.addf %177, %146 : vector<8x128xf32>
    %179 = arith.negf %178 : vector<8x128xf32>
    %180 = math.exp %179 : vector<8x128xf32>
    %cst_108 = arith.constant 1.000000e+00 : f32
    %181 = vector.broadcast %cst_108 : f32 to vector<8x128xf32>
    %182 = arith.addf %181, %180 : vector<8x128xf32>
    %183 = arith.divf %181, %182 : vector<8x128xf32>
    %184 = vector.extract_strided_slice %178 {offsets = [0, 64], sizes = [8, 32], strides = [1, 1]} : vector<8x128xf32> to vector<8x32xf32>
    %185 = math.tanh %184 : vector<8x32xf32>
    %186 = vector.extract_strided_slice %183 {offsets = [0, 0], sizes = [8, 32], strides = [1, 1]} : vector<8x128xf32> to vector<8x32xf32>
    %187 = vector.extract_strided_slice %183 {offsets = [0, 32], sizes = [8, 32], strides = [1, 1]} : vector<8x128xf32> to vector<8x32xf32>
    %188 = vector.extract_strided_slice %183 {offsets = [0, 96], sizes = [8, 32], strides = [1, 1]} : vector<8x128xf32> to vector<8x32xf32>
    %189 = arith.mulf %187, %141 : vector<8x32xf32>
    %190 = arith.mulf %186, %185 : vector<8x32xf32>
    %191 = arith.addf %189, %190 : vector<8x32xf32>
    %192 = math.tanh %191 : vector<8x32xf32>
    %193 = arith.mulf %188, %192 : vector<8x32xf32>
    %c8_109 = arith.constant 8 : index
    %c0_110 = arith.constant 0 : index
    %194 = vector.load %arg0[%c8_109, %c0_110] : memref<192x8xf32, #tpu.memory_space<vmem>>, vector<8x8xf32>
    %c72 = arith.constant 72 : index
    %c0_111 = arith.constant 0 : index
    %195 = vector.load %arg0[%c72, %c0_111] : memref<192x8xf32, #tpu.memory_space<vmem>>, vector<8x8xf32>
    %c8_112 = arith.constant 8 : index
    %c0_113 = arith.constant 0 : index
    %196 = vector.load %arg6[%c8_112, %c0_113] : memref<64x32xf32, #tpu.memory_space<vmem>>, vector<8x32xf32>
    %c8_114 = arith.constant 8 : index
    %c0_115 = arith.constant 0 : index
    %197 = vector.load %arg7[%c8_114, %c0_115] : memref<64x128xf32, #tpu.memory_space<vmem>>, vector<8x128xf32>
    %c8_116 = arith.constant 8 : index
    %c0_117 = arith.constant 0 : index
    %198 = vector.load %arg8[%c8_116, %c0_117] : memref<64x8xf32, #tpu.memory_space<vmem>>, vector<8x8xf32>
    %c8_118 = arith.constant 8 : index
    %c0_119 = arith.constant 0 : index
    %199 = vector.load %arg9[%c8_118, %c0_119] : memref<64x8xf32, #tpu.memory_space<vmem>>, vector<8x8xf32>
    %c8_120 = arith.constant 8 : index
    %c0_121 = arith.constant 0 : index
    %200 = vector.load %arg10[%c8_120, %c0_121] : memref<64x8xf32, #tpu.memory_space<vmem>>, vector<8x8xf32>
    %c8_122 = arith.constant 8 : index
    %c0_123 = arith.constant 0 : index
    %201 = vector.load %arg11[%c8_122, %c0_123] : memref<64x8xf32, #tpu.memory_space<vmem>>, vector<8x8xf32>
    %cst_124 = arith.constant 1.000000e+00 : f32
    %202 = vector.broadcast %cst_124 : f32 to vector<8x8xf32>
    %203 = arith.subf %202, %195 : vector<8x8xf32>
    %204 = arith.mulf %195, %194 : vector<8x8xf32>
    %205 = arith.mulf %193, %196 : vector<8x32xf32>
    %cst_125 = arith.constant dense<0.000000e+00> : vector<8x8xf32>
    %206 = tpu.matmul %205, %7, %cst_125 {dimension_numbers = #tpu.dot_dimension_numbers<[1], [0], [0], [1], [0, 0, 1, 1], [], []>} : vector<8x32xf32>, vector<32x8xf32>, vector<8x8xf32> -> vector<8x8xf32>
    %207 = arith.addf %206, %139 : vector<8x8xf32>
    %208 = arith.mulf %203, %207 : vector<8x8xf32>
    %cst_126 = arith.constant dense<0.000000e+00> : vector<8x8xf32>
    %209 = tpu.matmul %208, %8, %cst_126 {dimension_numbers = #tpu.dot_dimension_numbers<[1], [0], [0], [1], [0, 0, 1, 1], [], []>} : vector<8x8xf32>, vector<8x8xf32>, vector<8x8xf32> -> vector<8x8xf32>
    %210 = arith.addf %209, %200 : vector<8x8xf32>
    %211 = arith.mulf %198, %210 : vector<8x8xf32>
    %212 = arith.mulf %199, %207 : vector<8x8xf32>
    %213 = arith.addf %211, %212 : vector<8x8xf32>
    %214 = arith.mulf %203, %213 : vector<8x8xf32>
    %215 = arith.addf %204, %214 : vector<8x8xf32>
    %216 = arith.subf %194, %207 : vector<8x8xf32>
    %217 = math.absf %216 : vector<8x8xf32>
    %218 = arith.subf %194, %210 : vector<8x8xf32>
    %219 = math.absf %218 : vector<8x8xf32>
    %220 = arith.addf %217, %219 : vector<8x8xf32>
    %221 = arith.subf %194, %213 : vector<8x8xf32>
    %222 = math.absf %221 : vector<8x8xf32>
    %223 = arith.addf %220, %222 : vector<8x8xf32>
    %224 = arith.mulf %223, %201 : vector<8x8xf32>
    %225 = arith.addf %174, %224 : vector<8x8xf32>
    %cst_127 = arith.constant dense<0.000000e+00> : vector<8x128xf32>
    %226 = tpu.matmul %214, %0, %cst_127 {dimension_numbers = #tpu.dot_dimension_numbers<[1], [0], [0], [1], [0, 0, 1, 1], [], []>} : vector<8x8xf32>, vector<8x128xf32>, vector<8x128xf32> -> vector<8x128xf32>
    %cst_128 = arith.constant dense<0.000000e+00> : vector<8x128xf32>
    %227 = tpu.matmul %205, %2, %cst_128 {dimension_numbers = #tpu.dot_dimension_numbers<[1], [0], [0], [1], [0, 0, 1, 1], [], []>} : vector<8x32xf32>, vector<32x128xf32>, vector<8x128xf32> -> vector<8x128xf32>
    %228 = arith.addf %226, %227 : vector<8x128xf32>
    %229 = arith.addf %228, %197 : vector<8x128xf32>
    %230 = arith.negf %229 : vector<8x128xf32>
    %231 = math.exp %230 : vector<8x128xf32>
    %cst_129 = arith.constant 1.000000e+00 : f32
    %232 = vector.broadcast %cst_129 : f32 to vector<8x128xf32>
    %233 = arith.addf %232, %231 : vector<8x128xf32>
    %234 = arith.divf %232, %233 : vector<8x128xf32>
    %235 = vector.extract_strided_slice %229 {offsets = [0, 64], sizes = [8, 32], strides = [1, 1]} : vector<8x128xf32> to vector<8x32xf32>
    %236 = math.tanh %235 : vector<8x32xf32>
    %237 = vector.extract_strided_slice %234 {offsets = [0, 0], sizes = [8, 32], strides = [1, 1]} : vector<8x128xf32> to vector<8x32xf32>
    %238 = vector.extract_strided_slice %234 {offsets = [0, 32], sizes = [8, 32], strides = [1, 1]} : vector<8x128xf32> to vector<8x32xf32>
    %239 = vector.extract_strided_slice %234 {offsets = [0, 96], sizes = [8, 32], strides = [1, 1]} : vector<8x128xf32> to vector<8x32xf32>
    %240 = arith.mulf %238, %191 : vector<8x32xf32>
    %241 = arith.mulf %237, %236 : vector<8x32xf32>
    %242 = arith.addf %240, %241 : vector<8x32xf32>
    %243 = math.tanh %242 : vector<8x32xf32>
    %244 = arith.mulf %239, %243 : vector<8x32xf32>
    %c16_130 = arith.constant 16 : index
    %c0_131 = arith.constant 0 : index
    %245 = vector.load %arg0[%c16_130, %c0_131] : memref<192x8xf32, #tpu.memory_space<vmem>>, vector<8x8xf32>
    %c80 = arith.constant 80 : index
    %c0_132 = arith.constant 0 : index
    %246 = vector.load %arg0[%c80, %c0_132] : memref<192x8xf32, #tpu.memory_space<vmem>>, vector<8x8xf32>
    %c16_133 = arith.constant 16 : index
    %c0_134 = arith.constant 0 : index
    %247 = vector.load %arg6[%c16_133, %c0_134] : memref<64x32xf32, #tpu.memory_space<vmem>>, vector<8x32xf32>
    %c16_135 = arith.constant 16 : index
    %c0_136 = arith.constant 0 : index
    %248 = vector.load %arg7[%c16_135, %c0_136] : memref<64x128xf32, #tpu.memory_space<vmem>>, vector<8x128xf32>
    %c16_137 = arith.constant 16 : index
    %c0_138 = arith.constant 0 : index
    %249 = vector.load %arg8[%c16_137, %c0_138] : memref<64x8xf32, #tpu.memory_space<vmem>>, vector<8x8xf32>
    %c16_139 = arith.constant 16 : index
    %c0_140 = arith.constant 0 : index
    %250 = vector.load %arg9[%c16_139, %c0_140] : memref<64x8xf32, #tpu.memory_space<vmem>>, vector<8x8xf32>
    %c16_141 = arith.constant 16 : index
    %c0_142 = arith.constant 0 : index
    %251 = vector.load %arg10[%c16_141, %c0_142] : memref<64x8xf32, #tpu.memory_space<vmem>>, vector<8x8xf32>
    %c16_143 = arith.constant 16 : index
    %c0_144 = arith.constant 0 : index
    %252 = vector.load %arg11[%c16_143, %c0_144] : memref<64x8xf32, #tpu.memory_space<vmem>>, vector<8x8xf32>
    %cst_145 = arith.constant 1.000000e+00 : f32
    %253 = vector.broadcast %cst_145 : f32 to vector<8x8xf32>
    %254 = arith.subf %253, %246 : vector<8x8xf32>
    %255 = arith.mulf %246, %245 : vector<8x8xf32>
    %256 = arith.mulf %244, %247 : vector<8x32xf32>
    %cst_146 = arith.constant dense<0.000000e+00> : vector<8x8xf32>
    %257 = tpu.matmul %256, %7, %cst_146 {dimension_numbers = #tpu.dot_dimension_numbers<[1], [0], [0], [1], [0, 0, 1, 1], [], []>} : vector<8x32xf32>, vector<32x8xf32>, vector<8x8xf32> -> vector<8x8xf32>
    %258 = arith.addf %257, %139 : vector<8x8xf32>
    %259 = arith.mulf %254, %258 : vector<8x8xf32>
    %cst_147 = arith.constant dense<0.000000e+00> : vector<8x8xf32>
    %260 = tpu.matmul %259, %8, %cst_147 {dimension_numbers = #tpu.dot_dimension_numbers<[1], [0], [0], [1], [0, 0, 1, 1], [], []>} : vector<8x8xf32>, vector<8x8xf32>, vector<8x8xf32> -> vector<8x8xf32>
    %261 = arith.addf %260, %251 : vector<8x8xf32>
    %262 = arith.mulf %249, %261 : vector<8x8xf32>
    %263 = arith.mulf %250, %258 : vector<8x8xf32>
    %264 = arith.addf %262, %263 : vector<8x8xf32>
    %265 = arith.mulf %254, %264 : vector<8x8xf32>
    %266 = arith.addf %255, %265 : vector<8x8xf32>
    %267 = arith.subf %245, %258 : vector<8x8xf32>
    %268 = math.absf %267 : vector<8x8xf32>
    %269 = arith.subf %245, %261 : vector<8x8xf32>
    %270 = math.absf %269 : vector<8x8xf32>
    %271 = arith.addf %268, %270 : vector<8x8xf32>
    %272 = arith.subf %245, %264 : vector<8x8xf32>
    %273 = math.absf %272 : vector<8x8xf32>
    %274 = arith.addf %271, %273 : vector<8x8xf32>
    %275 = arith.mulf %274, %252 : vector<8x8xf32>
    %276 = arith.addf %225, %275 : vector<8x8xf32>
    %cst_148 = arith.constant dense<0.000000e+00> : vector<8x128xf32>
    %277 = tpu.matmul %265, %0, %cst_148 {dimension_numbers = #tpu.dot_dimension_numbers<[1], [0], [0], [1], [0, 0, 1, 1], [], []>} : vector<8x8xf32>, vector<8x128xf32>, vector<8x128xf32> -> vector<8x128xf32>
    %cst_149 = arith.constant dense<0.000000e+00> : vector<8x128xf32>
    %278 = tpu.matmul %256, %2, %cst_149 {dimension_numbers = #tpu.dot_dimension_numbers<[1], [0], [0], [1], [0, 0, 1, 1], [], []>} : vector<8x32xf32>, vector<32x128xf32>, vector<8x128xf32> -> vector<8x128xf32>
    %279 = arith.addf %277, %278 : vector<8x128xf32>
    %280 = arith.addf %279, %248 : vector<8x128xf32>
    %281 = arith.negf %280 : vector<8x128xf32>
    %282 = math.exp %281 : vector<8x128xf32>
    %cst_150 = arith.constant 1.000000e+00 : f32
    %283 = vector.broadcast %cst_150 : f32 to vector<8x128xf32>
    %284 = arith.addf %283, %282 : vector<8x128xf32>
    %285 = arith.divf %283, %284 : vector<8x128xf32>
    %286 = vector.extract_strided_slice %280 {offsets = [0, 64], sizes = [8, 32], strides = [1, 1]} : vector<8x128xf32> to vector<8x32xf32>
    %287 = math.tanh %286 : vector<8x32xf32>
    %288 = vector.extract_strided_slice %285 {offsets = [0, 0], sizes = [8, 32], strides = [1, 1]} : vector<8x128xf32> to vector<8x32xf32>
    %289 = vector.extract_strided_slice %285 {offsets = [0, 32], sizes = [8, 32], strides = [1, 1]} : vector<8x128xf32> to vector<8x32xf32>
    %290 = vector.extract_strided_slice %285 {offsets = [0, 96], sizes = [8, 32], strides = [1, 1]} : vector<8x128xf32> to vector<8x32xf32>
    %291 = arith.mulf %289, %242 : vector<8x32xf32>
    %292 = arith.mulf %288, %287 : vector<8x32xf32>
    %293 = arith.addf %291, %292 : vector<8x32xf32>
    %294 = math.tanh %293 : vector<8x32xf32>
    %295 = arith.mulf %290, %294 : vector<8x32xf32>
    %c24_151 = arith.constant 24 : index
    %c0_152 = arith.constant 0 : index
    %296 = vector.load %arg0[%c24_151, %c0_152] : memref<192x8xf32, #tpu.memory_space<vmem>>, vector<8x8xf32>
    %c88 = arith.constant 88 : index
    %c0_153 = arith.constant 0 : index
    %297 = vector.load %arg0[%c88, %c0_153] : memref<192x8xf32, #tpu.memory_space<vmem>>, vector<8x8xf32>
    %c24_154 = arith.constant 24 : index
    %c0_155 = arith.constant 0 : index
    %298 = vector.load %arg6[%c24_154, %c0_155] : memref<64x32xf32, #tpu.memory_space<vmem>>, vector<8x32xf32>
    %c24_156 = arith.constant 24 : index
    %c0_157 = arith.constant 0 : index
    %299 = vector.load %arg7[%c24_156, %c0_157] : memref<64x128xf32, #tpu.memory_space<vmem>>, vector<8x128xf32>
    %c24_158 = arith.constant 24 : index
    %c0_159 = arith.constant 0 : index
    %300 = vector.load %arg8[%c24_158, %c0_159] : memref<64x8xf32, #tpu.memory_space<vmem>>, vector<8x8xf32>
    %c24_160 = arith.constant 24 : index
    %c0_161 = arith.constant 0 : index
    %301 = vector.load %arg9[%c24_160, %c0_161] : memref<64x8xf32, #tpu.memory_space<vmem>>, vector<8x8xf32>
    %c24_162 = arith.constant 24 : index
    %c0_163 = arith.constant 0 : index
    %302 = vector.load %arg10[%c24_162, %c0_163] : memref<64x8xf32, #tpu.memory_space<vmem>>, vector<8x8xf32>
    %c24_164 = arith.constant 24 : index
    %c0_165 = arith.constant 0 : index
    %303 = vector.load %arg11[%c24_164, %c0_165] : memref<64x8xf32, #tpu.memory_space<vmem>>, vector<8x8xf32>
    %cst_166 = arith.constant 1.000000e+00 : f32
    %304 = vector.broadcast %cst_166 : f32 to vector<8x8xf32>
    %305 = arith.subf %304, %297 : vector<8x8xf32>
    %306 = arith.mulf %297, %296 : vector<8x8xf32>
    %307 = arith.mulf %295, %298 : vector<8x32xf32>
    %cst_167 = arith.constant dense<0.000000e+00> : vector<8x8xf32>
    %308 = tpu.matmul %307, %7, %cst_167 {dimension_numbers = #tpu.dot_dimension_numbers<[1], [0], [0], [1], [0, 0, 1, 1], [], []>} : vector<8x32xf32>, vector<32x8xf32>, vector<8x8xf32> -> vector<8x8xf32>
    %309 = arith.addf %308, %139 : vector<8x8xf32>
    %310 = arith.mulf %305, %309 : vector<8x8xf32>
    %cst_168 = arith.constant dense<0.000000e+00> : vector<8x8xf32>
    %311 = tpu.matmul %310, %8, %cst_168 {dimension_numbers = #tpu.dot_dimension_numbers<[1], [0], [0], [1], [0, 0, 1, 1], [], []>} : vector<8x8xf32>, vector<8x8xf32>, vector<8x8xf32> -> vector<8x8xf32>
    %312 = arith.addf %311, %302 : vector<8x8xf32>
    %313 = arith.mulf %300, %312 : vector<8x8xf32>
    %314 = arith.mulf %301, %309 : vector<8x8xf32>
    %315 = arith.addf %313, %314 : vector<8x8xf32>
    %316 = arith.mulf %305, %315 : vector<8x8xf32>
    %317 = arith.addf %306, %316 : vector<8x8xf32>
    %318 = arith.subf %296, %309 : vector<8x8xf32>
    %319 = math.absf %318 : vector<8x8xf32>
    %320 = arith.subf %296, %312 : vector<8x8xf32>
    %321 = math.absf %320 : vector<8x8xf32>
    %322 = arith.addf %319, %321 : vector<8x8xf32>
    %323 = arith.subf %296, %315 : vector<8x8xf32>
    %324 = math.absf %323 : vector<8x8xf32>
    %325 = arith.addf %322, %324 : vector<8x8xf32>
    %326 = arith.mulf %325, %303 : vector<8x8xf32>
    %327 = arith.addf %276, %326 : vector<8x8xf32>
    %cst_169 = arith.constant dense<0.000000e+00> : vector<8x128xf32>
    %328 = tpu.matmul %316, %0, %cst_169 {dimension_numbers = #tpu.dot_dimension_numbers<[1], [0], [0], [1], [0, 0, 1, 1], [], []>} : vector<8x8xf32>, vector<8x128xf32>, vector<8x128xf32> -> vector<8x128xf32>
    %cst_170 = arith.constant dense<0.000000e+00> : vector<8x128xf32>
    %329 = tpu.matmul %307, %2, %cst_170 {dimension_numbers = #tpu.dot_dimension_numbers<[1], [0], [0], [1], [0, 0, 1, 1], [], []>} : vector<8x32xf32>, vector<32x128xf32>, vector<8x128xf32> -> vector<8x128xf32>
    %330 = arith.addf %328, %329 : vector<8x128xf32>
    %331 = arith.addf %330, %299 : vector<8x128xf32>
    %332 = arith.negf %331 : vector<8x128xf32>
    %333 = math.exp %332 : vector<8x128xf32>
    %cst_171 = arith.constant 1.000000e+00 : f32
    %334 = vector.broadcast %cst_171 : f32 to vector<8x128xf32>
    %335 = arith.addf %334, %333 : vector<8x128xf32>
    %336 = arith.divf %334, %335 : vector<8x128xf32>
    %337 = vector.extract_strided_slice %331 {offsets = [0, 64], sizes = [8, 32], strides = [1, 1]} : vector<8x128xf32> to vector<8x32xf32>
    %338 = math.tanh %337 : vector<8x32xf32>
    %339 = vector.extract_strided_slice %336 {offsets = [0, 0], sizes = [8, 32], strides = [1, 1]} : vector<8x128xf32> to vector<8x32xf32>
    %340 = vector.extract_strided_slice %336 {offsets = [0, 32], sizes = [8, 32], strides = [1, 1]} : vector<8x128xf32> to vector<8x32xf32>
    %341 = vector.extract_strided_slice %336 {offsets = [0, 96], sizes = [8, 32], strides = [1, 1]} : vector<8x128xf32> to vector<8x32xf32>
    %342 = arith.mulf %340, %293 : vector<8x32xf32>
    %343 = arith.mulf %339, %338 : vector<8x32xf32>
    %344 = arith.addf %342, %343 : vector<8x32xf32>
    %345 = math.tanh %344 : vector<8x32xf32>
    %346 = arith.mulf %341, %345 : vector<8x32xf32>
    %c32_172 = arith.constant 32 : index
    %c0_173 = arith.constant 0 : index
    %347 = vector.load %arg0[%c32_172, %c0_173] : memref<192x8xf32, #tpu.memory_space<vmem>>, vector<8x8xf32>
    %c96 = arith.constant 96 : index
    %c0_174 = arith.constant 0 : index
    %348 = vector.load %arg0[%c96, %c0_174] : memref<192x8xf32, #tpu.memory_space<vmem>>, vector<8x8xf32>
    %c32_175 = arith.constant 32 : index
    %c0_176 = arith.constant 0 : index
    %349 = vector.load %arg6[%c32_175, %c0_176] : memref<64x32xf32, #tpu.memory_space<vmem>>, vector<8x32xf32>
    %c32_177 = arith.constant 32 : index
    %c0_178 = arith.constant 0 : index
    %350 = vector.load %arg7[%c32_177, %c0_178] : memref<64x128xf32, #tpu.memory_space<vmem>>, vector<8x128xf32>
    %c32_179 = arith.constant 32 : index
    %c0_180 = arith.constant 0 : index
    %351 = vector.load %arg8[%c32_179, %c0_180] : memref<64x8xf32, #tpu.memory_space<vmem>>, vector<8x8xf32>
    %c32_181 = arith.constant 32 : index
    %c0_182 = arith.constant 0 : index
    %352 = vector.load %arg9[%c32_181, %c0_182] : memref<64x8xf32, #tpu.memory_space<vmem>>, vector<8x8xf32>
    %c32_183 = arith.constant 32 : index
    %c0_184 = arith.constant 0 : index
    %353 = vector.load %arg10[%c32_183, %c0_184] : memref<64x8xf32, #tpu.memory_space<vmem>>, vector<8x8xf32>
    %c32_185 = arith.constant 32 : index
    %c0_186 = arith.constant 0 : index
    %354 = vector.load %arg11[%c32_185, %c0_186] : memref<64x8xf32, #tpu.memory_space<vmem>>, vector<8x8xf32>
    %cst_187 = arith.constant 1.000000e+00 : f32
    %355 = vector.broadcast %cst_187 : f32 to vector<8x8xf32>
    %356 = arith.subf %355, %348 : vector<8x8xf32>
    %357 = arith.mulf %348, %347 : vector<8x8xf32>
    %358 = arith.mulf %346, %349 : vector<8x32xf32>
    %cst_188 = arith.constant dense<0.000000e+00> : vector<8x8xf32>
    %359 = tpu.matmul %358, %7, %cst_188 {dimension_numbers = #tpu.dot_dimension_numbers<[1], [0], [0], [1], [0, 0, 1, 1], [], []>} : vector<8x32xf32>, vector<32x8xf32>, vector<8x8xf32> -> vector<8x8xf32>
    %360 = arith.addf %359, %139 : vector<8x8xf32>
    %361 = arith.mulf %356, %360 : vector<8x8xf32>
    %cst_189 = arith.constant dense<0.000000e+00> : vector<8x8xf32>
    %362 = tpu.matmul %361, %8, %cst_189 {dimension_numbers = #tpu.dot_dimension_numbers<[1], [0], [0], [1], [0, 0, 1, 1], [], []>} : vector<8x8xf32>, vector<8x8xf32>, vector<8x8xf32> -> vector<8x8xf32>
    %363 = arith.addf %362, %353 : vector<8x8xf32>
    %364 = arith.mulf %351, %363 : vector<8x8xf32>
    %365 = arith.mulf %352, %360 : vector<8x8xf32>
    %366 = arith.addf %364, %365 : vector<8x8xf32>
    %367 = arith.mulf %356, %366 : vector<8x8xf32>
    %368 = arith.addf %357, %367 : vector<8x8xf32>
    %369 = arith.subf %347, %360 : vector<8x8xf32>
    %370 = math.absf %369 : vector<8x8xf32>
    %371 = arith.subf %347, %363 : vector<8x8xf32>
    %372 = math.absf %371 : vector<8x8xf32>
    %373 = arith.addf %370, %372 : vector<8x8xf32>
    %374 = arith.subf %347, %366 : vector<8x8xf32>
    %375 = math.absf %374 : vector<8x8xf32>
    %376 = arith.addf %373, %375 : vector<8x8xf32>
    %377 = arith.mulf %376, %354 : vector<8x8xf32>
    %378 = arith.addf %327, %377 : vector<8x8xf32>
    %cst_190 = arith.constant dense<0.000000e+00> : vector<8x128xf32>
    %379 = tpu.matmul %367, %0, %cst_190 {dimension_numbers = #tpu.dot_dimension_numbers<[1], [0], [0], [1], [0, 0, 1, 1], [], []>} : vector<8x8xf32>, vector<8x128xf32>, vector<8x128xf32> -> vector<8x128xf32>
    %cst_191 = arith.constant dense<0.000000e+00> : vector<8x128xf32>
    %380 = tpu.matmul %358, %2, %cst_191 {dimension_numbers = #tpu.dot_dimension_numbers<[1], [0], [0], [1], [0, 0, 1, 1], [], []>} : vector<8x32xf32>, vector<32x128xf32>, vector<8x128xf32> -> vector<8x128xf32>
    %381 = arith.addf %379, %380 : vector<8x128xf32>
    %382 = arith.addf %381, %350 : vector<8x128xf32>
    %383 = arith.negf %382 : vector<8x128xf32>
    %384 = math.exp %383 : vector<8x128xf32>
    %cst_192 = arith.constant 1.000000e+00 : f32
    %385 = vector.broadcast %cst_192 : f32 to vector<8x128xf32>
    %386 = arith.addf %385, %384 : vector<8x128xf32>
    %387 = arith.divf %385, %386 : vector<8x128xf32>
    %388 = vector.extract_strided_slice %382 {offsets = [0, 64], sizes = [8, 32], strides = [1, 1]} : vector<8x128xf32> to vector<8x32xf32>
    %389 = math.tanh %388 : vector<8x32xf32>
    %390 = vector.extract_strided_slice %387 {offsets = [0, 0], sizes = [8, 32], strides = [1, 1]} : vector<8x128xf32> to vector<8x32xf32>
    %391 = vector.extract_strided_slice %387 {offsets = [0, 32], sizes = [8, 32], strides = [1, 1]} : vector<8x128xf32> to vector<8x32xf32>
    %392 = vector.extract_strided_slice %387 {offsets = [0, 96], sizes = [8, 32], strides = [1, 1]} : vector<8x128xf32> to vector<8x32xf32>
    %393 = arith.mulf %391, %344 : vector<8x32xf32>
    %394 = arith.mulf %390, %389 : vector<8x32xf32>
    %395 = arith.addf %393, %394 : vector<8x32xf32>
    %396 = math.tanh %395 : vector<8x32xf32>
    %397 = arith.mulf %392, %396 : vector<8x32xf32>
    %c40_193 = arith.constant 40 : index
    %c0_194 = arith.constant 0 : index
    %398 = vector.load %arg0[%c40_193, %c0_194] : memref<192x8xf32, #tpu.memory_space<vmem>>, vector<8x8xf32>
    %c104 = arith.constant 104 : index
    %c0_195 = arith.constant 0 : index
    %399 = vector.load %arg0[%c104, %c0_195] : memref<192x8xf32, #tpu.memory_space<vmem>>, vector<8x8xf32>
    %c40_196 = arith.constant 40 : index
    %c0_197 = arith.constant 0 : index
    %400 = vector.load %arg6[%c40_196, %c0_197] : memref<64x32xf32, #tpu.memory_space<vmem>>, vector<8x32xf32>
    %c40_198 = arith.constant 40 : index
    %c0_199 = arith.constant 0 : index
    %401 = vector.load %arg7[%c40_198, %c0_199] : memref<64x128xf32, #tpu.memory_space<vmem>>, vector<8x128xf32>
    %c40_200 = arith.constant 40 : index
    %c0_201 = arith.constant 0 : index
    %402 = vector.load %arg8[%c40_200, %c0_201] : memref<64x8xf32, #tpu.memory_space<vmem>>, vector<8x8xf32>
    %c40_202 = arith.constant 40 : index
    %c0_203 = arith.constant 0 : index
    %403 = vector.load %arg9[%c40_202, %c0_203] : memref<64x8xf32, #tpu.memory_space<vmem>>, vector<8x8xf32>
    %c40_204 = arith.constant 40 : index
    %c0_205 = arith.constant 0 : index
    %404 = vector.load %arg10[%c40_204, %c0_205] : memref<64x8xf32, #tpu.memory_space<vmem>>, vector<8x8xf32>
    %c40_206 = arith.constant 40 : index
    %c0_207 = arith.constant 0 : index
    %405 = vector.load %arg11[%c40_206, %c0_207] : memref<64x8xf32, #tpu.memory_space<vmem>>, vector<8x8xf32>
    %cst_208 = arith.constant 1.000000e+00 : f32
    %406 = vector.broadcast %cst_208 : f32 to vector<8x8xf32>
    %407 = arith.subf %406, %399 : vector<8x8xf32>
    %408 = arith.mulf %399, %398 : vector<8x8xf32>
    %409 = arith.mulf %397, %400 : vector<8x32xf32>
    %cst_209 = arith.constant dense<0.000000e+00> : vector<8x8xf32>
    %410 = tpu.matmul %409, %7, %cst_209 {dimension_numbers = #tpu.dot_dimension_numbers<[1], [0], [0], [1], [0, 0, 1, 1], [], []>} : vector<8x32xf32>, vector<32x8xf32>, vector<8x8xf32> -> vector<8x8xf32>
    %411 = arith.addf %410, %139 : vector<8x8xf32>
    %412 = arith.mulf %407, %411 : vector<8x8xf32>
    %cst_210 = arith.constant dense<0.000000e+00> : vector<8x8xf32>
    %413 = tpu.matmul %412, %8, %cst_210 {dimension_numbers = #tpu.dot_dimension_numbers<[1], [0], [0], [1], [0, 0, 1, 1], [], []>} : vector<8x8xf32>, vector<8x8xf32>, vector<8x8xf32> -> vector<8x8xf32>
    %414 = arith.addf %413, %404 : vector<8x8xf32>
    %415 = arith.mulf %402, %414 : vector<8x8xf32>
    %416 = arith.mulf %403, %411 : vector<8x8xf32>
    %417 = arith.addf %415, %416 : vector<8x8xf32>
    %418 = arith.mulf %407, %417 : vector<8x8xf32>
    %419 = arith.addf %408, %418 : vector<8x8xf32>
    %420 = arith.subf %398, %411 : vector<8x8xf32>
    %421 = math.absf %420 : vector<8x8xf32>
    %422 = arith.subf %398, %414 : vector<8x8xf32>
    %423 = math.absf %422 : vector<8x8xf32>
    %424 = arith.addf %421, %423 : vector<8x8xf32>
    %425 = arith.subf %398, %417 : vector<8x8xf32>
    %426 = math.absf %425 : vector<8x8xf32>
    %427 = arith.addf %424, %426 : vector<8x8xf32>
    %428 = arith.mulf %427, %405 : vector<8x8xf32>
    %429 = arith.addf %378, %428 : vector<8x8xf32>
    %cst_211 = arith.constant dense<0.000000e+00> : vector<8x128xf32>
    %430 = tpu.matmul %418, %0, %cst_211 {dimension_numbers = #tpu.dot_dimension_numbers<[1], [0], [0], [1], [0, 0, 1, 1], [], []>} : vector<8x8xf32>, vector<8x128xf32>, vector<8x128xf32> -> vector<8x128xf32>
    %cst_212 = arith.constant dense<0.000000e+00> : vector<8x128xf32>
    %431 = tpu.matmul %409, %2, %cst_212 {dimension_numbers = #tpu.dot_dimension_numbers<[1], [0], [0], [1], [0, 0, 1, 1], [], []>} : vector<8x32xf32>, vector<32x128xf32>, vector<8x128xf32> -> vector<8x128xf32>
    %432 = arith.addf %430, %431 : vector<8x128xf32>
    %433 = arith.addf %432, %401 : vector<8x128xf32>
    %434 = arith.negf %433 : vector<8x128xf32>
    %435 = math.exp %434 : vector<8x128xf32>
    %cst_213 = arith.constant 1.000000e+00 : f32
    %436 = vector.broadcast %cst_213 : f32 to vector<8x128xf32>
    %437 = arith.addf %436, %435 : vector<8x128xf32>
    %438 = arith.divf %436, %437 : vector<8x128xf32>
    %439 = vector.extract_strided_slice %433 {offsets = [0, 64], sizes = [8, 32], strides = [1, 1]} : vector<8x128xf32> to vector<8x32xf32>
    %440 = math.tanh %439 : vector<8x32xf32>
    %441 = vector.extract_strided_slice %438 {offsets = [0, 0], sizes = [8, 32], strides = [1, 1]} : vector<8x128xf32> to vector<8x32xf32>
    %442 = vector.extract_strided_slice %438 {offsets = [0, 32], sizes = [8, 32], strides = [1, 1]} : vector<8x128xf32> to vector<8x32xf32>
    %443 = vector.extract_strided_slice %438 {offsets = [0, 96], sizes = [8, 32], strides = [1, 1]} : vector<8x128xf32> to vector<8x32xf32>
    %444 = arith.mulf %442, %395 : vector<8x32xf32>
    %445 = arith.mulf %441, %440 : vector<8x32xf32>
    %446 = arith.addf %444, %445 : vector<8x32xf32>
    %447 = math.tanh %446 : vector<8x32xf32>
    %448 = arith.mulf %443, %447 : vector<8x32xf32>
    %c48_214 = arith.constant 48 : index
    %c0_215 = arith.constant 0 : index
    %449 = vector.load %arg0[%c48_214, %c0_215] : memref<192x8xf32, #tpu.memory_space<vmem>>, vector<8x8xf32>
    %c112 = arith.constant 112 : index
    %c0_216 = arith.constant 0 : index
    %450 = vector.load %arg0[%c112, %c0_216] : memref<192x8xf32, #tpu.memory_space<vmem>>, vector<8x8xf32>
    %c48_217 = arith.constant 48 : index
    %c0_218 = arith.constant 0 : index
    %451 = vector.load %arg6[%c48_217, %c0_218] : memref<64x32xf32, #tpu.memory_space<vmem>>, vector<8x32xf32>
    %c48_219 = arith.constant 48 : index
    %c0_220 = arith.constant 0 : index
    %452 = vector.load %arg7[%c48_219, %c0_220] : memref<64x128xf32, #tpu.memory_space<vmem>>, vector<8x128xf32>
    %c48_221 = arith.constant 48 : index
    %c0_222 = arith.constant 0 : index
    %453 = vector.load %arg8[%c48_221, %c0_222] : memref<64x8xf32, #tpu.memory_space<vmem>>, vector<8x8xf32>
    %c48_223 = arith.constant 48 : index
    %c0_224 = arith.constant 0 : index
    %454 = vector.load %arg9[%c48_223, %c0_224] : memref<64x8xf32, #tpu.memory_space<vmem>>, vector<8x8xf32>
    %c48_225 = arith.constant 48 : index
    %c0_226 = arith.constant 0 : index
    %455 = vector.load %arg10[%c48_225, %c0_226] : memref<64x8xf32, #tpu.memory_space<vmem>>, vector<8x8xf32>
    %c48_227 = arith.constant 48 : index
    %c0_228 = arith.constant 0 : index
    %456 = vector.load %arg11[%c48_227, %c0_228] : memref<64x8xf32, #tpu.memory_space<vmem>>, vector<8x8xf32>
    %cst_229 = arith.constant 1.000000e+00 : f32
    %457 = vector.broadcast %cst_229 : f32 to vector<8x8xf32>
    %458 = arith.subf %457, %450 : vector<8x8xf32>
    %459 = arith.mulf %450, %449 : vector<8x8xf32>
    %460 = arith.mulf %448, %451 : vector<8x32xf32>
    %cst_230 = arith.constant dense<0.000000e+00> : vector<8x8xf32>
    %461 = tpu.matmul %460, %7, %cst_230 {dimension_numbers = #tpu.dot_dimension_numbers<[1], [0], [0], [1], [0, 0, 1, 1], [], []>} : vector<8x32xf32>, vector<32x8xf32>, vector<8x8xf32> -> vector<8x8xf32>
    %462 = arith.addf %461, %139 : vector<8x8xf32>
    %463 = arith.mulf %458, %462 : vector<8x8xf32>
    %cst_231 = arith.constant dense<0.000000e+00> : vector<8x8xf32>
    %464 = tpu.matmul %463, %8, %cst_231 {dimension_numbers = #tpu.dot_dimension_numbers<[1], [0], [0], [1], [0, 0, 1, 1], [], []>} : vector<8x8xf32>, vector<8x8xf32>, vector<8x8xf32> -> vector<8x8xf32>
    %465 = arith.addf %464, %455 : vector<8x8xf32>
    %466 = arith.mulf %453, %465 : vector<8x8xf32>
    %467 = arith.mulf %454, %462 : vector<8x8xf32>
    %468 = arith.addf %466, %467 : vector<8x8xf32>
    %469 = arith.mulf %458, %468 : vector<8x8xf32>
    %470 = arith.addf %459, %469 : vector<8x8xf32>
    %471 = arith.subf %449, %462 : vector<8x8xf32>
    %472 = math.absf %471 : vector<8x8xf32>
    %473 = arith.subf %449, %465 : vector<8x8xf32>
    %474 = math.absf %473 : vector<8x8xf32>
    %475 = arith.addf %472, %474 : vector<8x8xf32>
    %476 = arith.subf %449, %468 : vector<8x8xf32>
    %477 = math.absf %476 : vector<8x8xf32>
    %478 = arith.addf %475, %477 : vector<8x8xf32>
    %479 = arith.mulf %478, %456 : vector<8x8xf32>
    %480 = arith.addf %429, %479 : vector<8x8xf32>
    %cst_232 = arith.constant dense<0.000000e+00> : vector<8x128xf32>
    %481 = tpu.matmul %469, %0, %cst_232 {dimension_numbers = #tpu.dot_dimension_numbers<[1], [0], [0], [1], [0, 0, 1, 1], [], []>} : vector<8x8xf32>, vector<8x128xf32>, vector<8x128xf32> -> vector<8x128xf32>
    %cst_233 = arith.constant dense<0.000000e+00> : vector<8x128xf32>
    %482 = tpu.matmul %460, %2, %cst_233 {dimension_numbers = #tpu.dot_dimension_numbers<[1], [0], [0], [1], [0, 0, 1, 1], [], []>} : vector<8x32xf32>, vector<32x128xf32>, vector<8x128xf32> -> vector<8x128xf32>
    %483 = arith.addf %481, %482 : vector<8x128xf32>
    %484 = arith.addf %483, %452 : vector<8x128xf32>
    %485 = arith.negf %484 : vector<8x128xf32>
    %486 = math.exp %485 : vector<8x128xf32>
    %cst_234 = arith.constant 1.000000e+00 : f32
    %487 = vector.broadcast %cst_234 : f32 to vector<8x128xf32>
    %488 = arith.addf %487, %486 : vector<8x128xf32>
    %489 = arith.divf %487, %488 : vector<8x128xf32>
    %490 = vector.extract_strided_slice %484 {offsets = [0, 64], sizes = [8, 32], strides = [1, 1]} : vector<8x128xf32> to vector<8x32xf32>
    %491 = math.tanh %490 : vector<8x32xf32>
    %492 = vector.extract_strided_slice %489 {offsets = [0, 0], sizes = [8, 32], strides = [1, 1]} : vector<8x128xf32> to vector<8x32xf32>
    %493 = vector.extract_strided_slice %489 {offsets = [0, 32], sizes = [8, 32], strides = [1, 1]} : vector<8x128xf32> to vector<8x32xf32>
    %494 = vector.extract_strided_slice %489 {offsets = [0, 96], sizes = [8, 32], strides = [1, 1]} : vector<8x128xf32> to vector<8x32xf32>
    %495 = arith.mulf %493, %446 : vector<8x32xf32>
    %496 = arith.mulf %492, %491 : vector<8x32xf32>
    %497 = arith.addf %495, %496 : vector<8x32xf32>
    %498 = math.tanh %497 : vector<8x32xf32>
    %499 = arith.mulf %494, %498 : vector<8x32xf32>
    %c56_235 = arith.constant 56 : index
    %c0_236 = arith.constant 0 : index
    %500 = vector.load %arg0[%c56_235, %c0_236] : memref<192x8xf32, #tpu.memory_space<vmem>>, vector<8x8xf32>
    %c120 = arith.constant 120 : index
    %c0_237 = arith.constant 0 : index
    %501 = vector.load %arg0[%c120, %c0_237] : memref<192x8xf32, #tpu.memory_space<vmem>>, vector<8x8xf32>
    %c56_238 = arith.constant 56 : index
    %c0_239 = arith.constant 0 : index
    %502 = vector.load %arg6[%c56_238, %c0_239] : memref<64x32xf32, #tpu.memory_space<vmem>>, vector<8x32xf32>
    %c56_240 = arith.constant 56 : index
    %c0_241 = arith.constant 0 : index
    %503 = vector.load %arg7[%c56_240, %c0_241] : memref<64x128xf32, #tpu.memory_space<vmem>>, vector<8x128xf32>
    %c56_242 = arith.constant 56 : index
    %c0_243 = arith.constant 0 : index
    %504 = vector.load %arg8[%c56_242, %c0_243] : memref<64x8xf32, #tpu.memory_space<vmem>>, vector<8x8xf32>
    %c56_244 = arith.constant 56 : index
    %c0_245 = arith.constant 0 : index
    %505 = vector.load %arg9[%c56_244, %c0_245] : memref<64x8xf32, #tpu.memory_space<vmem>>, vector<8x8xf32>
    %c56_246 = arith.constant 56 : index
    %c0_247 = arith.constant 0 : index
    %506 = vector.load %arg10[%c56_246, %c0_247] : memref<64x8xf32, #tpu.memory_space<vmem>>, vector<8x8xf32>
    %c56_248 = arith.constant 56 : index
    %c0_249 = arith.constant 0 : index
    %507 = vector.load %arg11[%c56_248, %c0_249] : memref<64x8xf32, #tpu.memory_space<vmem>>, vector<8x8xf32>
    %cst_250 = arith.constant 1.000000e+00 : f32
    %508 = vector.broadcast %cst_250 : f32 to vector<8x8xf32>
    %509 = arith.subf %508, %501 : vector<8x8xf32>
    %510 = arith.mulf %501, %500 : vector<8x8xf32>
    %511 = arith.mulf %499, %502 : vector<8x32xf32>
    %cst_251 = arith.constant dense<0.000000e+00> : vector<8x8xf32>
    %512 = tpu.matmul %511, %7, %cst_251 {dimension_numbers = #tpu.dot_dimension_numbers<[1], [0], [0], [1], [0, 0, 1, 1], [], []>} : vector<8x32xf32>, vector<32x8xf32>, vector<8x8xf32> -> vector<8x8xf32>
    %513 = arith.addf %512, %139 : vector<8x8xf32>
    %514 = arith.mulf %509, %513 : vector<8x8xf32>
    %cst_252 = arith.constant dense<0.000000e+00> : vector<8x8xf32>
    %515 = tpu.matmul %514, %8, %cst_252 {dimension_numbers = #tpu.dot_dimension_numbers<[1], [0], [0], [1], [0, 0, 1, 1], [], []>} : vector<8x8xf32>, vector<8x8xf32>, vector<8x8xf32> -> vector<8x8xf32>
    %516 = arith.addf %515, %506 : vector<8x8xf32>
    %517 = arith.mulf %504, %516 : vector<8x8xf32>
    %518 = arith.mulf %505, %513 : vector<8x8xf32>
    %519 = arith.addf %517, %518 : vector<8x8xf32>
    %520 = arith.mulf %509, %519 : vector<8x8xf32>
    %521 = arith.addf %510, %520 : vector<8x8xf32>
    %522 = arith.subf %500, %513 : vector<8x8xf32>
    %523 = math.absf %522 : vector<8x8xf32>
    %524 = arith.subf %500, %516 : vector<8x8xf32>
    %525 = math.absf %524 : vector<8x8xf32>
    %526 = arith.addf %523, %525 : vector<8x8xf32>
    %527 = arith.subf %500, %519 : vector<8x8xf32>
    %528 = math.absf %527 : vector<8x8xf32>
    %529 = arith.addf %526, %528 : vector<8x8xf32>
    %530 = arith.mulf %529, %507 : vector<8x8xf32>
    %531 = arith.addf %480, %530 : vector<8x8xf32>
    %cst_253 = arith.constant dense<0.000000e+00> : vector<8x128xf32>
    %532 = tpu.matmul %520, %0, %cst_253 {dimension_numbers = #tpu.dot_dimension_numbers<[1], [0], [0], [1], [0, 0, 1, 1], [], []>} : vector<8x8xf32>, vector<8x128xf32>, vector<8x128xf32> -> vector<8x128xf32>
    %cst_254 = arith.constant dense<0.000000e+00> : vector<8x128xf32>
    %533 = tpu.matmul %511, %2, %cst_254 {dimension_numbers = #tpu.dot_dimension_numbers<[1], [0], [0], [1], [0, 0, 1, 1], [], []>} : vector<8x32xf32>, vector<32x128xf32>, vector<8x128xf32> -> vector<8x128xf32>
    %534 = arith.addf %532, %533 : vector<8x128xf32>
    %535 = arith.addf %534, %503 : vector<8x128xf32>
    %536 = arith.negf %535 : vector<8x128xf32>
    %537 = math.exp %536 : vector<8x128xf32>
    %cst_255 = arith.constant 1.000000e+00 : f32
    %538 = vector.broadcast %cst_255 : f32 to vector<8x128xf32>
    %539 = arith.addf %538, %537 : vector<8x128xf32>
    %540 = arith.divf %538, %539 : vector<8x128xf32>
    %541 = vector.extract_strided_slice %535 {offsets = [0, 64], sizes = [8, 32], strides = [1, 1]} : vector<8x128xf32> to vector<8x32xf32>
    %542 = math.tanh %541 : vector<8x32xf32>
    %543 = vector.extract_strided_slice %540 {offsets = [0, 0], sizes = [8, 32], strides = [1, 1]} : vector<8x128xf32> to vector<8x32xf32>
    %544 = vector.extract_strided_slice %540 {offsets = [0, 32], sizes = [8, 32], strides = [1, 1]} : vector<8x128xf32> to vector<8x32xf32>
    %545 = vector.extract_strided_slice %540 {offsets = [0, 96], sizes = [8, 32], strides = [1, 1]} : vector<8x128xf32> to vector<8x32xf32>
    %546 = arith.mulf %544, %497 : vector<8x32xf32>
    %547 = arith.mulf %543, %542 : vector<8x32xf32>
    %548 = arith.addf %546, %547 : vector<8x32xf32>
    %549 = math.tanh %548 : vector<8x32xf32>
    %550 = arith.mulf %545, %549 : vector<8x32xf32>
    %551 = tpu.concatenate %164, %215, %266, %317, %368, %419, %470, %521 in 0 : vector<8x8xf32>, vector<8x8xf32>, vector<8x8xf32>, vector<8x8xf32>, vector<8x8xf32>, vector<8x8xf32>, vector<8x8xf32>, vector<8x8xf32> -> vector<64x8xf32>
    %552 = vector.shape_cast %531 : vector<8x8xf32> to vector<1x8x8xf32>
    %cst_256 = arith.constant dense<0.000000e+00> : vector<1xf32>
    %553 = vector.multi_reduction <add>, %552, %cst_256 [1, 2] : vector<1x8x8xf32> to vector<1xf32>
    %554 = vector.shape_cast %553 : vector<1xf32> to vector<1x1x1xf32>
    %555 = vector.extract %554[0, 0, 0] : f32 from vector<1x1x1xf32>
    %c0_257 = arith.constant 0 : index
    %c0_258 = arith.constant 0 : index
    %556 = vector.load %arg1[%c0_257, %c0_258] : memref<8x2xf32, #tpu.memory_space<vmem>>, vector<8x1xf32>
    %c0_259 = arith.constant 0 : index
    %c1 = arith.constant 1 : index
    %557 = vector.load %arg1[%c0_259, %c1] : memref<8x2xf32, #tpu.memory_space<vmem>>, vector<8x1xf32>
    %558 = vector.broadcast %6 : vector<1x32xf32> to vector<8x32xf32>
    %559 = arith.mulf %550, %558 : vector<8x32xf32>
    %cst_260 = arith.constant dense<0.000000e+00> : vector<8xf32>
    %560 = vector.multi_reduction <add>, %559, %cst_260 [1] : vector<8x32xf32> to vector<8xf32>
    %561 = vector.shape_cast %560 : vector<8xf32> to vector<8x1xf32>
    %562 = vector.broadcast %16 : vector<1x1xf32> to vector<8x1xf32>
    %563 = arith.addf %561, %562 : vector<8x1xf32>
    %cst_261 = arith.constant 0.000000e+00 : f32
    %564 = vector.broadcast %cst_261 : f32 to vector<8x1xf32>
    %565 = arith.subf %564, %563 : vector<8x1xf32>
    %cst_262 = arith.constant 0.000000e+00 : f32
    %566 = vector.broadcast %cst_262 : f32 to vector<8x1xf32>
    %567 = arith.maximumf %565, %566 : vector<8x1xf32>
    %568 = arith.mulf %563, %556 : vector<8x1xf32>
    %569 = arith.subf %563, %568 : vector<8x1xf32>
    %570 = arith.addf %569, %567 : vector<8x1xf32>
    %cst_263 = arith.constant 0.000000e+00 : f32
    %571 = vector.broadcast %cst_263 : f32 to vector<8x1xf32>
    %572 = arith.subf %571, %567 : vector<8x1xf32>
    %573 = math.exp %572 : vector<8x1xf32>
    %cst_264 = arith.constant 0.000000e+00 : f32
    %574 = vector.broadcast %cst_264 : f32 to vector<8x1xf32>
    %575 = arith.subf %574, %563 : vector<8x1xf32>
    %576 = arith.subf %575, %567 : vector<8x1xf32>
    %577 = math.exp %576 : vector<8x1xf32>
    %578 = arith.addf %573, %577 : vector<8x1xf32>
    %579 = math.log %578 : vector<8x1xf32>
    %580 = arith.addf %570, %579 : vector<8x1xf32>
    %581 = arith.mulf %580, %557 : vector<8x1xf32>
    %582 = vector.shape_cast %581 : vector<8x1xf32> to vector<1x8x1xf32>
    %cst_265 = arith.constant dense<0.000000e+00> : vector<1xf32>
    %583 = vector.multi_reduction <add>, %582, %cst_265 [1, 2] : vector<1x8x1xf32> to vector<1xf32>
    %584 = vector.shape_cast %583 : vector<1xf32> to vector<1x1x1xf32>
    %585 = vector.extract %584[0, 0, 0] : f32 from vector<1x1x1xf32>
    %586 = vector.shape_cast %557 : vector<8x1xf32> to vector<1x8x1xf32>
    %cst_266 = arith.constant dense<0.000000e+00> : vector<1xf32>
    %587 = vector.multi_reduction <add>, %586, %cst_266 [1, 2] : vector<1x8x1xf32> to vector<1xf32>
    %588 = vector.shape_cast %587 : vector<1xf32> to vector<1x1x1xf32>
    %589 = vector.extract %588[0, 0, 0] : f32 from vector<1x1x1xf32>
    %cst_267 = arith.constant 9.99999974E-6 : f32
    %590 = arith.addf %589, %cst_267 : f32
    %591 = arith.divf %585, %590 : f32
    %cst_268 = arith.constant 8.000000e+00 : f32
    %592 = arith.divf %555, %cst_268 : f32
    %cst_269 = arith.constant 1.000000e-01 : f32
    %593 = arith.mulf %cst_269, %591 : f32
    %594 = arith.addf %592, %593 : f32
    %595 = arith.negf %563 : vector<8x1xf32>
    %596 = math.exp %595 : vector<8x1xf32>
    %cst_270 = arith.constant 1.000000e+00 : f32
    %597 = vector.broadcast %cst_270 : f32 to vector<8x1xf32>
    %598 = arith.addf %597, %596 : vector<8x1xf32>
    %599 = arith.divf %597, %598 : vector<8x1xf32>
    %600 = tpu.iota {dimensions = array<i32: 1>} : vector<8x8xi32>
    %c0_i32 = arith.constant 0 : i32
    %601 = vector.broadcast %c0_i32 : i32 to vector<8x8xi32>
    %602 = arith.cmpi eq, %600, %601 : vector<8x8xi32>
    %c1_i32 = arith.constant 1 : i32
    %603 = vector.broadcast %c1_i32 : i32 to vector<8x8xi32>
    %604 = arith.cmpi eq, %600, %603 : vector<8x8xi32>
    %605 = vector.broadcast %594 : f32 to vector<8x8xf32>
    %cst_271 = arith.constant 0.000000e+00 : f32
    %606 = vector.broadcast %cst_271 : f32 to vector<8x8xf32>
    %607 = arith.select %604, %605, %606 : vector<8x8xi1>, vector<8x8xf32>
    %608 = vector.shape_cast %599 : vector<8x1xf32> to vector<8x1xf32>
    %609 = vector.broadcast %608 : vector<8x1xf32> to vector<8x8xf32>
    %610 = arith.select %602, %609, %607 : vector<8x8xi1>, vector<8x8xf32>
    %c0_272 = arith.constant 0 : index
    %c0_273 = arith.constant 0 : index
    %611 = vector.load %arg5[%c0_272, %c0_273] : memref<72x8xf32, #tpu.memory_space<vmem>>, vector<64x8xf32>
    tpu.vector_store %arg5[%c0_272, %c0_273], %551 {strides = array<i32>} : memref<72x8xf32, #tpu.memory_space<vmem>>, vector<64x8xf32>,
    %c64_274 = arith.constant 64 : index
    %c0_275 = arith.constant 0 : index
    %612 = vector.load %arg5[%c64_274, %c0_275] : memref<72x8xf32, #tpu.memory_space<vmem>>, vector<8x8xf32>
    tpu.vector_store %arg5[%c64_274, %c0_275], %610 {strides = array<i32>} : memref<72x8xf32, #tpu.memory_space<vmem>>, vector<8x8xf32>,
    return
  }
}

</mosaic_0001>

<llo_original>
// kernel: rits_forward.1
$region0: #{rits_forward.1}
  #allocation0 [shape = 'u32[]', space=smem, size = 0x4, offset = 0x4, fixed_abs, tag = 'smem constant byte address 0x4 - core index']
  #allocation1 [shape = 'u32[144,128]{1,0:T(1,128)}', space=vmem, size = 0x12000, scoped, tag = 'internal scratch']
  #allocation2 [shape = 'f32[64,32]{1,0:T(8,128)}', space=vmem, size = 0x8000, scoped, tag = 'scratch operand']
  #allocation3 [shape = 'f32[64,128]{1,0:T(8,128)}', space=vmem, size = 0x8000, scoped, tag = 'scratch operand']
  #allocation4 [shape = 'f32[64,8]{1,0:T(8,128)}', space=vmem, size = 0x8000, scoped, tag = 'scratch operand']
  #allocation5 [shape = 'f32[64,8]{1,0:T(8,128)}', space=vmem, size = 0x8000, scoped, tag = 'scratch operand']
  #allocation6 [shape = 'f32[64,8]{1,0:T(8,128)}', space=vmem, size = 0x8000, scoped, tag = 'scratch operand']
  #allocation7 [shape = 'f32[64,8]{1,0:T(8,128)}', space=vmem, size = 0x8000, scoped, tag = 'scratch operand']
  %s0 = inlined_call_operand.vmem [shape: f32[192,8], index: 0, kind: input, shape index: {}]
  %s1 = inlined_call_operand.vmem [shape: f32[8,2], index: 1, kind: input, shape index: {}]
  %s2 = inlined_call_operand.vmem [shape: f32[49,128], index: 2, kind: input, shape index: {}]
  %s3 = inlined_call_operand.vmem [shape: f32[10,32], index: 3, kind: input, shape index: {}]
  %s4 = inlined_call_operand.vmem [shape: f32[62,8], index: 4, kind: input, shape index: {}]
  %s5 = inlined_call_operand.vmem [shape: f32[72,8], index: 5, kind: output, shape index: {}]
  %s6 = sld [smem:[#allocation0]]
  $region30: #{rits_forward.1} parent=0
    _
  %s8 = ssub.s32 1, %s6
  %s9 = scalar_select 0, %s8, %s6
  // Predicated region
  $region2: #{rits_forward.1} parent=0 // pred_check
    _
  $region3: #{rits_forward.1} parent=0 // pred_check_branch
    %11 = sbr.rel (0) target = $region5
  $region4: #{rits_forward.1} parent=0 // pred_region
    _
  $region5: #{rits_forward.1} parent=0 // pred_fallthru
    _
  // Predicated region
  $region6: #{rits_forward.1} parent=0 // pred_check
    _
  $region7: #{rits_forward.1} parent=0 // pred_check_branch
    %13 = sbr.rel (0) target = $region9
  $region8: #{rits_forward.1} parent=0 // pred_region
    _
  $region9: #{rits_forward.1} parent=0 // pred_fallthru
    _
  // Predicated region
  $region10: #{rits_forward.1} parent=0 // pred_check
    _
  $region11: #{rits_forward.1} parent=0 // pred_check_branch
    %15 = sbr.rel (0) target = $region13
  $region12: #{rits_forward.1} parent=0 // pred_region
    _
  $region13: #{rits_forward.1} parent=0 // pred_fallthru
    _
  // Predicated region
  $region14: #{rits_forward.1} parent=0 // pred_check
    _
  $region15: #{rits_forward.1} parent=0 // pred_check_branch
    %17 = sbr.rel (0) target = $region17
  $region16: #{rits_forward.1} parent=0 // pred_region
    _
  $region17: #{rits_forward.1} parent=0 // pred_fallthru
    _
  // Predicated region
  $region18: #{rits_forward.1} parent=0 // pred_check
    _
  $region19: #{rits_forward.1} parent=0 // pred_check_branch
    %19 = sbr.rel (0) target = $region21
  $region20: #{rits_forward.1} parent=0 // pred_region
    _
  $region21: #{rits_forward.1} parent=0 // pred_fallthru
    _
  %v20 = vld [vmem:[%s2] sm:$0xff]
  %v21 = vld [vmem:[%s2 + $0x8] sm:$0xff]
  %v22 = vld [vmem:[%s2 + $0x10] sm:$0xff]
  %v23 = vld [vmem:[%s2 + $0x18] sm:$0xff]
  %v24 = vld [vmem:[%s2 + $0x20] sm:$0xff]
  %v25 = vld [vmem:[%s2 + $0x28] sm:$0xff]
  %v26 = vld [vmem:[%s2 + $0x30] sm:$0x1]
  %v27 = vld [vmem:[%s3] sm:$0xff]
  %v28 = vld [vmem:[%s3 + $0x8] sm:$0x1]
  %v29 = vld [vmem:[%s3 + $0x9] sm:$0x1]
  %v30 = vld [vmem:[%s4] sm:$0xff]
  %v31 = vld [vmem:[%s4 + $0x8] sm:$0xff]
  %v32 = vld [vmem:[%s4 + $0x10] sm:$0xff]
  %v33 = vld [vmem:[%s4 + $0x18] sm:$0xff]
  %v34 = vld [vmem:[%s4 + $0x20] sm:$0xff]
  %v35 = vld [vmem:[%s4 + $0x28] sm:$0xff]
  %v36 = vld [vmem:[%s4 + $0x30] sm:$0xff]
  %v37 = vld [vmem:[%s4 + $0x38] sm:$0x1]
  %v38 = vld [vmem:[%s4 + $0x39] sm:$0x1]
  %v39 = vld [vmem:[%s4 + $0x3a] sm:$0x1]
  %v40 = vld [vmem:[%s4 + $0x3b] sm:$0x1]
  %v41 = vld [vmem:[%s4 + $0x3c] sm:$0x1]
  %v42 = vld [vmem:[%s4 + $0x3d] sm:$0x1]
  %v43 = vld [vmem:[%s0] sm:$0xff]
  %v44 = vld [vmem:[%s0 + $0x8] sm:$0xff]
  %v45 = vld [vmem:[%s0 + $0x10] sm:$0xff]
  %v46 = vld [vmem:[%s0 + $0x18] sm:$0xff]
  %v47 = vld [vmem:[%s0 + $0x20] sm:$0xff]
  %v48 = vld [vmem:[%s0 + $0x28] sm:$0xff]
  %v49 = vld [vmem:[%s0 + $0x30] sm:$0xff]
  %v50 = vld [vmem:[%s0 + $0x38] sm:$0xff]
  %v51 = vld [vmem:[%s0 + $0x40] sm:$0xff]
  %v52 = vld [vmem:[%s0 + $0x48] sm:$0xff]
  %v53 = vld [vmem:[%s0 + $0x50] sm:$0xff]
  %v54 = vld [vmem:[%s0 + $0x58] sm:$0xff]
  %v55 = vld [vmem:[%s0 + $0x60] sm:$0xff]
  %v56 = vld [vmem:[%s0 + $0x68] sm:$0xff]
  %v57 = vld [vmem:[%s0 + $0x70] sm:$0xff]
  %v58 = vld [vmem:[%s0 + $0x78] sm:$0xff]
  %v59 = vld [vmem:[%s0 + $0x80] sm:$0xff]
  %v60 = vld [vmem:[%s0 + $0x88] sm:$0xff]
  %v61 = vld [vmem:[%s0 + $0x90] sm:$0xff]
  %v62 = vld [vmem:[%s0 + $0x98] sm:$0xff]
  %v63 = vld [vmem:[%s0 + $0xa0] sm:$0xff]
  %v64 = vld [vmem:[%s0 + $0xa8] sm:$0xff]
  %v65 = vld [vmem:[%s0 + $0xb0] sm:$0xff]
  %v66 = vld [vmem:[%s0 + $0xb8] sm:$0xff]
  %v67 = vmul.f32 %v51, %v43
  %v68 = vmul.f32 %v52, %v44
  %v69 = vmul.f32 %v53, %v45
  %v70 = vmul.f32 %v54, %v46
  %v71 = vmul.f32 %v55, %v47
  %v72 = vmul.f32 %v56, %v48
  %v73 = vmul.f32 %v57, %v49
  %v74 = vmul.f32 %v58, %v50
  %v75 = vlaneseq
  %v76 = vshrl.u32 %v75, 7
  %v77 = vsub.s32 0, %v76
  %v78 = vrot.slane %v28, %v77
  %vm79 = vcmask 64512
  %v81 = vsel %vm79, %v59, 0
  %v84 = vsel %vm79, %v60, 0
  %v87 = vsel %vm79, %v61, 0
  %v90 = vsel %vm79, %v62, 0
  %v93 = vsel %vm79, %v63, 0
  %v96 = vsel %vm79, %v64, 0
  %v99 = vsel %vm79, %v65, 0
  %v102 = vsel %vm79, %v66, 0
  %104 = vmatprep.subr.mxu0 0.0
  %105 = vmatpush1.msra.mxu0 0.0
  %106 = vmatprep.subr.mxu0 0.0
  %107 = vmatpush1.msra.mxu0 0.0
  %108 = vmatprep.subr.mxu0 0.0
  %109 = vmatpush1.msra.mxu0 0.0
  %110 = vmatprep.subr.mxu0 0.0
  %111 = vmatpush1.msra.mxu0 0.0
  %112 = vmatprep.subr.mxu0 0.0
  %113 = vmatpush1.msra.mxu0 0.0
  %114 = vmatprep.subr.mxu0 0.0
  %115 = vmatpush1.msra.mxu0 0.0
  %116 = vmatprep.subr.mxu0 0.0
  %117 = vmatpush1.msra.mxu0 0.0
  %118 = vmatprep.subr.mxu0 0.0
  %119 = vmatpush1.msra.mxu0 0.0
  %120 = vmatprep.subr.mxu0 0.0
  %121 = vmatpush1.msra.mxu0 0.0
  %122 = vmatprep.subr.mxu0 0.0
  %123 = vmatpush1.msra.mxu0 0.0
  %124 = vmatprep.subr.mxu0 0.0
  %125 = vmatpush1.msra.mxu0 0.0
  %126 = vmatprep.subr.mxu0 0.0
  %127 = vmatpush1.msra.mxu0 0.0
  %128 = vmatprep.subr.mxu0 0.0
  %129 = vmatpush1.msra.mxu0 0.0
  %130 = vmatprep.subr.mxu0 0.0
  %131 = vmatpush1.msra.mxu0 0.0
  %132 = vmatprep.subr.mxu0 0.0
  %133 = vmatpush1.msra.mxu0 0.0
  %134 = vmatprep.subr.mxu0 0.0
  %135 = vmatpush1.msra.mxu0 %v27
  %136 = vmatprep.subr.mxu0 0.0
  %137 = vmatpush2.msra.mxu0 0.0
  %138 = vmatprep.subr.mxu0 0.0
  %139 = vmatpush2.msra.mxu0 0.0
  %140 = vmatprep.subr.mxu0 0.0
  %141 = vmatpush2.msra.mxu0 0.0
  %142 = vmatprep.subr.mxu0 0.0
  %143 = vmatpush2.msra.mxu0 0.0
  %144 = vmatprep.subr.mxu0 0.0
  %145 = vmatpush2.msra.mxu0 0.0
  %146 = vmatprep.subr.mxu0 0.0
  %147 = vmatpush2.msra.mxu0 0.0
  %148 = vmatprep.subr.mxu0 0.0
  %149 = vmatpush2.msra.mxu0 0.0
  %150 = vmatprep.subr.mxu0 0.0
  %151 = vmatpush2.msra.mxu0 0.0
  %152 = vmatprep.subr.mxu0 0.0
  %153 = vmatpush2.msra.mxu0 0.0
  %154 = vmatprep.subr.mxu0 0.0
  %155 = vmatpush2.msra.mxu0 0.0
  %156 = vmatprep.subr.mxu0 0.0
  %157 = vmatpush2.msra.mxu0 0.0
  %158 = vmatprep.subr.mxu0 0.0
  %159 = vmatpush2.msra.mxu0 0.0
  %160 = vmatprep.subr.mxu0 0.0
  %161 = vmatpush2.msra.mxu0 0.0
  %162 = vmatprep.subr.mxu0 0.0
  %163 = vmatpush2.msra.mxu0 0.0
  %164 = vmatprep.subr.mxu0 0.0
  %165 = vmatpush2.msra.mxu0 0.0
  %166 = vmatprep.subr.mxu0 0.0
  %167 = vmatpush2.msra.mxu0 0.0
  %168 = vmatprep.mubr.f32.mxu0 0.0
  %169 = vmatmul.mubr.f32.gmra.mxu0 %v81
  %v170 = vpop.f32.mrf.mxu0
  %v171 = vadd.f32 %v78, %v170
  %v172 = vpop.f32.mrf.mxu0
  %173 = vmatprep.mubr.f32.mxu0 0.0
  %174 = vmatmul.mubr.f32.gmra.mxu0 %v84
  %v175 = vpop.f32.mrf.mxu0
  %v176 = vadd.f32 %v78, %v175
  %v177 = vpop.f32.mrf.mxu0
  %178 = vmatprep.mubr.f32.mxu0 0.0
  %179 = vmatmul.mubr.f32.gmra.mxu0 %v87
  %v180 = vpop.f32.mrf.mxu0
  %v181 = vadd.f32 %v78, %v180
  %v182 = vpop.f32.mrf.mxu0
  %183 = vmatprep.mubr.f32.mxu0 0.0
  %184 = vmatmul.mubr.f32.gmra.mxu0 %v90
  %v185 = vpop.f32.mrf.mxu0
  %v186 = vadd.f32 %v78, %v185
  %v187 = vpop.f32.mrf.mxu0
  %188 = vmatprep.mubr.f32.mxu0 0.0
  %189 = vmatmul.mubr.f32.gmra.mxu0 %v93
  %v190 = vpop.f32.mrf.mxu0
  %v191 = vadd.f32 %v78, %v190
  %v192 = vpop.f32.mrf.mxu0
  %193 = vmatprep.mubr.f32.mxu0 0.0
  %194 = vmatmul.mubr.f32.gmra.mxu0 %v96
  %v195 = vpop.f32.mrf.mxu0
  %v196 = vadd.f32 %v78, %v195
  %v197 = vpop.f32.mrf.mxu0
  %198 = vmatprep.mubr.f32.mxu0 0.0
  %199 = vmatmul.mubr.f32.gmra.mxu0 %v99
  %v200 = vpop.f32.mrf.mxu0
  %v201 = vadd.f32 %v78, %v200
  %v202 = vpop.f32.mrf.mxu0
  %203 = vmatprep.mubr.f32.mxu0 0.0
  %204 = vmatmul.mubr.f32.gmra.mxu0 %v102
  %v205 = vpop.f32.mrf.mxu0
  %v206 = vadd.f32 %v78, %v205
  %v207 = vpop.f32.mrf.mxu0
  %208 = vdwg.mxu0
  %v209 = vmax.f32 %v171, 0.0
  %v210 = vmax.f32 %v176, 0.0
  %v211 = vmax.f32 %v181, 0.0
  %v212 = vmax.f32 %v186, 0.0
  %v213 = vmax.f32 %v191, 0.0
  %v214 = vmax.f32 %v196, 0.0
  %v215 = vmax.f32 %v201, 0.0
  %v216 = vmax.f32 %v206, 0.0
  %v217 = vsub.f32 0.0, %v209
  %v218 = vsub.f32 0.0, %v210
  %v219 = vsub.f32 0.0, %v211
  %v220 = vsub.f32 0.0, %v212
  %v221 = vsub.f32 0.0, %v213
  %v222 = vsub.f32 0.0, %v214
  %v223 = vsub.f32 0.0, %v215
  %v224 = vsub.f32 0.0, %v216
  %v225 = vmul.f32 %v217, 1.442695
  %v226 = vpow.pop %v225
  %v227 = vmul.f32 %v218, 1.442695
  %v228 = vpow.pop %v227
  %v229 = vmul.f32 %v219, 1.442695
  %v230 = vpow.pop %v229
  %v231 = vmul.f32 %v220, 1.442695
  %v232 = vpow.pop %v231
  %v233 = vmul.f32 %v221, 1.442695
  %v234 = vpow.pop %v233
  %v235 = vmul.f32 %v222, 1.442695
  %v236 = vpow.pop %v235
  %v237 = vmul.f32 %v223, 1.442695
  %v238 = vpow.pop %v237
  %v239 = vmul.f32 %v224, 1.442695
  %v240 = vpow.pop %v239
  %v241 = vlaneseq
  %v242 = vshrl.u32 %v241, 7
  %v243 = vsub.s32 0, %v242
  %v244 = vrot.slane %v37, %v243
  %v245 = vmul.f32 %v59, %v244
  %v246 = vmul.f32 %v60, %v244
  %v247 = vmul.f32 %v61, %v244
  %v248 = vmul.f32 %v62, %v244
  %v249 = vmul.f32 %v63, %v244
  %v250 = vmul.f32 %v64, %v244
  %v251 = vmul.f32 %v65, %v244
  %v252 = vmul.f32 %v66, %v244
  %v253 = vlaneseq
  %v254 = vshrl.u32 %v253, 7
  %v255 = vsub.s32 0, %v254
  %v256 = vrot.slane %v38, %v255
  %v257 = vadd.f32 %v245, %v256
  %v258 = vadd.f32 %v246, %v256
  %v259 = vadd.f32 %v247, %v256
  %v260 = vadd.f32 %v248, %v256
  %v261 = vadd.f32 %v249, %v256
  %v262 = vadd.f32 %v250, %v256
  %v263 = vadd.f32 %v251, %v256
  %v264 = vadd.f32 %v252, %v256
  %v265 = vmax.f32 %v257, 0.0
  %v266 = vmax.f32 %v258, 0.0
  %v267 = vmax.f32 %v259, 0.0
  %v268 = vmax.f32 %v260, 0.0
  %v269 = vmax.f32 %v261, 0.0
  %v270 = vmax.f32 %v262, 0.0
  %v271 = vmax.f32 %v263, 0.0
  %v272 = vmax.f32 %v264, 0.0
  %v273 = vsub.f32 0.0, %v265
  %v274 = vsub.f32 0.0, %v266
  %v275 = vsub.f32 0.0, %v267
  %v276 = vsub.f32 0.0, %v268
  %v277 = vsub.f32 0.0, %v269
  %v278 = vsub.f32 0.0, %v270
  %v279 = vsub.f32 0.0, %v271
  %v280 = vsub.f32 0.0, %v272
  %v281 = vmul.f32 %v273, 1.442695
  %v282 = vpow.pop %v281
  %v283 = vmul.f32 %v274, 1.442695
  %v284 = vpow.pop %v283
  %v285 = vmul.f32 %v275, 1.442695
  %v286 = vpow.pop %v285
  %v287 = vmul.f32 %v276, 1.442695
  %v288 = vpow.pop %v287
  %v289 = vmul.f32 %v277, 1.442695
  %v290 = vpow.pop %v289
  %v291 = vmul.f32 %v278, 1.442695
  %v292 = vpow.pop %v291
  %v293 = vmul.f32 %v279, 1.442695
  %v294 = vpow.pop %v293
  %v295 = vmul.f32 %v280, 1.442695
  %v296 = vpow.pop %v295
  %v298 = vsel %vm79, %v51, 0
  %v301 = vsel %vm79, %v52, 0
  %v304 = vsel %vm79, %v53, 0
  %v307 = vsel %vm79, %v54, 0
  %v310 = vsel %vm79, %v55, 0
  %v313 = vsel %vm79, %v56, 0
  %v316 = vsel %vm79, %v57, 0
  %v319 = vsel %vm79, %v58, 0
  %321 = vmatprep.subr.mxu0 0.0
  %322 = vmatpush1.msra.mxu0 0.0
  %323 = vmatprep.subr.mxu0 0.0
  %324 = vmatpush1.msra.mxu0 0.0
  %325 = vmatprep.subr.mxu0 0.0
  %326 = vmatpush1.msra.mxu0 0.0
  %327 = vmatprep.subr.mxu0 0.0
  %328 = vmatpush1.msra.mxu0 0.0
  %329 = vmatprep.subr.mxu0 0.0
  %330 = vmatpush1.msra.mxu0 0.0
  %331 = vmatprep.subr.mxu0 0.0
  %332 = vmatpush1.msra.mxu0 0.0
  %333 = vmatprep.subr.mxu0 0.0
  %334 = vmatpush1.msra.mxu0 0.0
  %335 = vmatprep.subr.mxu0 0.0
  %336 = vmatpush1.msra.mxu0 0.0
  %337 = vmatprep.subr.mxu0 0.0
  %338 = vmatpush1.msra.mxu0 0.0
  %339 = vmatprep.subr.mxu0 0.0
  %340 = vmatpush1.msra.mxu0 0.0
  %341 = vmatprep.subr.mxu0 0.0
  %342 = vmatpush1.msra.mxu0 0.0
  %343 = vmatprep.subr.mxu0 0.0
  %344 = vmatpush1.msra.mxu0 0.0
  %345 = vmatprep.subr.mxu0 0.0
  %346 = vmatpush1.msra.mxu0 0.0
  %347 = vmatprep.subr.mxu0 0.0
  %348 = vmatpush1.msra.mxu0 0.0
  %349 = vmatprep.subr.mxu0 0.0
  %350 = vmatpush1.msra.mxu0 0.0
  %351 = vmatprep.subr.mxu0 0.0
  %352 = vmatpush1.msra.mxu0 %v36
  %353 = vmatprep.subr.mxu0 0.0
  %354 = vmatpush2.msra.mxu0 0.0
  %355 = vmatprep.subr.mxu0 0.0
  %356 = vmatpush2.msra.mxu0 0.0
  %357 = vmatprep.subr.mxu0 0.0
  %358 = vmatpush2.msra.mxu0 0.0
  %359 = vmatprep.subr.mxu0 0.0
  %360 = vmatpush2.msra.mxu0 0.0
  %361 = vmatprep.subr.mxu0 0.0
  %362 = vmatpush2.msra.mxu0 0.0
  %363 = vmatprep.subr.mxu0 0.0
  %364 = vmatpush2.msra.mxu0 0.0
  %365 = vmatprep.subr.mxu0 0.0
  %366 = vmatpush2.msra.mxu0 0.0
  %367 = vmatprep.subr.mxu0 0.0
  %368 = vmatpush2.msra.mxu0 0.0
  %369 = vmatprep.subr.mxu0 0.0
  %370 = vmatpush2.msra.mxu0 0.0
  %371 = vmatprep.subr.mxu0 0.0
  %372 = vmatpush2.msra.mxu0 0.0
  %373 = vmatprep.subr.mxu0 0.0
  %374 = vmatpush2.msra.mxu0 0.0
  %375 = vmatprep.subr.mxu0 0.0
  %376 = vmatpush2.msra.mxu0 0.0
  %377 = vmatprep.subr.mxu0 0.0
  %378 = vmatpush2.msra.mxu0 0.0
  %379 = vmatprep.subr.mxu0 0.0
  %380 = vmatpush2.msra.mxu0 0.0
  %381 = vmatprep.subr.mxu0 0.0
  %382 = vmatpush2.msra.mxu0 0.0
  %383 = vmatprep.subr.mxu0 0.0
  %384 = vmatpush2.msra.mxu0 0.0
  %385 = vmatprep.mubr.f32.mxu0 0.0
  %386 = vmatmul.mubr.f32.gmra.mxu0 %v298
  %v387 = vpop.f32.mrf.mxu0
  %v388 = vadd.f32 0.0, %v387
  %v389 = vpop.f32.mrf.mxu0
  %390 = vmatprep.mubr.f32.mxu0 0.0
  %391 = vmatmul.mubr.f32.gmra.mxu0 %v301
  %v392 = vpop.f32.mrf.mxu0
  %v393 = vadd.f32 0.0, %v392
  %v394 = vpop.f32.mrf.mxu0
  %395 = vmatprep.mubr.f32.mxu0 0.0
  %396 = vmatmul.mubr.f32.gmra.mxu0 %v304
  %v397 = vpop.f32.mrf.mxu0
  %v398 = vadd.f32 0.0, %v397
  %v399 = vpop.f32.mrf.mxu0
  %400 = vmatprep.mubr.f32.mxu0 0.0
  %401 = vmatmul.mubr.f32.gmra.mxu0 %v307
  %v402 = vpop.f32.mrf.mxu0
  %v403 = vadd.f32 0.0, %v402
  %v404 = vpop.f32.mrf.mxu0
  %405 = vmatprep.mubr.f32.mxu0 0.0
  %406 = vmatmul.mubr.f32.gmra.mxu0 %v310
  %v407 = vpop.f32.mrf.mxu0
  %v408 = vadd.f32 0.0, %v407
  %v409 = vpop.f32.mrf.mxu0
  %410 = vmatprep.mubr.f32.mxu0 0.0
  %411 = vmatmul.mubr.f32.gmra.mxu0 %v313
  %v412 = vpop.f32.mrf.mxu0
  %v413 = vadd.f32 0.0, %v412
  %v414 = vpop.f32.mrf.mxu0
  %415 = vmatprep.mubr.f32.mxu0 0.0
  %416 = vmatmul.mubr.f32.gmra.mxu0 %v316
  %v417 = vpop.f32.mrf.mxu0
  %v418 = vadd.f32 0.0, %v417
  %v419 = vpop.f32.mrf.mxu0
  %420 = vmatprep.mubr.f32.mxu0 0.0
  %421 = vmatmul.mubr.f32.gmra.mxu0 %v319
  %v422 = vpop.f32.mrf.mxu0
  %v423 = vadd.f32 0.0, %v422
  %v424 = vpop.f32.mrf.mxu0
  %425 = vdwg.mxu0
  %v427 = vsel %vm79, %v282, 0
  %v430 = vsel %vm79, %v284, 0
  %v433 = vsel %vm79, %v286, 0
  %v436 = vsel %vm79, %v288, 0
  %v439 = vsel %vm79, %v290, 0
  %v442 = vsel %vm79, %v292, 0
  %v445 = vsel %vm79, %v294, 0
  %v448 = vsel %vm79, %v296, 0
  %450 = vmatprep.subr.mxu0 0.0
  %451 = vmatpush1.msra.mxu0 0.0
  %452 = vmatprep.subr.mxu0 0.0
  %453 = vmatpush1.msra.mxu0 0.0
  %454 = vmatprep.subr.mxu0 0.0
  %455 = vmatpush1.msra.mxu0 0.0
  %456 = vmatprep.subr.mxu0 0.0
  %457 = vmatpush1.msra.mxu0 0.0
  %458 = vmatprep.subr.mxu0 0.0
  %459 = vmatpush1.msra.mxu0 0.0
  %460 = vmatprep.subr.mxu0 0.0
  %461 = vmatpush1.msra.mxu0 0.0
  %462 = vmatprep.subr.mxu0 0.0
  %463 = vmatpush1.msra.mxu0 0.0
  %464 = vmatprep.subr.mxu0 0.0
  %465 = vmatpush1.msra.mxu0 0.0
  %466 = vmatprep.subr.mxu0 0.0
  %467 = vmatpush1.msra.mxu0 0.0
  %468 = vmatprep.subr.mxu0 0.0
  %469 = vmatpush1.msra.mxu0 0.0
  %470 = vmatprep.subr.mxu0 0.0
  %471 = vmatpush1.msra.mxu0 0.0
  %472 = vmatprep.subr.mxu0 0.0
  %473 = vmatpush1.msra.mxu0 0.0
  %474 = vmatprep.subr.mxu0 0.0
  %475 = vmatpush1.msra.mxu0 0.0
  %476 = vmatprep.subr.mxu0 0.0
  %477 = vmatpush1.msra.mxu0 0.0
  %478 = vmatprep.subr.mxu0 0.0
  %479 = vmatpush1.msra.mxu0 0.0
  %480 = vmatprep.subr.mxu0 0.0
  %481 = vmatpush1.msra.mxu0 %v35
  %482 = vmatprep.subr.mxu0 0.0
  %483 = vmatpush2.msra.mxu0 0.0
  %484 = vmatprep.subr.mxu0 0.0
  %485 = vmatpush2.msra.mxu0 0.0
  %486 = vmatprep.subr.mxu0 0.0
  %487 = vmatpush2.msra.mxu0 0.0
  %488 = vmatprep.subr.mxu0 0.0
  %489 = vmatpush2.msra.mxu0 0.0
  %490 = vmatprep.subr.mxu0 0.0
  %491 = vmatpush2.msra.mxu0 0.0
  %492 = vmatprep.subr.mxu0 0.0
  %493 = vmatpush2.msra.mxu0 0.0
  %494 = vmatprep.subr.mxu0 0.0
  %495 = vmatpush2.msra.mxu0 0.0
  %496 = vmatprep.subr.mxu0 0.0
  %497 = vmatpush2.msra.mxu0 0.0
  %498 = vmatprep.subr.mxu0 0.0
  %499 = vmatpush2.msra.mxu0 0.0
  %500 = vmatprep.subr.mxu0 0.0
  %501 = vmatpush2.msra.mxu0 0.0
  %502 = vmatprep.subr.mxu0 0.0
  %503 = vmatpush2.msra.mxu0 0.0
  %504 = vmatprep.subr.mxu0 0.0
  %505 = vmatpush2.msra.mxu0 0.0
  %506 = vmatprep.subr.mxu0 0.0
  %507 = vmatpush2.msra.mxu0 0.0
  %508 = vmatprep.subr.mxu0 0.0
  %509 = vmatpush2.msra.mxu0 0.0
  %510 = vmatprep.subr.mxu0 0.0
  %511 = vmatpush2.msra.mxu0 0.0
  %512 = vmatprep.subr.mxu0 0.0
  %513 = vmatpush2.msra.mxu0 0.0
  %514 = vmatprep.mubr.f32.mxu0 0.0
  %515 = vmatmul.mubr.f32.gmra.mxu0 %v427
  %v516 = vpop.f32.mrf.mxu0
  %v517 = vadd.f32 %v388, %v516
  %v518 = vpop.f32.mrf.mxu0
  %519 = vmatprep.mubr.f32.mxu0 0.0
  %520 = vmatmul.mubr.f32.gmra.mxu0 %v430
  %v521 = vpop.f32.mrf.mxu0
  %v522 = vadd.f32 %v393, %v521
  %v523 = vpop.f32.mrf.mxu0
  %524 = vmatprep.mubr.f32.mxu0 0.0
  %525 = vmatmul.mubr.f32.gmra.mxu0 %v433
  %v526 = vpop.f32.mrf.mxu0
  %v527 = vadd.f32 %v398, %v526
  %v528 = vpop.f32.mrf.mxu0
  %529 = vmatprep.mubr.f32.mxu0 0.0
  %530 = vmatmul.mubr.f32.gmra.mxu0 %v436
  %v531 = vpop.f32.mrf.mxu0
  %v532 = vadd.f32 %v403, %v531
  %v533 = vpop.f32.mrf.mxu0
  %534 = vmatprep.mubr.f32.mxu0 0.0
  %535 = vmatmul.mubr.f32.gmra.mxu0 %v439
  %v536 = vpop.f32.mrf.mxu0
  %v537 = vadd.f32 %v408, %v536
  %v538 = vpop.f32.mrf.mxu0
  %539 = vmatprep.mubr.f32.mxu0 0.0
  %540 = vmatmul.mubr.f32.gmra.mxu0 %v442
  %v541 = vpop.f32.mrf.mxu0
  %v542 = vadd.f32 %v413, %v541
  %v543 = vpop.f32.mrf.mxu0
  %544 = vmatprep.mubr.f32.mxu0 0.0
  %545 = vmatmul.mubr.f32.gmra.mxu0 %v445
  %v546 = vpop.f32.mrf.mxu0
  %v547 = vadd.f32 %v418, %v546
  %v548 = vpop.f32.mrf.mxu0
  %549 = vmatprep.mubr.f32.mxu0 0.0
  %550 = vmatmul.mubr.f32.gmra.mxu0 %v448
  %v551 = vpop.f32.mrf.mxu0
  %v552 = vadd.f32 %v423, %v551
  %v553 = vpop.f32.mrf.mxu0
  %554 = vdwg.mxu0
  %v555 = vlaneseq
  %v556 = vshrl.u32 %v555, 7
  %v557 = vsub.s32 0, %v556
  %v558 = vrot.slane %v41, %v557
  %v559 = vadd.f32 %v517, %v558
  %v560 = vadd.f32 %v522, %v558
  %v561 = vadd.f32 %v527, %v558
  %v562 = vadd.f32 %v532, %v558
  %v563 = vadd.f32 %v537, %v558
  %v564 = vadd.f32 %v542, %v558
  %v565 = vadd.f32 %v547, %v558
  %v566 = vadd.f32 %v552, %v558
  %v568 = vsel %vm79, %v67, 0
  %v571 = vsel %vm79, %v68, 0
  %v574 = vsel %vm79, %v69, 0
  %v577 = vsel %vm79, %v70, 0
  %v580 = vsel %vm79, %v71, 0
  %v583 = vsel %vm79, %v72, 0
  %v586 = vsel %vm79, %v73, 0
  %v589 = vsel %vm79, %v74, 0
  %591 = vmatprep.subr.mxu0 0.0
  %592 = vmatpush1.msra.mxu0 0.0
  %593 = vmatprep.subr.mxu0 0.0
  %594 = vmatpush1.msra.mxu0 0.0
  %595 = vmatprep.subr.mxu0 0.0
  %596 = vmatpush1.msra.mxu0 0.0
  %597 = vmatprep.subr.mxu0 0.0
  %598 = vmatpush1.msra.mxu0 0.0
  %599 = vmatprep.subr.mxu0 0.0
  %600 = vmatpush1.msra.mxu0 0.0
  %601 = vmatprep.subr.mxu0 0.0
  %602 = vmatpush1.msra.mxu0 0.0
  %603 = vmatprep.subr.mxu0 0.0
  %604 = vmatpush1.msra.mxu0 0.0
  %605 = vmatprep.subr.mxu0 0.0
  %606 = vmatpush1.msra.mxu0 0.0
  %607 = vmatprep.subr.mxu0 0.0
  %608 = vmatpush1.msra.mxu0 0.0
  %609 = vmatprep.subr.mxu0 0.0
  %610 = vmatpush1.msra.mxu0 0.0
  %611 = vmatprep.subr.mxu0 0.0
  %612 = vmatpush1.msra.mxu0 0.0
  %613 = vmatprep.subr.mxu0 0.0
  %614 = vmatpush1.msra.mxu0 0.0
  %615 = vmatprep.subr.mxu0 0.0
  %616 = vmatpush1.msra.mxu0 0.0
  %617 = vmatprep.subr.mxu0 0.0
  %618 = vmatpush1.msra.mxu0 0.0
  %619 = vmatprep.subr.mxu0 0.0
  %620 = vmatpush1.msra.mxu0 0.0
  %621 = vmatprep.subr.mxu0 0.0
  %622 = vmatpush1.msra.mxu0 %v20
  %623 = vmatprep.subr.mxu0 0.0
  %624 = vmatpush2.msra.mxu0 0.0
  %625 = vmatprep.subr.mxu0 0.0
  %626 = vmatpush2.msra.mxu0 0.0
  %627 = vmatprep.subr.mxu0 0.0
  %628 = vmatpush2.msra.mxu0 0.0
  %629 = vmatprep.subr.mxu0 0.0
  %630 = vmatpush2.msra.mxu0 0.0
  %631 = vmatprep.subr.mxu0 0.0
  %632 = vmatpush2.msra.mxu0 0.0
  %633 = vmatprep.subr.mxu0 0.0
  %634 = vmatpush2.msra.mxu0 0.0
  %635 = vmatprep.subr.mxu0 0.0
  %636 = vmatpush2.msra.mxu0 0.0
  %637 = vmatprep.subr.mxu0 0.0
  %638 = vmatpush2.msra.mxu0 0.0
  %639 = vmatprep.subr.mxu0 0.0
  %640 = vmatpush2.msra.mxu0 0.0
  %641 = vmatprep.subr.mxu0 0.0
  %642 = vmatpush2.msra.mxu0 0.0
  %643 = vmatprep.subr.mxu0 0.0
  %644 = vmatpush2.msra.mxu0 0.0
  %645 = vmatprep.subr.mxu0 0.0
  %646 = vmatpush2.msra.mxu0 0.0
  %647 = vmatprep.subr.mxu0 0.0
  %648 = vmatpush2.msra.mxu0 0.0
  %649 = vmatprep.subr.mxu0 0.0
  %650 = vmatpush2.msra.mxu0 0.0
  %651 = vmatprep.subr.mxu0 0.0
  %652 = vmatpush2.msra.mxu0 0.0
  %653 = vmatprep.subr.mxu0 0.0
  %654 = vmatpush2.msra.mxu0 0.0
  %655 = vmatprep.mubr.f32.mxu0 0.0
  %656 = vmatmul.mubr.f32.gmra.mxu0 %v568
  %v657 = vpop.f32.mrf.mxu0
  %v658 = vadd.f32 0.0, %v657
  %v659 = vpop.f32.mrf.mxu0
  %660 = vmatprep.mubr.f32.mxu0 0.0
  %661 = vmatmul.mubr.f32.gmra.mxu0 %v571
  %v662 = vpop.f32.mrf.mxu0
  %v663 = vadd.f32 0.0, %v662
  %v664 = vpop.f32.mrf.mxu0
  %665 = vmatprep.mubr.f32.mxu0 0.0
  %666 = vmatmul.mubr.f32.gmra.mxu0 %v574
  %v667 = vpop.f32.mrf.mxu0
  %v668 = vadd.f32 0.0, %v667
  %v669 = vpop.f32.mrf.mxu0
  %670 = vmatprep.mubr.f32.mxu0 0.0
  %671 = vmatmul.mubr.f32.gmra.mxu0 %v577
  %v672 = vpop.f32.mrf.mxu0
  %v673 = vadd.f32 0.0, %v672
  %v674 = vpop.f32.mrf.mxu0
  %675 = vmatprep.mubr.f32.mxu0 0.0
  %676 = vmatmul.mubr.f32.gmra.mxu0 %v580
  %v677 = vpop.f32.mrf.mxu0
  %v678 = vadd.f32 0.0, %v677
  %v679 = vpop.f32.mrf.mxu0
  %680 = vmatprep.mubr.f32.mxu0 0.0
  %681 = vmatmul.mubr.f32.gmra.mxu0 %v583
  %v682 = vpop.f32.mrf.mxu0
  %v683 = vadd.f32 0.0, %v682
  %v684 = vpop.f32.mrf.mxu0
  %685 = vmatprep.mubr.f32.mxu0 0.0
  %686 = vmatmul.mubr.f32.gmra.mxu0 %v586
  %v687 = vpop.f32.mrf.mxu0
  %v688 = vadd.f32 0.0, %v687
  %v689 = vpop.f32.mrf.mxu0
  %690 = vmatprep.mubr.f32.mxu0 0.0
  %691 = vmatmul.mubr.f32.gmra.mxu0 %v589
  %v692 = vpop.f32.mrf.mxu0
  %v693 = vadd.f32 0.0, %v692
  %v694 = vpop.f32.mrf.mxu0
  %695 = vdwg.mxu0
  %696 = vmatprep.subr.mxu0 0.0
  %697 = vmatpush1.msra.mxu0 0.0
  %698 = vmatprep.subr.mxu0 0.0
  %699 = vmatpush1.msra.mxu0 0.0
  %700 = vmatprep.subr.mxu0 0.0
  %701 = vmatpush1.msra.mxu0 0.0
  %702 = vmatprep.subr.mxu0 0.0
  %703 = vmatpush1.msra.mxu0 0.0
  %704 = vmatprep.subr.mxu0 0.0
  %705 = vmatpush1.msra.mxu0 0.0
  %706 = vmatprep.subr.mxu0 0.0
  %707 = vmatpush1.msra.mxu0 0.0
  %708 = vmatprep.subr.mxu0 0.0
  %709 = vmatpush1.msra.mxu0 0.0
  %710 = vmatprep.subr.mxu0 0.0
  %711 = vmatpush1.msra.mxu0 0.0
  %712 = vmatprep.subr.mxu0 0.0
  %713 = vmatpush1.msra.mxu0 0.0
  %714 = vmatprep.subr.mxu0 0.0
  %715 = vmatpush1.msra.mxu0 0.0
  %716 = vmatprep.subr.mxu0 0.0
  %717 = vmatpush1.msra.mxu0 0.0
  %718 = vmatprep.subr.mxu0 0.0
  %719 = vmatpush1.msra.mxu0 0.0
  %720 = vmatprep.subr.mxu0 0.0
  %721 = vmatpush1.msra.mxu0 0.0
  %722 = vmatprep.subr.mxu0 0.0
  %723 = vmatpush1.msra.mxu0 0.0
  %724 = vmatprep.subr.mxu0 0.0
  %725 = vmatpush1.msra.mxu0 0.0
  %726 = vmatprep.subr.mxu0 0.0
  %727 = vmatpush1.msra.mxu0 %v21
  %728 = vmatprep.subr.mxu0 0.0
  %729 = vmatpush2.msra.mxu0 0.0
  %730 = vmatprep.subr.mxu0 0.0
  %731 = vmatpush2.msra.mxu0 0.0
  %732 = vmatprep.subr.mxu0 0.0
  %733 = vmatpush2.msra.mxu0 0.0
  %734 = vmatprep.subr.mxu0 0.0
  %735 = vmatpush2.msra.mxu0 0.0
  %736 = vmatprep.subr.mxu0 0.0
  %737 = vmatpush2.msra.mxu0 0.0
  %738 = vmatprep.subr.mxu0 0.0
  %739 = vmatpush2.msra.mxu0 0.0
  %740 = vmatprep.subr.mxu0 0.0
  %741 = vmatpush2.msra.mxu0 0.0
  %742 = vmatprep.subr.mxu0 0.0
  %743 = vmatpush2.msra.mxu0 0.0
  %744 = vmatprep.subr.mxu0 0.0
  %745 = vmatpush2.msra.mxu0 0.0
  %746 = vmatprep.subr.mxu0 0.0
  %747 = vmatpush2.msra.mxu0 0.0
  %748 = vmatprep.subr.mxu0 0.0
  %749 = vmatpush2.msra.mxu0 0.0
  %750 = vmatprep.subr.mxu0 0.0
  %751 = vmatpush2.msra.mxu0 0.0
  %752 = vmatprep.subr.mxu0 0.0
  %753 = vmatpush2.msra.mxu0 0.0
  %754 = vmatprep.subr.mxu0 0.0
  %755 = vmatpush2.msra.mxu0 0.0
  %756 = vmatprep.subr.mxu0 0.0
  %757 = vmatpush2.msra.mxu0 0.0
  %758 = vmatprep.subr.mxu0 0.0
  %759 = vmatpush2.msra.mxu0 0.0
  %760 = vmatprep.mubr.f32.mxu0 0.0
  %761 = vmatmul.mubr.f32.gmra.mxu0 %v298
  %v762 = vpop.f32.mrf.mxu0
  %v763 = vadd.f32 %v658, %v762
  %v764 = vpop.f32.mrf.mxu0
  %765 = vmatprep.mubr.f32.mxu0 0.0
  %766 = vmatmul.mubr.f32.gmra.mxu0 %v301
  %v767 = vpop.f32.mrf.mxu0
  %v768 = vadd.f32 %v663, %v767
  %v769 = vpop.f32.mrf.mxu0
  %770 = vmatprep.mubr.f32.mxu0 0.0
  %771 = vmatmul.mubr.f32.gmra.mxu0 %v304
  %v772 = vpop.f32.mrf.mxu0
  %v773 = vadd.f32 %v668, %v772
  %v774 = vpop.f32.mrf.mxu0
  %775 = vmatprep.mubr.f32.mxu0 0.0
  %776 = vmatmul.mubr.f32.gmra.mxu0 %v307
  %v777 = vpop.f32.mrf.mxu0
  %v778 = vadd.f32 %v673, %v777
  %v779 = vpop.f32.mrf.mxu0
  %780 = vmatprep.mubr.f32.mxu0 0.0
  %781 = vmatmul.mubr.f32.gmra.mxu0 %v310
  %v782 = vpop.f32.mrf.mxu0
  %v783 = vadd.f32 %v678, %v782
  %v784 = vpop.f32.mrf.mxu0
  %785 = vmatprep.mubr.f32.mxu0 0.0
  %786 = vmatmul.mubr.f32.gmra.mxu0 %v313
  %v787 = vpop.f32.mrf.mxu0
  %v788 = vadd.f32 %v683, %v787
  %v789 = vpop.f32.mrf.mxu0
  %790 = vmatprep.mubr.f32.mxu0 0.0
  %791 = vmatmul.mubr.f32.gmra.mxu0 %v316
  %v792 = vpop.f32.mrf.mxu0
  %v793 = vadd.f32 %v688, %v792
  %v794 = vpop.f32.mrf.mxu0
  %795 = vmatprep.mubr.f32.mxu0 0.0
  %796 = vmatmul.mubr.f32.gmra.mxu0 %v319
  %v797 = vpop.f32.mrf.mxu0
  %v798 = vadd.f32 %v693, %v797
  %v799 = vpop.f32.mrf.mxu0
  %800 = vdwg.mxu0
  %v801 = vlaneseq
  %v802 = vshrl.u32 %v801, 7
  %v803 = vsub.s32 0, %v802
  %v804 = vrot.slane %v26, %v803
  %v805 = vadd.f32 %v763, %v804
  %v806 = vadd.f32 %v768, %v804
  %v807 = vadd.f32 %v773, %v804
  %v808 = vadd.f32 %v778, %v804
  %v809 = vadd.f32 %v783, %v804
  %v810 = vadd.f32 %v788, %v804
  %v811 = vadd.f32 %v793, %v804
  %v812 = vadd.f32 %v798, %v804
  %v813 = vlaneseq
  %v814 = vshrl.u32 %v813, 7
  %v815 = vsub.s32 0, %v814
  %v816 = vrot.slane %v40, %v815
  %817 = vmatprep.subr.mxu0 0.0
  %818 = vmatpush1.msra.mxu0 0.0
  %819 = vmatprep.subr.mxu0 0.0
  %820 = vmatpush1.msra.mxu0 0.0
  %821 = vmatprep.subr.mxu0 0.0
  %822 = vmatpush1.msra.mxu0 0.0
  %823 = vmatprep.subr.mxu0 0.0
  %824 = vmatpush1.msra.mxu0 0.0
  %825 = vmatprep.subr.mxu0 0.0
  %826 = vmatpush1.msra.mxu0 0.0
  %827 = vmatprep.subr.mxu0 0.0
  %828 = vmatpush1.msra.mxu0 0.0
  %829 = vmatprep.subr.mxu0 0.0
  %830 = vmatpush1.msra.mxu0 0.0
  %831 = vmatprep.subr.mxu0 0.0
  %832 = vmatpush1.msra.mxu0 0.0
  %833 = vmatprep.subr.mxu0 0.0
  %834 = vmatpush1.msra.mxu0 0.0
  %835 = vmatprep.subr.mxu0 0.0
  %836 = vmatpush1.msra.mxu0 0.0
  %837 = vmatprep.subr.mxu0 0.0
  %838 = vmatpush1.msra.mxu0 0.0
  %839 = vmatprep.subr.mxu0 0.0
  %840 = vmatpush1.msra.mxu0 0.0
  %841 = vmatprep.subr.mxu0 0.0
  %842 = vmatpush1.msra.mxu0 0.0
  %843 = vmatprep.subr.mxu0 0.0
  %844 = vmatpush1.msra.mxu0 0.0
  %845 = vmatprep.subr.mxu0 0.0
  %846 = vmatpush1.msra.mxu0 0.0
  %847 = vmatprep.subr.mxu0 0.0
  %848 = vmatpush1.msra.mxu0 %v34
  %849 = vmatprep.subr.mxu0 0.0
  %850 = vmatpush2.msra.mxu0 0.0
  %851 = vmatprep.subr.mxu0 0.0
  %852 = vmatpush2.msra.mxu0 0.0
  %853 = vmatprep.subr.mxu0 0.0
  %854 = vmatpush2.msra.mxu0 0.0
  %855 = vmatprep.subr.mxu0 0.0
  %856 = vmatpush2.msra.mxu0 0.0
  %857 = vmatprep.subr.mxu0 0.0
  %858 = vmatpush2.msra.mxu0 0.0
  %859 = vmatprep.subr.mxu0 0.0
  %860 = vmatpush2.msra.mxu0 0.0
  %861 = vmatprep.subr.mxu0 0.0
  %862 = vmatpush2.msra.mxu0 0.0
  %863 = vmatprep.subr.mxu0 0.0
  %864 = vmatpush2.msra.mxu0 0.0
  %865 = vmatprep.subr.mxu0 0.0
  %866 = vmatpush2.msra.mxu0 0.0
  %867 = vmatprep.subr.mxu0 0.0
  %868 = vmatpush2.msra.mxu0 0.0
  %869 = vmatprep.subr.mxu0 0.0
  %870 = vmatpush2.msra.mxu0 0.0
  %871 = vmatprep.subr.mxu0 0.0
  %872 = vmatpush2.msra.mxu0 0.0
  %873 = vmatprep.subr.mxu0 0.0
  %874 = vmatpush2.msra.mxu0 0.0
  %875 = vmatprep.subr.mxu0 0.0
  %876 = vmatpush2.msra.mxu0 0.0
  %877 = vmatprep.subr.mxu0 0.0
  %878 = vmatpush2.msra.mxu0 0.0
  %879 = vmatprep.subr.mxu0 0.0
  %880 = vmatpush2.msra.mxu0 0.0
  %881 = vmatprep.mubr.f32.mxu0 0.0
  %882 = vmatmul.mubr.f32.gmra.mxu0 %v568
  %v883 = vpop.f32.mrf.mxu0
  %v884 = vadd.f32 %v816, %v883
  %v885 = vpop.f32.mrf.mxu0
  %886 = vmatprep.mubr.f32.mxu0 0.0
  %887 = vmatmul.mubr.f32.gmra.mxu0 %v571
  %v888 = vpop.f32.mrf.mxu0
  %v889 = vadd.f32 %v816, %v888
  %v890 = vpop.f32.mrf.mxu0
  %891 = vmatprep.mubr.f32.mxu0 0.0
  %892 = vmatmul.mubr.f32.gmra.mxu0 %v574
  %v893 = vpop.f32.mrf.mxu0
  %v894 = vadd.f32 %v816, %v893
  %v895 = vpop.f32.mrf.mxu0
  %896 = vmatprep.mubr.f32.mxu0 0.0
  %897 = vmatmul.mubr.f32.gmra.mxu0 %v577
  %v898 = vpop.f32.mrf.mxu0
  %v899 = vadd.f32 %v816, %v898
  %v900 = vpop.f32.mrf.mxu0
  %901 = vmatprep.mubr.f32.mxu0 0.0
  %902 = vmatmul.mubr.f32.gmra.mxu0 %v580
  %v903 = vpop.f32.mrf.mxu0
  %v904 = vadd.f32 %v816, %v903
  %v905 = vpop.f32.mrf.mxu0
  %906 = vmatprep.mubr.f32.mxu0 0.0
  %907 = vmatmul.mubr.f32.gmra.mxu0 %v583
  %v908 = vpop.f32.mrf.mxu0
  %v909 = vadd.f32 %v816, %v908
  %v910 = vpop.f32.mrf.mxu0
  %911 = vmatprep.mubr.f32.mxu0 0.0
  %912 = vmatmul.mubr.f32.gmra.mxu0 %v586
  %v913 = vpop.f32.mrf.mxu0
  %v914 = vadd.f32 %v816, %v913
  %v915 = vpop.f32.mrf.mxu0
  %916 = vmatprep.mubr.f32.mxu0 0.0
  %917 = vmatmul.mubr.f32.gmra.mxu0 %v589
  %v918 = vpop.f32.mrf.mxu0
  %v919 = vadd.f32 %v816, %v918
  %v920 = vpop.f32.mrf.mxu0
  %921 = vdwg.mxu0
  %vm922 = vcmask 261120
  %923 = vst.msk [vmem:[#allocation2] sm:$0xff] %vm922, %v226
  %924 = vst.msk [vmem:[#allocation2 + $0x8] sm:$0xff] %vm922, %v228
  %925 = vst.msk [vmem:[#allocation2 + $0x10] sm:$0xff] %vm922, %v230
  %926 = vst.msk [vmem:[#allocation2 + $0x18] sm:$0xff] %vm922, %v232
  %927 = vst.msk [vmem:[#allocation2 + $0x20] sm:$0xff] %vm922, %v234
  %928 = vst.msk [vmem:[#allocation2 + $0x28] sm:$0xff] %vm922, %v236
  %929 = vst.msk [vmem:[#allocation2 + $0x30] sm:$0xff] %vm922, %v238
  %930 = vst.msk [vmem:[#allocation2 + $0x38] sm:$0xff] %vm922, %v240
  %931 = vst [vmem:[#allocation3] sm:$0xff] %v805
  %932 = vst [vmem:[#allocation3 + $0x8] sm:$0xff] %v806
  %933 = vst [vmem:[#allocation3 + $0x10] sm:$0xff] %v807
  %934 = vst [vmem:[#allocation3 + $0x18] sm:$0xff] %v808
  %935 = vst [vmem:[#allocation3 + $0x20] sm:$0xff] %v809
  %936 = vst [vmem:[#allocation3 + $0x28] sm:$0xff] %v810
  %937 = vst [vmem:[#allocation3 + $0x30] sm:$0xff] %v811
  %938 = vst [vmem:[#allocation3 + $0x38] sm:$0xff] %v812
  %939 = vst.msk [vmem:[#allocation4] sm:$0xff] %vm79, %v559
  %940 = vst.msk [vmem:[#allocation4 + $0x8] sm:$0xff] %vm79, %v560
  %941 = vst.msk [vmem:[#allocation4 + $0x10] sm:$0xff] %vm79, %v561
  %942 = vst.msk [vmem:[#allocation4 + $0x18] sm:$0xff] %vm79, %v562
  %943 = vst.msk [vmem:[#allocation4 + $0x20] sm:$0xff] %vm79, %v563
  %944 = vst.msk [vmem:[#allocation4 + $0x28] sm:$0xff] %vm79, %v564
  %945 = vst.msk [vmem:[#allocation4 + $0x30] sm:$0xff] %vm79, %v565
  %946 = vst.msk [vmem:[#allocation4 + $0x38] sm:$0xff] %vm79, %v566
  %v947 = vsub.f32 1.0, %v559
  %v948 = vsub.f32 1.0, %v560
  %v949 = vsub.f32 1.0, %v561
  %v950 = vsub.f32 1.0, %v562
  %v951 = vsub.f32 1.0, %v563
  %v952 = vsub.f32 1.0, %v564
  %v953 = vsub.f32 1.0, %v565
  %v954 = vsub.f32 1.0, %v566
  %955 = vst.msk [vmem:[#allocation5] sm:$0xff] %vm79, %v947
  %956 = vst.msk [vmem:[#allocation5 + $0x8] sm:$0xff] %vm79, %v948
  %957 = vst.msk [vmem:[#allocation5 + $0x10] sm:$0xff] %vm79, %v949
  %958 = vst.msk [vmem:[#allocation5 + $0x18] sm:$0xff] %vm79, %v950
  %959 = vst.msk [vmem:[#allocation5 + $0x20] sm:$0xff] %vm79, %v951
  %960 = vst.msk [vmem:[#allocation5 + $0x28] sm:$0xff] %vm79, %v952
  %961 = vst.msk [vmem:[#allocation5 + $0x30] sm:$0xff] %vm79, %v953
  %962 = vst.msk [vmem:[#allocation5 + $0x38] sm:$0xff] %vm79, %v954
  %963 = vst.msk [vmem:[#allocation6] sm:$0xff] %vm79, %v884
  %964 = vst.msk [vmem:[#allocation6 + $0x8] sm:$0xff] %vm79, %v889
  %965 = vst.msk [vmem:[#allocation6 + $0x10] sm:$0xff] %vm79, %v894
  %966 = vst.msk [vmem:[#allocation6 + $0x18] sm:$0xff] %vm79, %v899
  %967 = vst.msk [vmem:[#allocation6 + $0x20] sm:$0xff] %vm79, %v904
  %968 = vst.msk [vmem:[#allocation6 + $0x28] sm:$0xff] %vm79, %v909
  %969 = vst.msk [vmem:[#allocation6 + $0x30] sm:$0xff] %vm79, %v914
  %970 = vst.msk [vmem:[#allocation6 + $0x38] sm:$0xff] %vm79, %v919
  %v971 = vsel %vm79, %v51, 0.0
  %972 = vadd.xlane.f32.xlu0 %v971
  %v973 = vpop.xlane.xlu0 %972
  %v974 = vrot.slane %v973, 4
  %v975 = vadd.f32 %v973, %v974
  %v976 = vrot.slane %v975, 2
  %v977 = vadd.f32 %v975, %v976
  %v978 = vrot.slane %v977, 1
  %v979 = vadd.f32 %v977, %v978
  %s980 = vtos %v979
  %s981 = sadd.f32 %s980, 1e-05
  %v982 = vstv %s981
  %v983 = vrcp.pop %v982
  %s984 = vtos %v983
  %v985 = vstv %s984
  %v986 = vmul.f32 %v51, %v985
  %987 = vst.msk [vmem:[#allocation7] sm:$0xff] %vm79, %v986
  %v988 = vsel %vm79, %v52, 0.0
  %989 = vadd.xlane.f32.xlu0 %v988
  %v990 = vpop.xlane.xlu0 %989
  %v991 = vrot.slane %v990, 4
  %v992 = vadd.f32 %v990, %v991
  %v993 = vrot.slane %v992, 2
  %v994 = vadd.f32 %v992, %v993
  %v995 = vrot.slane %v994, 1
  %v996 = vadd.f32 %v994, %v995
  %s997 = vtos %v996
  %s998 = sadd.f32 %s997, 1e-05
  %v999 = vstv %s998
  %v1000 = vrcp.pop %v999
  %s1001 = vtos %v1000
  %v1002 = vstv %s1001
  %v1003 = vmul.f32 %v52, %v1002
  %1004 = vst.msk [vmem:[#allocation7 + $0x8] sm:$0xff] %vm79, %v1003
  %v1005 = vsel %vm79, %v53, 0.0
  %1006 = vadd.xlane.f32.xlu0 %v1005
  %v1007 = vpop.xlane.xlu0 %1006
  %v1008 = vrot.slane %v1007, 4
  %v1009 = vadd.f32 %v1007, %v1008
  %v1010 = vrot.slane %v1009, 2
  %v1011 = vadd.f32 %v1009, %v1010
  %v1012 = vrot.slane %v1011, 1
  %v1013 = vadd.f32 %v1011, %v1012
  %s1014 = vtos %v1013
  %s1015 = sadd.f32 %s1014, 1e-05
  %v1016 = vstv %s1015
  %v1017 = vrcp.pop %v1016
  %s1018 = vtos %v1017
  %v1019 = vstv %s1018
  %v1020 = vmul.f32 %v53, %v1019
  %1021 = vst.msk [vmem:[#allocation7 + $0x10] sm:$0xff] %vm79, %v1020
  %v1022 = vsel %vm79, %v54, 0.0
  %1023 = vadd.xlane.f32.xlu0 %v1022
  %v1024 = vpop.xlane.xlu0 %1023
  %v1025 = vrot.slane %v1024, 4
  %v1026 = vadd.f32 %v1024, %v1025
  %v1027 = vrot.slane %v1026, 2
  %v1028 = vadd.f32 %v1026, %v1027
  %v1029 = vrot.slane %v1028, 1
  %v1030 = vadd.f32 %v1028, %v1029
  %s1031 = vtos %v1030
  %s1032 = sadd.f32 %s1031, 1e-05
  %v1033 = vstv %s1032
  %v1034 = vrcp.pop %v1033
  %s1035 = vtos %v1034
  %v1036 = vstv %s1035
  %v1037 = vmul.f32 %v54, %v1036
  %1038 = vst.msk [vmem:[#allocation7 + $0x18] sm:$0xff] %vm79, %v1037
  %v1039 = vsel %vm79, %v55, 0.0
  %1040 = vadd.xlane.f32.xlu0 %v1039
  %v1041 = vpop.xlane.xlu0 %1040
  %v1042 = vrot.slane %v1041, 4
  %v1043 = vadd.f32 %v1041, %v1042
  %v1044 = vrot.slane %v1043, 2
  %v1045 = vadd.f32 %v1043, %v1044
  %v1046 = vrot.slane %v1045, 1
  %v1047 = vadd.f32 %v1045, %v1046
  %s1048 = vtos %v1047
  %s1049 = sadd.f32 %s1048, 1e-05
  %v1050 = vstv %s1049
  %v1051 = vrcp.pop %v1050
  %s1052 = vtos %v1051
  %v1053 = vstv %s1052
  %v1054 = vmul.f32 %v55, %v1053
  %1055 = vst.msk [vmem:[#allocation7 + $0x20] sm:$0xff] %vm79, %v1054
  %v1056 = vsel %vm79, %v56, 0.0
  %1057 = vadd.xlane.f32.xlu0 %v1056
  %v1058 = vpop.xlane.xlu0 %1057
  %v1059 = vrot.slane %v1058, 4
  %v1060 = vadd.f32 %v1058, %v1059
  %v1061 = vrot.slane %v1060, 2
  %v1062 = vadd.f32 %v1060, %v1061
  %v1063 = vrot.slane %v1062, 1
  %v1064 = vadd.f32 %v1062, %v1063
  %s1065 = vtos %v1064
  %s1066 = sadd.f32 %s1065, 1e-05
  %v1067 = vstv %s1066
  %v1068 = vrcp.pop %v1067
  %s1069 = vtos %v1068
  %v1070 = vstv %s1069
  %v1071 = vmul.f32 %v56, %v1070
  %1072 = vst.msk [vmem:[#allocation7 + $0x28] sm:$0xff] %vm79, %v1071
  %v1073 = vsel %vm79, %v57, 0.0
  %1074 = vadd.xlane.f32.xlu0 %v1073
  %v1075 = vpop.xlane.xlu0 %1074
  %v1076 = vrot.slane %v1075, 4
  %v1077 = vadd.f32 %v1075, %v1076
  %v1078 = vrot.slane %v1077, 2
  %v1079 = vadd.f32 %v1077, %v1078
  %v1080 = vrot.slane %v1079, 1
  %v1081 = vadd.f32 %v1079, %v1080
  %s1082 = vtos %v1081
  %s1083 = sadd.f32 %s1082, 1e-05
  %v1084 = vstv %s1083
  %v1085 = vrcp.pop %v1084
  %s1086 = vtos %v1085
  %v1087 = vstv %s1086
  %v1088 = vmul.f32 %v57, %v1087
  %1089 = vst.msk [vmem:[#allocation7 + $0x30] sm:$0xff] %vm79, %v1088
  %v1090 = vsel %vm79, %v58, 0.0
  %1091 = vadd.xlane.f32.xlu0 %v1090
  %v1092 = vpop.xlane.xlu0 %1091
  %v1093 = vrot.slane %v1092, 4
  %v1094 = vadd.f32 %v1092, %v1093
  %v1095 = vrot.slane %v1094, 2
  %v1096 = vadd.f32 %v1094, %v1095
  %v1097 = vrot.slane %v1096, 1
  %v1098 = vadd.f32 %v1096, %v1097
  %s1099 = vtos %v1098
  %s1100 = sadd.f32 %s1099, 1e-05
  %v1101 = vstv %s1100
  %v1102 = vrcp.pop %v1101
  %s1103 = vtos %v1102
  %v1104 = vstv %s1103
  %v1105 = vmul.f32 %v58, %v1104
  %1106 = vst.msk [vmem:[#allocation7 + $0x38] sm:$0xff] %vm79, %v1105
  %v1107 = vlaneseq
  %v1108 = vshrl.u32 %v1107, 7
  %v1109 = vsub.s32 0, %v1108
  %v1110 = vrot.slane %v39, %v1109
  %v1111 = vld [vmem:[%s0] sm:$0xff]
  %v1112 = vld [vmem:[%s0 + $0x40] sm:$0xff]
  %v1113 = vld [vmem:[#allocation2] sm:$0xff]
  %v1114 = vld [vmem:[#allocation3] sm:$0xff]
  %v1115 = vld [vmem:[#allocation4] sm:$0xff]
  %v1116 = vld [vmem:[#allocation5] sm:$0xff]
  %v1117 = vld [vmem:[#allocation6] sm:$0xff]
  %v1118 = vld [vmem:[#allocation7] sm:$0xff]
  %v1119 = vsub.f32 1.0, %v1112
  %v1120 = vmul.f32 %v1112, %v1111
  %v1121 = vmul.f32 %v1113, 0.0
  %v1123 = vsel %vm922, %v1121, 0
  %1125 = vmatprep.subr.mxu0 0.0
  %1126 = vmatpush1.msra.mxu0 0.0
  %1127 = vmatprep.subr.mxu0 0.0
  %1128 = vmatpush1.msra.mxu0 0.0
  %1129 = vmatprep.subr.mxu0 0.0
  %1130 = vmatpush1.msra.mxu0 0.0
  %1131 = vmatprep.subr.mxu0 0.0
  %1132 = vmatpush1.msra.mxu0 0.0
  %1133 = vmatprep.subr.mxu0 0.0
  %1134 = vmatpush1.msra.mxu0 0.0
  %1135 = vmatprep.subr.mxu0 0.0
  %1136 = vmatpush1.msra.mxu0 0.0
  %1137 = vmatprep.subr.mxu0 0.0
  %1138 = vmatpush1.msra.mxu0 0.0
  %1139 = vmatprep.subr.mxu0 0.0
  %1140 = vmatpush1.msra.mxu0 0.0
  %1141 = vmatprep.subr.mxu0 0.0
  %1142 = vmatpush1.msra.mxu0 0.0
  %1143 = vmatprep.subr.mxu0 0.0
  %1144 = vmatpush1.msra.mxu0 0.0
  %1145 = vmatprep.subr.mxu0 0.0
  %1146 = vmatpush1.msra.mxu0 0.0
  %1147 = vmatprep.subr.mxu0 0.0
  %1148 = vmatpush1.msra.mxu0 0.0
  %1149 = vmatprep.subr.mxu0 0.0
  %1150 = vmatpush1.msra.mxu0 %v33
  %1151 = vmatprep.subr.mxu0 0.0
  %1152 = vmatpush1.msra.mxu0 %v32
  %1153 = vmatprep.subr.mxu0 0.0
  %1154 = vmatpush1.msra.mxu0 %v31
  %1155 = vmatprep.subr.mxu0 0.0
  %1156 = vmatpush1.msra.mxu0 %v30
  %1157 = vmatprep.subr.mxu0 0.0
  %1158 = vmatpush2.msra.mxu0 0.0
  %1159 = vmatprep.subr.mxu0 0.0
  %1160 = vmatpush2.msra.mxu0 0.0
  %1161 = vmatprep.subr.mxu0 0.0
  %1162 = vmatpush2.msra.mxu0 0.0
  %1163 = vmatprep.subr.mxu0 0.0
  %1164 = vmatpush2.msra.mxu0 0.0
  %1165 = vmatprep.subr.mxu0 0.0
  %1166 = vmatpush2.msra.mxu0 0.0
  %1167 = vmatprep.subr.mxu0 0.0
  %1168 = vmatpush2.msra.mxu0 0.0
  %1169 = vmatprep.subr.mxu0 0.0
  %1170 = vmatpush2.msra.mxu0 0.0
  %1171 = vmatprep.subr.mxu0 0.0
  %1172 = vmatpush2.msra.mxu0 0.0
  %1173 = vmatprep.subr.mxu0 0.0
  %1174 = vmatpush2.msra.mxu0 0.0
  %1175 = vmatprep.subr.mxu0 0.0
  %1176 = vmatpush2.msra.mxu0 0.0
  %1177 = vmatprep.subr.mxu0 0.0
  %1178 = vmatpush2.msra.mxu0 0.0
  %1179 = vmatprep.subr.mxu0 0.0
  %1180 = vmatpush2.msra.mxu0 0.0
  %1181 = vmatprep.subr.mxu0 0.0
  %1182 = vmatpush2.msra.mxu0 0.0
  %1183 = vmatprep.subr.mxu0 0.0
  %1184 = vmatpush2.msra.mxu0 0.0
  %1185 = vmatprep.subr.mxu0 0.0
  %1186 = vmatpush2.msra.mxu0 0.0
  %1187 = vmatprep.subr.mxu0 0.0
  %1188 = vmatpush2.msra.mxu0 0.0
  %1189 = vmatprep.mubr.f32.mxu0 0.0
  %1190 = vmatmul.mubr.f32.gmra.mxu0 %v1123
  %v1191 = vpop.f32.mrf.mxu0
  %v1192 = vadd.f32 %v1110, %v1191
  %v1193 = vpop.f32.mrf.mxu0
  %1194 = vdwg.mxu0
  %v1195 = vmul.f32 %v1119, %v1192
  %v1197 = vsel %vm79, %v1195, 0
  %1199 = vmatprep.subr.mxu0 0.0
  %1200 = vmatpush1.msra.mxu0 0.0
  %1201 = vmatprep.subr.mxu0 0.0
  %1202 = vmatpush1.msra.mxu0 0.0
  %1203 = vmatprep.subr.mxu0 0.0
  %1204 = vmatpush1.msra.mxu0 0.0
  %1205 = vmatprep.subr.mxu0 0.0
  %1206 = vmatpush1.msra.mxu0 0.0
  %1207 = vmatprep.subr.mxu0 0.0
  %1208 = vmatpush1.msra.mxu0 0.0
  %1209 = vmatprep.subr.mxu0 0.0
  %1210 = vmatpush1.msra.mxu0 0.0
  %1211 = vmatprep.subr.mxu0 0.0
  %1212 = vmatpush1.msra.mxu0 0.0
  %1213 = vmatprep.subr.mxu0 0.0
  %1214 = vmatpush1.msra.mxu0 0.0
  %1215 = vmatprep.subr.mxu0 0.0
  %1216 = vmatpush1.msra.mxu0 0.0
  %1217 = vmatprep.subr.mxu0 0.0
  %1218 = vmatpush1.msra.mxu0 0.0
  %1219 = vmatprep.subr.mxu0 0.0
  %1220 = vmatpush1.msra.mxu0 0.0
  %1221 = vmatprep.subr.mxu0 0.0
  %1222 = vmatpush1.msra.mxu0 0.0
  %1223 = vmatprep.subr.mxu0 0.0
  %1224 = vmatpush1.msra.mxu0 0.0
  %1225 = vmatprep.subr.mxu0 0.0
  %1226 = vmatpush1.msra.mxu0 0.0
  %1227 = vmatprep.subr.mxu0 0.0
  %1228 = vmatpush1.msra.mxu0 0.0
  %1229 = vmatprep.subr.mxu0 0.0
  %1230 = vmatpush1.msra.mxu0 %v34
  %1231 = vmatprep.subr.mxu0 0.0
  %1232 = vmatpush2.msra.mxu0 0.0
  %1233 = vmatprep.subr.mxu0 0.0
  %1234 = vmatpush2.msra.mxu0 0.0
  %1235 = vmatprep.subr.mxu0 0.0
  %1236 = vmatpush2.msra.mxu0 0.0
  %1237 = vmatprep.subr.mxu0 0.0
  %1238 = vmatpush2.msra.mxu0 0.0
  %1239 = vmatprep.subr.mxu0 0.0
  %1240 = vmatpush2.msra.mxu0 0.0
  %1241 = vmatprep.subr.mxu0 0.0
  %1242 = vmatpush2.msra.mxu0 0.0
  %1243 = vmatprep.subr.mxu0 0.0
  %1244 = vmatpush2.msra.mxu0 0.0
  %1245 = vmatprep.subr.mxu0 0.0
  %1246 = vmatpush2.msra.mxu0 0.0
  %1247 = vmatprep.subr.mxu0 0.0
  %1248 = vmatpush2.msra.mxu0 0.0
  %1249 = vmatprep.subr.mxu0 0.0
  %1250 = vmatpush2.msra.mxu0 0.0
  %1251 = vmatprep.subr.mxu0 0.0
  %1252 = vmatpush2.msra.mxu0 0.0
  %1253 = vmatprep.subr.mxu0 0.0
  %1254 = vmatpush2.msra.mxu0 0.0
  %1255 = vmatprep.subr.mxu0 0.0
  %1256 = vmatpush2.msra.mxu0 0.0
  %1257 = vmatprep.subr.mxu0 0.0
  %1258 = vmatpush2.msra.mxu0 0.0
  %1259 = vmatprep.subr.mxu0 0.0
  %1260 = vmatpush2.msra.mxu0 0.0
  %1261 = vmatprep.subr.mxu0 0.0
  %1262 = vmatpush2.msra.mxu0 0.0
  %1263 = vmatprep.mubr.f32.mxu0 0.0
  %1264 = vmatmul.mubr.f32.gmra.mxu0 %v1197
  %v1265 = vpop.f32.mrf.mxu0
  %v1266 = vadd.f32 %v1117, %v1265
  %v1267 = vpop.f32.mrf.mxu0
  %1268 = vdwg.mxu0
  %v1269 = vmul.f32 %v1115, %v1266
  %v1270 = vmul.f32 %v1116, %v1192
  %v1271 = vadd.f32 %v1269, %v1270
  %v1272 = vmul.f32 %v1119, %v1271
  %v1273 = vadd.f32 %v1120, %v1272
  %v1274 = vsub.f32 %v1111, %v1192
  %v1275 = vand.u32 2147483647, %v1274
  %v1276 = vsub.f32 %v1111, %v1266
  %v1277 = vand.u32 2147483647, %v1276
  %v1278 = vadd.f32 %v1275, %v1277
  %v1279 = vsub.f32 %v1111, %v1271
  %v1280 = vand.u32 2147483647, %v1279
  %v1281 = vadd.f32 %v1278, %v1280
  %v1282 = vmul.f32 %v1281, %v1118
  %v1283 = vadd.f32 %v1282, 0.0
  %1284 = vmatprep.subr.mxu0 0.0
  %1285 = vmatpush1.msra.mxu0 0.0
  %1286 = vmatprep.subr.mxu0 0.0
  %1287 = vmatpush1.msra.mxu0 0.0
  %1288 = vmatprep.subr.mxu0 0.0
  %1289 = vmatpush1.msra.mxu0 0.0
  %1290 = vmatprep.subr.mxu0 0.0
  %1291 = vmatpush1.msra.mxu0 0.0
  %1292 = vmatprep.subr.mxu0 0.0
  %1293 = vmatpush1.msra.mxu0 0.0
  %1294 = vmatprep.subr.mxu0 0.0
  %1295 = vmatpush1.msra.mxu0 0.0
  %1296 = vmatprep.subr.mxu0 0.0
  %1297 = vmatpush1.msra.mxu0 0.0
  %1298 = vmatprep.subr.mxu0 0.0
  %1299 = vmatpush1.msra.mxu0 0.0
  %1300 = vmatprep.subr.mxu0 0.0
  %1301 = vmatpush1.msra.mxu0 0.0
  %1302 = vmatprep.subr.mxu0 0.0
  %1303 = vmatpush1.msra.mxu0 0.0
  %1304 = vmatprep.subr.mxu0 0.0
  %1305 = vmatpush1.msra.mxu0 0.0
  %1306 = vmatprep.subr.mxu0 0.0
  %1307 = vmatpush1.msra.mxu0 0.0
  %1308 = vmatprep.subr.mxu0 0.0
  %1309 = vmatpush1.msra.mxu0 %v25
  %1310 = vmatprep.subr.mxu0 0.0
  %1311 = vmatpush1.msra.mxu0 %v24
  %1312 = vmatprep.subr.mxu0 0.0
  %1313 = vmatpush1.msra.mxu0 %v23
  %1314 = vmatprep.subr.mxu0 0.0
  %1315 = vmatpush1.msra.mxu0 %v22
  %1316 = vmatprep.subr.mxu0 0.0
  %1317 = vmatpush2.msra.mxu0 0.0
  %1318 = vmatprep.subr.mxu0 0.0
  %1319 = vmatpush2.msra.mxu0 0.0
  %1320 = vmatprep.subr.mxu0 0.0
  %1321 = vmatpush2.msra.mxu0 0.0
  %1322 = vmatprep.subr.mxu0 0.0
  %1323 = vmatpush2.msra.mxu0 0.0
  %1324 = vmatprep.subr.mxu0 0.0
  %1325 = vmatpush2.msra.mxu0 0.0
  %1326 = vmatprep.subr.mxu0 0.0
  %1327 = vmatpush2.msra.mxu0 0.0
  %1328 = vmatprep.subr.mxu0 0.0
  %1329 = vmatpush2.msra.mxu0 0.0
  %1330 = vmatprep.subr.mxu0 0.0
  %1331 = vmatpush2.msra.mxu0 0.0
  %1332 = vmatprep.subr.mxu0 0.0
  %1333 = vmatpush2.msra.mxu0 0.0
  %1334 = vmatprep.subr.mxu0 0.0
  %1335 = vmatpush2.msra.mxu0 0.0
  %1336 = vmatprep.subr.mxu0 0.0
  %1337 = vmatpush2.msra.mxu0 0.0
  %1338 = vmatprep.subr.mxu0 0.0
  %1339 = vmatpush2.msra.mxu0 0.0
  %1340 = vmatprep.subr.mxu0 0.0
  %1341 = vmatpush2.msra.mxu0 0.0
  %1342 = vmatprep.subr.mxu0 0.0
  %1343 = vmatpush2.msra.mxu0 0.0
  %1344 = vmatprep.subr.mxu0 0.0
  %1345 = vmatpush2.msra.mxu0 0.0
  %1346 = vmatprep.subr.mxu0 0.0
  %1347 = vmatpush2.msra.mxu0 0.0
  %1348 = vmatprep.mubr.f32.mxu0 0.0
  %1349 = vmatmul.mubr.f32.gmra.mxu0 %v1123
  %v1350 = vpop.f32.mrf.mxu0
  %v1351 = vadd.f32 0.0, %v1350
  %v1352 = vpop.f32.mrf.mxu0
  %1353 = vdwg.mxu0
  %v1355 = vsel %vm79, %v1272, 0
  %1357 = vmatprep.subr.mxu0 0.0
  %1358 = vmatpush1.msra.mxu0 0.0
  %1359 = vmatprep.subr.mxu0 0.0
  %1360 = vmatpush1.msra.mxu0 0.0
  %1361 = vmatprep.subr.mxu0 0.0
  %1362 = vmatpush1.msra.mxu0 0.0
  %1363 = vmatprep.subr.mxu0 0.0
  %1364 = vmatpush1.msra.mxu0 0.0
  %1365 = vmatprep.subr.mxu0 0.0
  %1366 = vmatpush1.msra.mxu0 0.0
  %1367 = vmatprep.subr.mxu0 0.0
  %1368 = vmatpush1.msra.mxu0 0.0
  %1369 = vmatprep.subr.mxu0 0.0
  %1370 = vmatpush1.msra.mxu0 0.0
  %1371 = vmatprep.subr.mxu0 0.0
  %1372 = vmatpush1.msra.mxu0 0.0
  %1373 = vmatprep.subr.mxu0 0.0
  %1374 = vmatpush1.msra.mxu0 0.0
  %1375 = vmatprep.subr.mxu0 0.0
  %1376 = vmatpush1.msra.mxu0 0.0
  %1377 = vmatprep.subr.mxu0 0.0
  %1378 = vmatpush1.msra.mxu0 0.0
  %1379 = vmatprep.subr.mxu0 0.0
  %1380 = vmatpush1.msra.mxu0 0.0
  %1381 = vmatprep.subr.mxu0 0.0
  %1382 = vmatpush1.msra.mxu0 0.0
  %1383 = vmatprep.subr.mxu0 0.0
  %1384 = vmatpush1.msra.mxu0 0.0
  %1385 = vmatprep.subr.mxu0 0.0
  %1386 = vmatpush1.msra.mxu0 0.0
  %1387 = vmatprep.subr.mxu0 0.0
  %1388 = vmatpush1.msra.mxu0 %v20
  %1389 = vmatprep.subr.mxu0 0.0
  %1390 = vmatpush2.msra.mxu0 0.0
  %1391 = vmatprep.subr.mxu0 0.0
  %1392 = vmatpush2.msra.mxu0 0.0
  %1393 = vmatprep.subr.mxu0 0.0
  %1394 = vmatpush2.msra.mxu0 0.0
  %1395 = vmatprep.subr.mxu0 0.0
  %1396 = vmatpush2.msra.mxu0 0.0
  %1397 = vmatprep.subr.mxu0 0.0
  %1398 = vmatpush2.msra.mxu0 0.0
  %1399 = vmatprep.subr.mxu0 0.0
  %1400 = vmatpush2.msra.mxu0 0.0
  %1401 = vmatprep.subr.mxu0 0.0
  %1402 = vmatpush2.msra.mxu0 0.0
  %1403 = vmatprep.subr.mxu0 0.0
  %1404 = vmatpush2.msra.mxu0 0.0
  %1405 = vmatprep.subr.mxu0 0.0
  %1406 = vmatpush2.msra.mxu0 0.0
  %1407 = vmatprep.subr.mxu0 0.0
  %1408 = vmatpush2.msra.mxu0 0.0
  %1409 = vmatprep.subr.mxu0 0.0
  %1410 = vmatpush2.msra.mxu0 0.0
  %1411 = vmatprep.subr.mxu0 0.0
  %1412 = vmatpush2.msra.mxu0 0.0
  %1413 = vmatprep.subr.mxu0 0.0
  %1414 = vmatpush2.msra.mxu0 0.0
  %1415 = vmatprep.subr.mxu0 0.0
  %1416 = vmatpush2.msra.mxu0 0.0
  %1417 = vmatprep.subr.mxu0 0.0
  %1418 = vmatpush2.msra.mxu0 0.0
  %1419 = vmatprep.subr.mxu0 0.0
  %1420 = vmatpush2.msra.mxu0 0.0
  %1421 = vmatprep.mubr.f32.mxu0 0.0
  %1422 = vmatmul.mubr.f32.gmra.mxu0 %v1355
  %v1423 = vpop.f32.mrf.mxu0
  %v1424 = vadd.f32 %v1351, %v1423
  %v1425 = vpop.f32.mrf.mxu0
  %1426 = vdwg.mxu0
  %v1427 = vadd.f32 %v1424, %v1114
  %v1428 = vxor.u32 %v1427, 2147483648
  %v1429 = vmul.f32 %v1428, 1.442695
  %v1430 = vpow.pop %v1429
  %v1431 = vadd.f32 %v1430, 1.0
  %v1432 = vrcp.pop %v1431
  %v1433 = vmul.f32 1.0, %v1432
  %v1434 = vtanh.pop %v1427
  %v1435 = vmul.f32 %v1433, 0.0
  %1437 = vrot.lane.b32.xlu0 %v1434, 64
  %v1438 = vpop.permute.xlu0 %1437
  %v1440 = vmul.f32 %v1433, %v1438
  %1442 = vrot.lane.b32.xlu0 %v1440, 32
  %v1443 = vpop.permute.xlu0 %1442
  %v1445 = vadd.f32 %v1435, %v1443
  %v1446 = vtanh.pop %v1445
  %1448 = vrot.lane.b32.xlu0 %v1446, 64
  %v1449 = vpop.permute.xlu0 %1448
  %v1451 = vmul.f32 %v1433, %v1449
  %v1452 = vld [vmem:[%s0 + $0x8] sm:$0xff]
  %v1453 = vld [vmem:[%s0 + $0x48] sm:$0xff]
  %v1454 = vld [vmem:[#allocation2 + $0x8] sm:$0xff]
  %v1455 = vld [vmem:[#allocation3 + $0x8] sm:$0xff]
  %v1456 = vld [vmem:[#allocation4 + $0x8] sm:$0xff]
  %v1457 = vld [vmem:[#allocation5 + $0x8] sm:$0xff]
  %v1458 = vld [vmem:[#allocation6 + $0x8] sm:$0xff]
  %v1459 = vld [vmem:[#allocation7 + $0x8] sm:$0xff]
  %v1460 = vsub.f32 1.0, %v1453
  %v1461 = vmul.f32 %v1453, %v1452
  %1463 = vrot.lane.b32.xlu0 %v1454, 96
  %v1464 = vpop.permute.xlu0 %1463
  %v1466 = vmul.f32 %v1451, %v1464
  %1468 = vrot.lane.b32.xlu0 %v1466, 32
  %v1469 = vpop.permute.xlu0 %1468
  %v1470 = vsel %vm922, %v1469, 0
  %1472 = vmatprep.subr.mxu0 0.0
  %1473 = vmatpush1.msra.mxu0 0.0
  %1474 = vmatprep.subr.mxu0 0.0
  %1475 = vmatpush1.msra.mxu0 0.0
  %1476 = vmatprep.subr.mxu0 0.0
  %1477 = vmatpush1.msra.mxu0 0.0
  %1478 = vmatprep.subr.mxu0 0.0
  %1479 = vmatpush1.msra.mxu0 0.0
  %1480 = vmatprep.subr.mxu0 0.0
  %1481 = vmatpush1.msra.mxu0 0.0
  %1482 = vmatprep.subr.mxu0 0.0
  %1483 = vmatpush1.msra.mxu0 0.0
  %1484 = vmatprep.subr.mxu0 0.0
  %1485 = vmatpush1.msra.mxu0 0.0
  %1486 = vmatprep.subr.mxu0 0.0
  %1487 = vmatpush1.msra.mxu0 0.0
  %1488 = vmatprep.subr.mxu0 0.0
  %1489 = vmatpush1.msra.mxu0 0.0
  %1490 = vmatprep.subr.mxu0 0.0
  %1491 = vmatpush1.msra.mxu0 0.0
  %1492 = vmatprep.subr.mxu0 0.0
  %1493 = vmatpush1.msra.mxu0 0.0
  %1494 = vmatprep.subr.mxu0 0.0
  %1495 = vmatpush1.msra.mxu0 0.0
  %1496 = vmatprep.subr.mxu0 0.0
  %1497 = vmatpush1.msra.mxu0 %v33
  %1498 = vmatprep.subr.mxu0 0.0
  %1499 = vmatpush1.msra.mxu0 %v32
  %1500 = vmatprep.subr.mxu0 0.0
  %1501 = vmatpush1.msra.mxu0 %v31
  %1502 = vmatprep.subr.mxu0 0.0
  %1503 = vmatpush1.msra.mxu0 %v30
  %1504 = vmatprep.subr.mxu0 0.0
  %1505 = vmatpush2.msra.mxu0 0.0
  %1506 = vmatprep.subr.mxu0 0.0
  %1507 = vmatpush2.msra.mxu0 0.0
  %1508 = vmatprep.subr.mxu0 0.0
  %1509 = vmatpush2.msra.mxu0 0.0
  %1510 = vmatprep.subr.mxu0 0.0
  %1511 = vmatpush2.msra.mxu0 0.0
  %1512 = vmatprep.subr.mxu0 0.0
  %1513 = vmatpush2.msra.mxu0 0.0
  %1514 = vmatprep.subr.mxu0 0.0
  %1515 = vmatpush2.msra.mxu0 0.0
  %1516 = vmatprep.subr.mxu0 0.0
  %1517 = vmatpush2.msra.mxu0 0.0
  %1518 = vmatprep.subr.mxu0 0.0
  %1519 = vmatpush2.msra.mxu0 0.0
  %1520 = vmatprep.subr.mxu0 0.0
  %1521 = vmatpush2.msra.mxu0 0.0
  %1522 = vmatprep.subr.mxu0 0.0
  %1523 = vmatpush2.msra.mxu0 0.0
  %1524 = vmatprep.subr.mxu0 0.0
  %1525 = vmatpush2.msra.mxu0 0.0
  %1526 = vmatprep.subr.mxu0 0.0
  %1527 = vmatpush2.msra.mxu0 0.0
  %1528 = vmatprep.subr.mxu0 0.0
  %1529 = vmatpush2.msra.mxu0 0.0
  %1530 = vmatprep.subr.mxu0 0.0
  %1531 = vmatpush2.msra.mxu0 0.0
  %1532 = vmatprep.subr.mxu0 0.0
  %1533 = vmatpush2.msra.mxu0 0.0
  %1534 = vmatprep.subr.mxu0 0.0
  %1535 = vmatpush2.msra.mxu0 0.0
  %1536 = vmatprep.mubr.f32.mxu0 0.0
  %1537 = vmatmul.mubr.f32.gmra.mxu0 %v1470
  %v1538 = vpop.f32.mrf.mxu0
  %v1539 = vadd.f32 %v1110, %v1538
  %v1540 = vpop.f32.mrf.mxu0
  %1541 = vdwg.mxu0
  %v1542 = vmul.f32 %v1460, %v1539
  %v1544 = vsel %vm79, %v1542, 0
  %1546 = vmatprep.subr.mxu0 0.0
  %1547 = vmatpush1.msra.mxu0 0.0
  %1548 = vmatprep.subr.mxu0 0.0
  %1549 = vmatpush1.msra.mxu0 0.0
  %1550 = vmatprep.subr.mxu0 0.0
  %1551 = vmatpush1.msra.mxu0 0.0
  %1552 = vmatprep.subr.mxu0 0.0
  %1553 = vmatpush1.msra.mxu0 0.0
  %1554 = vmatprep.subr.mxu0 0.0
  %1555 = vmatpush1.msra.mxu0 0.0
  %1556 = vmatprep.subr.mxu0 0.0
  %1557 = vmatpush1.msra.mxu0 0.0
  %1558 = vmatprep.subr.mxu0 0.0
  %1559 = vmatpush1.msra.mxu0 0.0
  %1560 = vmatprep.subr.mxu0 0.0
  %1561 = vmatpush1.msra.mxu0 0.0
  %1562 = vmatprep.subr.mxu0 0.0
  %1563 = vmatpush1.msra.mxu0 0.0
  %1564 = vmatprep.subr.mxu0 0.0
  %1565 = vmatpush1.msra.mxu0 0.0
  %1566 = vmatprep.subr.mxu0 0.0
  %1567 = vmatpush1.msra.mxu0 0.0
  %1568 = vmatprep.subr.mxu0 0.0
  %1569 = vmatpush1.msra.mxu0 0.0
  %1570 = vmatprep.subr.mxu0 0.0
  %1571 = vmatpush1.msra.mxu0 0.0
  %1572 = vmatprep.subr.mxu0 0.0
  %1573 = vmatpush1.msra.mxu0 0.0
  %1574 = vmatprep.subr.mxu0 0.0
  %1575 = vmatpush1.msra.mxu0 0.0
  %1576 = vmatprep.subr.mxu0 0.0
  %1577 = vmatpush1.msra.mxu0 %v34
  %1578 = vmatprep.subr.mxu0 0.0
  %1579 = vmatpush2.msra.mxu0 0.0
  %1580 = vmatprep.subr.mxu0 0.0
  %1581 = vmatpush2.msra.mxu0 0.0
  %1582 = vmatprep.subr.mxu0 0.0
  %1583 = vmatpush2.msra.mxu0 0.0
  %1584 = vmatprep.subr.mxu0 0.0
  %1585 = vmatpush2.msra.mxu0 0.0
  %1586 = vmatprep.subr.mxu0 0.0
  %1587 = vmatpush2.msra.mxu0 0.0
  %1588 = vmatprep.subr.mxu0 0.0
  %1589 = vmatpush2.msra.mxu0 0.0
  %1590 = vmatprep.subr.mxu0 0.0
  %1591 = vmatpush2.msra.mxu0 0.0
  %1592 = vmatprep.subr.mxu0 0.0
  %1593 = vmatpush2.msra.mxu0 0.0
  %1594 = vmatprep.subr.mxu0 0.0
  %1595 = vmatpush2.msra.mxu0 0.0
  %1596 = vmatprep.subr.mxu0 0.0
  %1597 = vmatpush2.msra.mxu0 0.0
  %1598 = vmatprep.subr.mxu0 0.0
  %1599 = vmatpush2.msra.mxu0 0.0
  %1600 = vmatprep.subr.mxu0 0.0
  %1601 = vmatpush2.msra.mxu0 0.0
  %1602 = vmatprep.subr.mxu0 0.0
  %1603 = vmatpush2.msra.mxu0 0.0
  %1604 = vmatprep.subr.mxu0 0.0
  %1605 = vmatpush2.msra.mxu0 0.0
  %1606 = vmatprep.subr.mxu0 0.0
  %1607 = vmatpush2.msra.mxu0 0.0
  %1608 = vmatprep.subr.mxu0 0.0
  %1609 = vmatpush2.msra.mxu0 0.0
  %1610 = vmatprep.mubr.f32.mxu0 0.0
  %1611 = vmatmul.mubr.f32.gmra.mxu0 %v1544
  %v1612 = vpop.f32.mrf.mxu0
  %v1613 = vadd.f32 %v1458, %v1612
  %v1614 = vpop.f32.mrf.mxu0
  %1615 = vdwg.mxu0
  %v1616 = vmul.f32 %v1456, %v1613
  %v1617 = vmul.f32 %v1457, %v1539
  %v1618 = vadd.f32 %v1616, %v1617
  %v1619 = vmul.f32 %v1460, %v1618
  %v1620 = vadd.f32 %v1461, %v1619
  %v1621 = vsub.f32 %v1452, %v1539
  %v1622 = vand.u32 2147483647, %v1621
  %v1623 = vsub.f32 %v1452, %v1613
  %v1624 = vand.u32 2147483647, %v1623
  %v1625 = vadd.f32 %v1622, %v1624
  %v1626 = vsub.f32 %v1452, %v1618
  %v1627 = vand.u32 2147483647, %v1626
  %v1628 = vadd.f32 %v1625, %v1627
  %v1629 = vmul.f32 %v1628, %v1459
  %v1630 = vadd.f32 %v1283, %v1629
  %1631 = vmatprep.subr.mxu0 0.0
  %1632 = vmatpush1.msra.mxu0 0.0
  %1633 = vmatprep.subr.mxu0 0.0
  %1634 = vmatpush1.msra.mxu0 0.0
  %1635 = vmatprep.subr.mxu0 0.0
  %1636 = vmatpush1.msra.mxu0 0.0
  %1637 = vmatprep.subr.mxu0 0.0
  %1638 = vmatpush1.msra.mxu0 0.0
  %1639 = vmatprep.subr.mxu0 0.0
  %1640 = vmatpush1.msra.mxu0 0.0
  %1641 = vmatprep.subr.mxu0 0.0
  %1642 = vmatpush1.msra.mxu0 0.0
  %1643 = vmatprep.subr.mxu0 0.0
  %1644 = vmatpush1.msra.mxu0 0.0
  %1645 = vmatprep.subr.mxu0 0.0
  %1646 = vmatpush1.msra.mxu0 0.0
  %1647 = vmatprep.subr.mxu0 0.0
  %1648 = vmatpush1.msra.mxu0 0.0
  %1649 = vmatprep.subr.mxu0 0.0
  %1650 = vmatpush1.msra.mxu0 0.0
  %1651 = vmatprep.subr.mxu0 0.0
  %1652 = vmatpush1.msra.mxu0 0.0
  %1653 = vmatprep.subr.mxu0 0.0
  %1654 = vmatpush1.msra.mxu0 0.0
  %1655 = vmatprep.subr.mxu0 0.0
  %1656 = vmatpush1.msra.mxu0 %v25
  %1657 = vmatprep.subr.mxu0 0.0
  %1658 = vmatpush1.msra.mxu0 %v24
  %1659 = vmatprep.subr.mxu0 0.0
  %1660 = vmatpush1.msra.mxu0 %v23
  %1661 = vmatprep.subr.mxu0 0.0
  %1662 = vmatpush1.msra.mxu0 %v22
  %1663 = vmatprep.subr.mxu0 0.0
  %1664 = vmatpush2.msra.mxu0 0.0
  %1665 = vmatprep.subr.mxu0 0.0
  %1666 = vmatpush2.msra.mxu0 0.0
  %1667 = vmatprep.subr.mxu0 0.0
  %1668 = vmatpush2.msra.mxu0 0.0
  %1669 = vmatprep.subr.mxu0 0.0
  %1670 = vmatpush2.msra.mxu0 0.0
  %1671 = vmatprep.subr.mxu0 0.0
  %1672 = vmatpush2.msra.mxu0 0.0
  %1673 = vmatprep.subr.mxu0 0.0
  %1674 = vmatpush2.msra.mxu0 0.0
  %1675 = vmatprep.subr.mxu0 0.0
  %1676 = vmatpush2.msra.mxu0 0.0
  %1677 = vmatprep.subr.mxu0 0.0
  %1678 = vmatpush2.msra.mxu0 0.0
  %1679 = vmatprep.subr.mxu0 0.0
  %1680 = vmatpush2.msra.mxu0 0.0
  %1681 = vmatprep.subr.mxu0 0.0
  %1682 = vmatpush2.msra.mxu0 0.0
  %1683 = vmatprep.subr.mxu0 0.0
  %1684 = vmatpush2.msra.mxu0 0.0
  %1685 = vmatprep.subr.mxu0 0.0
  %1686 = vmatpush2.msra.mxu0 0.0
  %1687 = vmatprep.subr.mxu0 0.0
  %1688 = vmatpush2.msra.mxu0 0.0
  %1689 = vmatprep.subr.mxu0 0.0
  %1690 = vmatpush2.msra.mxu0 0.0
  %1691 = vmatprep.subr.mxu0 0.0
  %1692 = vmatpush2.msra.mxu0 0.0
  %1693 = vmatprep.subr.mxu0 0.0
  %1694 = vmatpush2.msra.mxu0 0.0
  %1695 = vmatprep.mubr.f32.mxu0 0.0
  %1696 = vmatmul.mubr.f32.gmra.mxu0 %v1470
  %v1697 = vpop.f32.mrf.mxu0
  %v1698 = vadd.f32 0.0, %v1697
  %v1699 = vpop.f32.mrf.mxu0
  %1700 = vdwg.mxu0
  %v1702 = vsel %vm79, %v1619, 0
  %1704 = vmatprep.subr.mxu0 0.0
  %1705 = vmatpush1.msra.mxu0 0.0
  %1706 = vmatprep.subr.mxu0 0.0
  %1707 = vmatpush1.msra.mxu0 0.0
  %1708 = vmatprep.subr.mxu0 0.0
  %1709 = vmatpush1.msra.mxu0 0.0
  %1710 = vmatprep.subr.mxu0 0.0
  %1711 = vmatpush1.msra.mxu0 0.0
  %1712 = vmatprep.subr.mxu0 0.0
  %1713 = vmatpush1.msra.mxu0 0.0
  %1714 = vmatprep.subr.mxu0 0.0
  %1715 = vmatpush1.msra.mxu0 0.0
  %1716 = vmatprep.subr.mxu0 0.0
  %1717 = vmatpush1.msra.mxu0 0.0
  %1718 = vmatprep.subr.mxu0 0.0
  %1719 = vmatpush1.msra.mxu0 0.0
  %1720 = vmatprep.subr.mxu0 0.0
  %1721 = vmatpush1.msra.mxu0 0.0
  %1722 = vmatprep.subr.mxu0 0.0
  %1723 = vmatpush1.msra.mxu0 0.0
  %1724 = vmatprep.subr.mxu0 0.0
  %1725 = vmatpush1.msra.mxu0 0.0
  %1726 = vmatprep.subr.mxu0 0.0
  %1727 = vmatpush1.msra.mxu0 0.0
  %1728 = vmatprep.subr.mxu0 0.0
  %1729 = vmatpush1.msra.mxu0 0.0
  %1730 = vmatprep.subr.mxu0 0.0
  %1731 = vmatpush1.msra.mxu0 0.0
  %1732 = vmatprep.subr.mxu0 0.0
  %1733 = vmatpush1.msra.mxu0 0.0
  %1734 = vmatprep.subr.mxu0 0.0
  %1735 = vmatpush1.msra.mxu0 %v20
  %1736 = vmatprep.subr.mxu0 0.0
  %1737 = vmatpush2.msra.mxu0 0.0
  %1738 = vmatprep.subr.mxu0 0.0
  %1739 = vmatpush2.msra.mxu0 0.0
  %1740 = vmatprep.subr.mxu0 0.0
  %1741 = vmatpush2.msra.mxu0 0.0
  %1742 = vmatprep.subr.mxu0 0.0
  %1743 = vmatpush2.msra.mxu0 0.0
  %1744 = vmatprep.subr.mxu0 0.0
  %1745 = vmatpush2.msra.mxu0 0.0
  %1746 = vmatprep.subr.mxu0 0.0
  %1747 = vmatpush2.msra.mxu0 0.0
  %1748 = vmatprep.subr.mxu0 0.0
  %1749 = vmatpush2.msra.mxu0 0.0
  %1750 = vmatprep.subr.mxu0 0.0
  %1751 = vmatpush2.msra.mxu0 0.0
  %1752 = vmatprep.subr.mxu0 0.0
  %1753 = vmatpush2.msra.mxu0 0.0
  %1754 = vmatprep.subr.mxu0 0.0
  %1755 = vmatpush2.msra.mxu0 0.0
  %1756 = vmatprep.subr.mxu0 0.0
  %1757 = vmatpush2.msra.mxu0 0.0
  %1758 = vmatprep.subr.mxu0 0.0
  %1759 = vmatpush2.msra.mxu0 0.0
  %1760 = vmatprep.subr.mxu0 0.0
  %1761 = vmatpush2.msra.mxu0 0.0
  %1762 = vmatprep.subr.mxu0 0.0
  %1763 = vmatpush2.msra.mxu0 0.0
  %1764 = vmatprep.subr.mxu0 0.0
  %1765 = vmatpush2.msra.mxu0 0.0
  %1766 = vmatprep.subr.mxu0 0.0
  %1767 = vmatpush2.msra.mxu0 0.0
  %1768 = vmatprep.mubr.f32.mxu0 0.0
  %1769 = vmatmul.mubr.f32.gmra.mxu0 %v1702
  %v1770 = vpop.f32.mrf.mxu0
  %v1771 = vadd.f32 %v1698, %v1770
  %v1772 = vpop.f32.mrf.mxu0
  %1773 = vdwg.mxu0
  %v1774 = vadd.f32 %v1771, %v1455
  %v1775 = vxor.u32 %v1774, 2147483648
  %v1776 = vmul.f32 %v1775, 1.442695
  %v1777 = vpow.pop %v1776
  %v1778 = vadd.f32 %v1777, 1.0
  %v1779 = vrcp.pop %v1778
  %v1780 = vmul.f32 1.0, %v1779
  %v1781 = vtanh.pop %v1774
  %v1782 = vmul.f32 %v1780, %v1445
  %1784 = vrot.lane.b32.xlu0 %v1781, 64
  %v1785 = vpop.permute.xlu0 %1784
  %v1787 = vmul.f32 %v1780, %v1785
  %1789 = vrot.lane.b32.xlu0 %v1787, 32
  %v1790 = vpop.permute.xlu0 %1789
  %v1792 = vadd.f32 %v1782, %v1790
  %v1793 = vtanh.pop %v1792
  %1795 = vrot.lane.b32.xlu0 %v1793, 64
  %v1796 = vpop.permute.xlu0 %1795
  %v1798 = vmul.f32 %v1780, %v1796
  %v1799 = vld [vmem:[%s0 + $0x10] sm:$0xff]
  %v1800 = vld [vmem:[%s0 + $0x50] sm:$0xff]
  %v1801 = vld [vmem:[#allocation2 + $0x10] sm:$0xff]
  %v1802 = vld [vmem:[#allocation3 + $0x10] sm:$0xff]
  %v1803 = vld [vmem:[#allocation4 + $0x10] sm:$0xff]
  %v1804 = vld [vmem:[#allocation5 + $0x10] sm:$0xff]
  %v1805 = vld [vmem:[#allocation6 + $0x10] sm:$0xff]
  %v1806 = vld [vmem:[#allocation7 + $0x10] sm:$0xff]
  %v1807 = vsub.f32 1.0, %v1800
  %v1808 = vmul.f32 %v1800, %v1799
  %1810 = vrot.lane.b32.xlu0 %v1801, 96
  %v1811 = vpop.permute.xlu0 %1810
  %v1813 = vmul.f32 %v1798, %v1811
  %1815 = vrot.lane.b32.xlu0 %v1813, 32
  %v1816 = vpop.permute.xlu0 %1815
  %v1817 = vsel %vm922, %v1816, 0
  %1819 = vmatprep.subr.mxu0 0.0
  %1820 = vmatpush1.msra.mxu0 0.0
  %1821 = vmatprep.subr.mxu0 0.0
  %1822 = vmatpush1.msra.mxu0 0.0
  %1823 = vmatprep.subr.mxu0 0.0
  %1824 = vmatpush1.msra.mxu0 0.0
  %1825 = vmatprep.subr.mxu0 0.0
  %1826 = vmatpush1.msra.mxu0 0.0
  %1827 = vmatprep.subr.mxu0 0.0
  %1828 = vmatpush1.msra.mxu0 0.0
  %1829 = vmatprep.subr.mxu0 0.0
  %1830 = vmatpush1.msra.mxu0 0.0
  %1831 = vmatprep.subr.mxu0 0.0
  %1832 = vmatpush1.msra.mxu0 0.0
  %1833 = vmatprep.subr.mxu0 0.0
  %1834 = vmatpush1.msra.mxu0 0.0
  %1835 = vmatprep.subr.mxu0 0.0
  %1836 = vmatpush1.msra.mxu0 0.0
  %1837 = vmatprep.subr.mxu0 0.0
  %1838 = vmatpush1.msra.mxu0 0.0
  %1839 = vmatprep.subr.mxu0 0.0
  %1840 = vmatpush1.msra.mxu0 0.0
  %1841 = vmatprep.subr.mxu0 0.0
  %1842 = vmatpush1.msra.mxu0 0.0
  %1843 = vmatprep.subr.mxu0 0.0
  %1844 = vmatpush1.msra.mxu0 %v33
  %1845 = vmatprep.subr.mxu0 0.0
  %1846 = vmatpush1.msra.mxu0 %v32
  %1847 = vmatprep.subr.mxu0 0.0
  %1848 = vmatpush1.msra.mxu0 %v31
  %1849 = vmatprep.subr.mxu0 0.0
  %1850 = vmatpush1.msra.mxu0 %v30
  %1851 = vmatprep.subr.mxu0 0.0
  %1852 = vmatpush2.msra.mxu0 0.0
  %1853 = vmatprep.subr.mxu0 0.0
  %1854 = vmatpush2.msra.mxu0 0.0
  %1855 = vmatprep.subr.mxu0 0.0
  %1856 = vmatpush2.msra.mxu0 0.0
  %1857 = vmatprep.subr.mxu0 0.0
  %1858 = vmatpush2.msra.mxu0 0.0
  %1859 = vmatprep.subr.mxu0 0.0
  %1860 = vmatpush2.msra.mxu0 0.0
  %1861 = vmatprep.subr.mxu0 0.0
  %1862 = vmatpush2.msra.mxu0 0.0
  %1863 = vmatprep.subr.mxu0 0.0
  %1864 = vmatpush2.msra.mxu0 0.0
  %1865 = vmatprep.subr.mxu0 0.0
  %1866 = vmatpush2.msra.mxu0 0.0
  %1867 = vmatprep.subr.mxu0 0.0
  %1868 = vmatpush2.msra.mxu0 0.0
  %1869 = vmatprep.subr.mxu0 0.0
  %1870 = vmatpush2.msra.mxu0 0.0
  %1871 = vmatprep.subr.mxu0 0.0
  %1872 = vmatpush2.msra.mxu0 0.0
  %1873 = vmatprep.subr.mxu0 0.0
  %1874 = vmatpush2.msra.mxu0 0.0
  %1875 = vmatprep.subr.mxu0 0.0
  %1876 = vmatpush2.msra.mxu0 0.0
  %1877 = vmatprep.subr.mxu0 0.0
  %1878 = vmatpush2.msra.mxu0 0.0
  %1879 = vmatprep.subr.mxu0 0.0
  %1880 = vmatpush2.msra.mxu0 0.0
  %1881 = vmatprep.subr.mxu0 0.0
  %1882 = vmatpush2.msra.mxu0 0.0
  %1883 = vmatprep.mubr.f32.mxu0 0.0
  %1884 = vmatmul.mubr.f32.gmra.mxu0 %v1817
  %v1885 = vpop.f32.mrf.mxu0
  %v1886 = vadd.f32 %v1110, %v1885
  %v1887 = vpop.f32.mrf.mxu0
  %1888 = vdwg.mxu0
  %v1889 = vmul.f32 %v1807, %v1886
  %v1891 = vsel %vm79, %v1889, 0
  %1893 = vmatprep.subr.mxu0 0.0
  %1894 = vmatpush1.msra.mxu0 0.0
  %1895 = vmatprep.subr.mxu0 0.0
  %1896 = vmatpush1.msra.mxu0 0.0
  %1897 = vmatprep.subr.mxu0 0.0
  %1898 = vmatpush1.msra.mxu0 0.0
  %1899 = vmatprep.subr.mxu0 0.0
  %1900 = vmatpush1.msra.mxu0 0.0
  %1901 = vmatprep.subr.mxu0 0.0
  %1902 = vmatpush1.msra.mxu0 0.0
  %1903 = vmatprep.subr.mxu0 0.0
  %1904 = vmatpush1.msra.mxu0 0.0
  %1905 = vmatprep.subr.mxu0 0.0
  %1906 = vmatpush1.msra.mxu0 0.0
  %1907 = vmatprep.subr.mxu0 0.0
  %1908 = vmatpush1.msra.mxu0 0.0
  %1909 = vmatprep.subr.mxu0 0.0
  %1910 = vmatpush1.msra.mxu0 0.0
  %1911 = vmatprep.subr.mxu0 0.0
  %1912 = vmatpush1.msra.mxu0 0.0
  %1913 = vmatprep.subr.mxu0 0.0
  %1914 = vmatpush1.msra.mxu0 0.0
  %1915 = vmatprep.subr.mxu0 0.0
  %1916 = vmatpush1.msra.mxu0 0.0
  %1917 = vmatprep.subr.mxu0 0.0
  %1918 = vmatpush1.msra.mxu0 0.0
  %1919 = vmatprep.subr.mxu0 0.0
  %1920 = vmatpush1.msra.mxu0 0.0
  %1921 = vmatprep.subr.mxu0 0.0
  %1922 = vmatpush1.msra.mxu0 0.0
  %1923 = vmatprep.subr.mxu0 0.0
  %1924 = vmatpush1.msra.mxu0 %v34
  %1925 = vmatprep.subr.mxu0 0.0
  %1926 = vmatpush2.msra.mxu0 0.0
  %1927 = vmatprep.subr.mxu0 0.0
  %1928 = vmatpush2.msra.mxu0 0.0
  %1929 = vmatprep.subr.mxu0 0.0
  %1930 = vmatpush2.msra.mxu0 0.0
  %1931 = vmatprep.subr.mxu0 0.0
  %1932 = vmatpush2.msra.mxu0 0.0
  %1933 = vmatprep.subr.mxu0 0.0
  %1934 = vmatpush2.msra.mxu0 0.0
  %1935 = vmatprep.subr.mxu0 0.0
  %1936 = vmatpush2.msra.mxu0 0.0
  %1937 = vmatprep.subr.mxu0 0.0
  %1938 = vmatpush2.msra.mxu0 0.0
  %1939 = vmatprep.subr.mxu0 0.0
  %1940 = vmatpush2.msra.mxu0 0.0
  %1941 = vmatprep.subr.mxu0 0.0
  %1942 = vmatpush2.msra.mxu0 0.0
  %1943 = vmatprep.subr.mxu0 0.0
  %1944 = vmatpush2.msra.mxu0 0.0
  %1945 = vmatprep.subr.mxu0 0.0
  %1946 = vmatpush2.msra.mxu0 0.0
  %1947 = vmatprep.subr.mxu0 0.0
  %1948 = vmatpush2.msra.mxu0 0.0
  %1949 = vmatprep.subr.mxu0 0.0
  %1950 = vmatpush2.msra.mxu0 0.0
  %1951 = vmatprep.subr.mxu0 0.0
  %1952 = vmatpush2.msra.mxu0 0.0
  %1953 = vmatprep.subr.mxu0 0.0
  %1954 = vmatpush2.msra.mxu0 0.0
  %1955 = vmatprep.subr.mxu0 0.0
  %1956 = vmatpush2.msra.mxu0 0.0
  %1957 = vmatprep.mubr.f32.mxu0 0.0
  %1958 = vmatmul.mubr.f32.gmra.mxu0 %v1891
  %v1959 = vpop.f32.mrf.mxu0
  %v1960 = vadd.f32 %v1805, %v1959
  %v1961 = vpop.f32.mrf.mxu0
  %1962 = vdwg.mxu0
  %v1963 = vmul.f32 %v1803, %v1960
  %v1964 = vmul.f32 %v1804, %v1886
  %v1965 = vadd.f32 %v1963, %v1964
  %v1966 = vmul.f32 %v1807, %v1965
  %v1967 = vadd.f32 %v1808, %v1966
  %v1968 = vsub.f32 %v1799, %v1886
  %v1969 = vand.u32 2147483647, %v1968
  %v1970 = vsub.f32 %v1799, %v1960
  %v1971 = vand.u32 2147483647, %v1970
  %v1972 = vadd.f32 %v1969, %v1971
  %v1973 = vsub.f32 %v1799, %v1965
  %v1974 = vand.u32 2147483647, %v1973
  %v1975 = vadd.f32 %v1972, %v1974
  %v1976 = vmul.f32 %v1975, %v1806
  %v1977 = vadd.f32 %v1630, %v1976
  %1978 = vmatprep.subr.mxu0 0.0
  %1979 = vmatpush1.msra.mxu0 0.0
  %1980 = vmatprep.subr.mxu0 0.0
  %1981 = vmatpush1.msra.mxu0 0.0
  %1982 = vmatprep.subr.mxu0 0.0
  %1983 = vmatpush1.msra.mxu0 0.0
  %1984 = vmatprep.subr.mxu0 0.0
  %1985 = vmatpush1.msra.mxu0 0.0
  %1986 = vmatprep.subr.mxu0 0.0
  %1987 = vmatpush1.msra.mxu0 0.0
  %1988 = vmatprep.subr.mxu0 0.0
  %1989 = vmatpush1.msra.mxu0 0.0
  %1990 = vmatprep.subr.mxu0 0.0
  %1991 = vmatpush1.msra.mxu0 0.0
  %1992 = vmatprep.subr.mxu0 0.0
  %1993 = vmatpush1.msra.mxu0 0.0
  %1994 = vmatprep.subr.mxu0 0.0
  %1995 = vmatpush1.msra.mxu0 0.0
  %1996 = vmatprep.subr.mxu0 0.0
  %1997 = vmatpush1.msra.mxu0 0.0
  %1998 = vmatprep.subr.mxu0 0.0
  %1999 = vmatpush1.msra.mxu0 0.0
  %2000 = vmatprep.subr.mxu0 0.0
  %2001 = vmatpush1.msra.mxu0 0.0
  %2002 = vmatprep.subr.mxu0 0.0
  %2003 = vmatpush1.msra.mxu0 %v25
  %2004 = vmatprep.subr.mxu0 0.0
  %2005 = vmatpush1.msra.mxu0 %v24
  %2006 = vmatprep.subr.mxu0 0.0
  %2007 = vmatpush1.msra.mxu0 %v23
  %2008 = vmatprep.subr.mxu0 0.0
  %2009 = vmatpush1.msra.mxu0 %v22
  %2010 = vmatprep.subr.mxu0 0.0
  %2011 = vmatpush2.msra.mxu0 0.0
  %2012 = vmatprep.subr.mxu0 0.0
  %2013 = vmatpush2.msra.mxu0 0.0
  %2014 = vmatprep.subr.mxu0 0.0
  %2015 = vmatpush2.msra.mxu0 0.0
  %2016 = vmatprep.subr.mxu0 0.0
  %2017 = vmatpush2.msra.mxu0 0.0
  %2018 = vmatprep.subr.mxu0 0.0
  %2019 = vmatpush2.msra.mxu0 0.0
  %2020 = vmatprep.subr.mxu0 0.0
  %2021 = vmatpush2.msra.mxu0 0.0
  %2022 = vmatprep.subr.mxu0 0.0
  %2023 = vmatpush2.msra.mxu0 0.0
  %2024 = vmatprep.subr.mxu0 0.0
  %2025 = vmatpush2.msra.mxu0 0.0
  %2026 = vmatprep.subr.mxu0 0.0
  %2027 = vmatpush2.msra.mxu0 0.0
  %2028 = vmatprep.subr.mxu0 0.0
  %2029 = vmatpush2.msra.mxu0 0.0
  %2030 = vmatprep.subr.mxu0 0.0
  %2031 = vmatpush2.msra.mxu0 0.0
  %2032 = vmatprep.subr.mxu0 0.0
  %2033 = vmatpush2.msra.mxu0 0.0
  %2034 = vmatprep.subr.mxu0 0.0
  %2035 = vmatpush2.msra.mxu0 0.0
  %2036 = vmatprep.subr.mxu0 0.0
  %2037 = vmatpush2.msra.mxu0 0.0
  %2038 = vmatprep.subr.mxu0 0.0
  %2039 = vmatpush2.msra.mxu0 0.0
  %2040 = vmatprep.subr.mxu0 0.0
  %2041 = vmatpush2.msra.mxu0 0.0
  %2042 = vmatprep.mubr.f32.mxu0 0.0
  %2043 = vmatmul.mubr.f32.gmra.mxu0 %v1817
  %v2044 = vpop.f32.mrf.mxu0
  %v2045 = vadd.f32 0.0, %v2044
  %v2046 = vpop.f32.mrf.mxu0
  %2047 = vdwg.mxu0
  %v2049 = vsel %vm79, %v1966, 0
  %2051 = vmatprep.subr.mxu0 0.0
  %2052 = vmatpush1.msra.mxu0 0.0
  %2053 = vmatprep.subr.mxu0 0.0
  %2054 = vmatpush1.msra.mxu0 0.0
  %2055 = vmatprep.subr.mxu0 0.0
  %2056 = vmatpush1.msra.mxu0 0.0
  %2057 = vmatprep.subr.mxu0 0.0
  %2058 = vmatpush1.msra.mxu0 0.0
  %2059 = vmatprep.subr.mxu0 0.0
  %2060 = vmatpush1.msra.mxu0 0.0
  %2061 = vmatprep.subr.mxu0 0.0
  %2062 = vmatpush1.msra.mxu0 0.0
  %2063 = vmatprep.subr.mxu0 0.0
  %2064 = vmatpush1.msra.mxu0 0.0
  %2065 = vmatprep.subr.mxu0 0.0
  %2066 = vmatpush1.msra.mxu0 0.0
  %2067 = vmatprep.subr.mxu0 0.0
  %2068 = vmatpush1.msra.mxu0 0.0
  %2069 = vmatprep.subr.mxu0 0.0
  %2070 = vmatpush1.msra.mxu0 0.0
  %2071 = vmatprep.subr.mxu0 0.0
  %2072 = vmatpush1.msra.mxu0 0.0
  %2073 = vmatprep.subr.mxu0 0.0
  %2074 = vmatpush1.msra.mxu0 0.0
  %2075 = vmatprep.subr.mxu0 0.0
  %2076 = vmatpush1.msra.mxu0 0.0
  %2077 = vmatprep.subr.mxu0 0.0
  %2078 = vmatpush1.msra.mxu0 0.0
  %2079 = vmatprep.subr.mxu0 0.0
  %2080 = vmatpush1.msra.mxu0 0.0
  %2081 = vmatprep.subr.mxu0 0.0
  %2082 = vmatpush1.msra.mxu0 %v20
  %2083 = vmatprep.subr.mxu0 0.0
  %2084 = vmatpush2.msra.mxu0 0.0
  %2085 = vmatprep.subr.mxu0 0.0
  %2086 = vmatpush2.msra.mxu0 0.0
  %2087 = vmatprep.subr.mxu0 0.0
  %2088 = vmatpush2.msra.mxu0 0.0
  %2089 = vmatprep.subr.mxu0 0.0
  %2090 = vmatpush2.msra.mxu0 0.0
  %2091 = vmatprep.subr.mxu0 0.0
  %2092 = vmatpush2.msra.mxu0 0.0
  %2093 = vmatprep.subr.mxu0 0.0
  %2094 = vmatpush2.msra.mxu0 0.0
  %2095 = vmatprep.subr.mxu0 0.0
  %2096 = vmatpush2.msra.mxu0 0.0
  %2097 = vmatprep.subr.mxu0 0.0
  %2098 = vmatpush2.msra.mxu0 0.0
  %2099 = vmatprep.subr.mxu0 0.0
  %2100 = vmatpush2.msra.mxu0 0.0
  %2101 = vmatprep.subr.mxu0 0.0
  %2102 = vmatpush2.msra.mxu0 0.0
  %2103 = vmatprep.subr.mxu0 0.0
  %2104 = vmatpush2.msra.mxu0 0.0
  %2105 = vmatprep.subr.mxu0 0.0
  %2106 = vmatpush2.msra.mxu0 0.0
  %2107 = vmatprep.subr.mxu0 0.0
  %2108 = vmatpush2.msra.mxu0 0.0
  %2109 = vmatprep.subr.mxu0 0.0
  %2110 = vmatpush2.msra.mxu0 0.0
  %2111 = vmatprep.subr.mxu0 0.0
  %2112 = vmatpush2.msra.mxu0 0.0
  %2113 = vmatprep.subr.mxu0 0.0
  %2114 = vmatpush2.msra.mxu0 0.0
  %2115 = vmatprep.mubr.f32.mxu0 0.0
  %2116 = vmatmul.mubr.f32.gmra.mxu0 %v2049
  %v2117 = vpop.f32.mrf.mxu0
  %v2118 = vadd.f32 %v2045, %v2117
  %v2119 = vpop.f32.mrf.mxu0
  %2120 = vdwg.mxu0
  %v2121 = vadd.f32 %v2118, %v1802
  %v2122 = vxor.u32 %v2121, 2147483648
  %v2123 = vmul.f32 %v2122, 1.442695
  %v2124 = vpow.pop %v2123
  %v2125 = vadd.f32 %v2124, 1.0
  %v2126 = vrcp.pop %v2125
  %v2127 = vmul.f32 1.0, %v2126
  %v2128 = vtanh.pop %v2121
  %v2129 = vmul.f32 %v2127, %v1792
  %2131 = vrot.lane.b32.xlu0 %v2128, 64
  %v2132 = vpop.permute.xlu0 %2131
  %v2134 = vmul.f32 %v2127, %v2132
  %2136 = vrot.lane.b32.xlu0 %v2134, 32
  %v2137 = vpop.permute.xlu0 %2136
  %v2139 = vadd.f32 %v2129, %v2137
  %v2140 = vtanh.pop %v2139
  %2142 = vrot.lane.b32.xlu0 %v2140, 64
  %v2143 = vpop.permute.xlu0 %2142
  %v2145 = vmul.f32 %v2127, %v2143
  %v2146 = vld [vmem:[%s0 + $0x18] sm:$0xff]
  %v2147 = vld [vmem:[%s0 + $0x58] sm:$0xff]
  %v2148 = vld [vmem:[#allocation2 + $0x18] sm:$0xff]
  %v2149 = vld [vmem:[#allocation3 + $0x18] sm:$0xff]
  %v2150 = vld [vmem:[#allocation4 + $0x18] sm:$0xff]
  %v2151 = vld [vmem:[#allocation5 + $0x18] sm:$0xff]
  %v2152 = vld [vmem:[#allocation6 + $0x18] sm:$0xff]
  %v2153 = vld [vmem:[#allocation7 + $0x18] sm:$0xff]
  %v2154 = vsub.f32 1.0, %v2147
  %v2155 = vmul.f32 %v2147, %v2146
  %2157 = vrot.lane.b32.xlu0 %v2148, 96
  %v2158 = vpop.permute.xlu0 %2157
  %v2160 = vmul.f32 %v2145, %v2158
  %2162 = vrot.lane.b32.xlu0 %v2160, 32
  %v2163 = vpop.permute.xlu0 %2162
  %v2164 = vsel %vm922, %v2163, 0
  %2166 = vmatprep.subr.mxu0 0.0
  %2167 = vmatpush1.msra.mxu0 0.0
  %2168 = vmatprep.subr.mxu0 0.0
  %2169 = vmatpush1.msra.mxu0 0.0
  %2170 = vmatprep.subr.mxu0 0.0
  %2171 = vmatpush1.msra.mxu0 0.0
  %2172 = vmatprep.subr.mxu0 0.0
  %2173 = vmatpush1.msra.mxu0 0.0
  %2174 = vmatprep.subr.mxu0 0.0
  %2175 = vmatpush1.msra.mxu0 0.0
  %2176 = vmatprep.subr.mxu0 0.0
  %2177 = vmatpush1.msra.mxu0 0.0
  %2178 = vmatprep.subr.mxu0 0.0
  %2179 = vmatpush1.msra.mxu0 0.0
  %2180 = vmatprep.subr.mxu0 0.0
  %2181 = vmatpush1.msra.mxu0 0.0
  %2182 = vmatprep.subr.mxu0 0.0
  %2183 = vmatpush1.msra.mxu0 0.0
  %2184 = vmatprep.subr.mxu0 0.0
  %2185 = vmatpush1.msra.mxu0 0.0
  %2186 = vmatprep.subr.mxu0 0.0
  %2187 = vmatpush1.msra.mxu0 0.0
  %2188 = vmatprep.subr.mxu0 0.0
  %2189 = vmatpush1.msra.mxu0 0.0
  %2190 = vmatprep.subr.mxu0 0.0
  %2191 = vmatpush1.msra.mxu0 %v33
  %2192 = vmatprep.subr.mxu0 0.0
  %2193 = vmatpush1.msra.mxu0 %v32
  %2194 = vmatprep.subr.mxu0 0.0
  %2195 = vmatpush1.msra.mxu0 %v31
  %2196 = vmatprep.subr.mxu0 0.0
  %2197 = vmatpush1.msra.mxu0 %v30
  %2198 = vmatprep.subr.mxu0 0.0
  %2199 = vmatpush2.msra.mxu0 0.0
  %2200 = vmatprep.subr.mxu0 0.0
  %2201 = vmatpush2.msra.mxu0 0.0
  %2202 = vmatprep.subr.mxu0 0.0
  %2203 = vmatpush2.msra.mxu0 0.0
  %2204 = vmatprep.subr.mxu0 0.0
  %2205 = vmatpush2.msra.mxu0 0.0
  %2206 = vmatprep.subr.mxu0 0.0
  %2207 = vmatpush2.msra.mxu0 0.0
  %2208 = vmatprep.subr.mxu0 0.0
  %2209 = vmatpush2.msra.mxu0 0.0
  %2210 = vmatprep.subr.mxu0 0.0
  %2211 = vmatpush2.msra.mxu0 0.0
  %2212 = vmatprep.subr.mxu0 0.0
  %2213 = vmatpush2.msra.mxu0 0.0
  %2214 = vmatprep.subr.mxu0 0.0
  %2215 = vmatpush2.msra.mxu0 0.0
  %2216 = vmatprep.subr.mxu0 0.0
  %2217 = vmatpush2.msra.mxu0 0.0
  %2218 = vmatprep.subr.mxu0 0.0
  %2219 = vmatpush2.msra.mxu0 0.0
  %2220 = vmatprep.subr.mxu0 0.0
  %2221 = vmatpush2.msra.mxu0 0.0
  %2222 = vmatprep.subr.mxu0 0.0
  %2223 = vmatpush2.msra.mxu0 0.0
  %2224 = vmatprep.subr.mxu0 0.0
  %2225 = vmatpush2.msra.mxu0 0.0
  %2226 = vmatprep.subr.mxu0 0.0
  %2227 = vmatpush2.msra.mxu0 0.0
  %2228 = vmatprep.subr.mxu0 0.0
  %2229 = vmatpush2.msra.mxu0 0.0
  %2230 = vmatprep.mubr.f32.mxu0 0.0
  %2231 = vmatmul.mubr.f32.gmra.mxu0 %v2164
  %v2232 = vpop.f32.mrf.mxu0
  %v2233 = vadd.f32 %v1110, %v2232
  %v2234 = vpop.f32.mrf.mxu0
  %2235 = vdwg.mxu0
  %v2236 = vmul.f32 %v2154, %v2233
  %v2238 = vsel %vm79, %v2236, 0
  %2240 = vmatprep.subr.mxu0 0.0
  %2241 = vmatpush1.msra.mxu0 0.0
  %2242 = vmatprep.subr.mxu0 0.0
  %2243 = vmatpush1.msra.mxu0 0.0
  %2244 = vmatprep.subr.mxu0 0.0
  %2245 = vmatpush1.msra.mxu0 0.0
  %2246 = vmatprep.subr.mxu0 0.0
  %2247 = vmatpush1.msra.mxu0 0.0
  %2248 = vmatprep.subr.mxu0 0.0
  %2249 = vmatpush1.msra.mxu0 0.0
  %2250 = vmatprep.subr.mxu0 0.0
  %2251 = vmatpush1.msra.mxu0 0.0
  %2252 = vmatprep.subr.mxu0 0.0
  %2253 = vmatpush1.msra.mxu0 0.0
  %2254 = vmatprep.subr.mxu0 0.0
  %2255 = vmatpush1.msra.mxu0 0.0
  %2256 = vmatprep.subr.mxu0 0.0
  %2257 = vmatpush1.msra.mxu0 0.0
  %2258 = vmatprep.subr.mxu0 0.0
  %2259 = vmatpush1.msra.mxu0 0.0
  %2260 = vmatprep.subr.mxu0 0.0
  %2261 = vmatpush1.msra.mxu0 0.0
  %2262 = vmatprep.subr.mxu0 0.0
  %2263 = vmatpush1.msra.mxu0 0.0
  %2264 = vmatprep.subr.mxu0 0.0
  %2265 = vmatpush1.msra.mxu0 0.0
  %2266 = vmatprep.subr.mxu0 0.0
  %2267 = vmatpush1.msra.mxu0 0.0
  %2268 = vmatprep.subr.mxu0 0.0
  %2269 = vmatpush1.msra.mxu0 0.0
  %2270 = vmatprep.subr.mxu0 0.0
  %2271 = vmatpush1.msra.mxu0 %v34
  %2272 = vmatprep.subr.mxu0 0.0
  %2273 = vmatpush2.msra.mxu0 0.0
  %2274 = vmatprep.subr.mxu0 0.0
  %2275 = vmatpush2.msra.mxu0 0.0
  %2276 = vmatprep.subr.mxu0 0.0
  %2277 = vmatpush2.msra.mxu0 0.0
  %2278 = vmatprep.subr.mxu0 0.0
  %2279 = vmatpush2.msra.mxu0 0.0
  %2280 = vmatprep.subr.mxu0 0.0
  %2281 = vmatpush2.msra.mxu0 0.0
  %2282 = vmatprep.subr.mxu0 0.0
  %2283 = vmatpush2.msra.mxu0 0.0
  %2284 = vmatprep.subr.mxu0 0.0
  %2285 = vmatpush2.msra.mxu0 0.0
  %2286 = vmatprep.subr.mxu0 0.0
  %2287 = vmatpush2.msra.mxu0 0.0
  %2288 = vmatprep.subr.mxu0 0.0
  %2289 = vmatpush2.msra.mxu0 0.0
  %2290 = vmatprep.subr.mxu0 0.0
  %2291 = vmatpush2.msra.mxu0 0.0
  %2292 = vmatprep.subr.mxu0 0.0
  %2293 = vmatpush2.msra.mxu0 0.0
  %2294 = vmatprep.subr.mxu0 0.0
  %2295 = vmatpush2.msra.mxu0 0.0
  %2296 = vmatprep.subr.mxu0 0.0
  %2297 = vmatpush2.msra.mxu0 0.0
  %2298 = vmatprep.subr.mxu0 0.0
  %2299 = vmatpush2.msra.mxu0 0.0
  %2300 = vmatprep.subr.mxu0 0.0
  %2301 = vmatpush2.msra.mxu0 0.0
  %2302 = vmatprep.subr.mxu0 0.0
  %2303 = vmatpush2.msra.mxu0 0.0
  %2304 = vmatprep.mubr.f32.mxu0 0.0
  %2305 = vmatmul.mubr.f32.gmra.mxu0 %v2238
  %v2306 = vpop.f32.mrf.mxu0
  %v2307 = vadd.f32 %v2152, %v2306
  %v2308 = vpop.f32.mrf.mxu0
  %2309 = vdwg.mxu0
  %v2310 = vmul.f32 %v2150, %v2307
  %v2311 = vmul.f32 %v2151, %v2233
  %v2312 = vadd.f32 %v2310, %v2311
  %v2313 = vmul.f32 %v2154, %v2312
  %v2314 = vadd.f32 %v2155, %v2313
  %v2315 = vsub.f32 %v2146, %v2233
  %v2316 = vand.u32 2147483647, %v2315
  %v2317 = vsub.f32 %v2146, %v2307
  %v2318 = vand.u32 2147483647, %v2317
  %v2319 = vadd.f32 %v2316, %v2318
  %v2320 = vsub.f32 %v2146, %v2312
  %v2321 = vand.u32 2147483647, %v2320
  %v2322 = vadd.f32 %v2319, %v2321
  %v2323 = vmul.f32 %v2322, %v2153
  %v2324 = vadd.f32 %v1977, %v2323
  %2325 = vmatprep.subr.mxu0 0.0
  %2326 = vmatpush1.msra.mxu0 0.0
  %2327 = vmatprep.subr.mxu0 0.0
  %2328 = vmatpush1.msra.mxu0 0.0
  %2329 = vmatprep.subr.mxu0 0.0
  %2330 = vmatpush1.msra.mxu0 0.0
  %2331 = vmatprep.subr.mxu0 0.0
  %2332 = vmatpush1.msra.mxu0 0.0
  %2333 = vmatprep.subr.mxu0 0.0
  %2334 = vmatpush1.msra.mxu0 0.0
  %2335 = vmatprep.subr.mxu0 0.0
  %2336 = vmatpush1.msra.mxu0 0.0
  %2337 = vmatprep.subr.mxu0 0.0
  %2338 = vmatpush1.msra.mxu0 0.0
  %2339 = vmatprep.subr.mxu0 0.0
  %2340 = vmatpush1.msra.mxu0 0.0
  %2341 = vmatprep.subr.mxu0 0.0
  %2342 = vmatpush1.msra.mxu0 0.0
  %2343 = vmatprep.subr.mxu0 0.0
  %2344 = vmatpush1.msra.mxu0 0.0
  %2345 = vmatprep.subr.mxu0 0.0
  %2346 = vmatpush1.msra.mxu0 0.0
  %2347 = vmatprep.subr.mxu0 0.0
  %2348 = vmatpush1.msra.mxu0 0.0
  %2349 = vmatprep.subr.mxu0 0.0
  %2350 = vmatpush1.msra.mxu0 %v25
  %2351 = vmatprep.subr.mxu0 0.0
  %2352 = vmatpush1.msra.mxu0 %v24
  %2353 = vmatprep.subr.mxu0 0.0
  %2354 = vmatpush1.msra.mxu0 %v23
  %2355 = vmatprep.subr.mxu0 0.0
  %2356 = vmatpush1.msra.mxu0 %v22
  %2357 = vmatprep.subr.mxu0 0.0
  %2358 = vmatpush2.msra.mxu0 0.0
  %2359 = vmatprep.subr.mxu0 0.0
  %2360 = vmatpush2.msra.mxu0 0.0
  %2361 = vmatprep.subr.mxu0 0.0
  %2362 = vmatpush2.msra.mxu0 0.0
  %2363 = vmatprep.subr.mxu0 0.0
  %2364 = vmatpush2.msra.mxu0 0.0
  %2365 = vmatprep.subr.mxu0 0.0
  %2366 = vmatpush2.msra.mxu0 0.0
  %2367 = vmatprep.subr.mxu0 0.0
  %2368 = vmatpush2.msra.mxu0 0.0
  %2369 = vmatprep.subr.mxu0 0.0
  %2370 = vmatpush2.msra.mxu0 0.0
  %2371 = vmatprep.subr.mxu0 0.0
  %2372 = vmatpush2.msra.mxu0 0.0
  %2373 = vmatprep.subr.mxu0 0.0
  %2374 = vmatpush2.msra.mxu0 0.0
  %2375 = vmatprep.subr.mxu0 0.0
  %2376 = vmatpush2.msra.mxu0 0.0
  %2377 = vmatprep.subr.mxu0 0.0
  %2378 = vmatpush2.msra.mxu0 0.0
  %2379 = vmatprep.subr.mxu0 0.0
  %2380 = vmatpush2.msra.mxu0 0.0
  %2381 = vmatprep.subr.mxu0 0.0
  %2382 = vmatpush2.msra.mxu0 0.0
  %2383 = vmatprep.subr.mxu0 0.0
  %2384 = vmatpush2.msra.mxu0 0.0
  %2385 = vmatprep.subr.mxu0 0.0
  %2386 = vmatpush2.msra.mxu0 0.0
  %2387 = vmatprep.subr.mxu0 0.0
  %2388 = vmatpush2.msra.mxu0 0.0
  %2389 = vmatprep.mubr.f32.mxu0 0.0
  %2390 = vmatmul.mubr.f32.gmra.mxu0 %v2164
  %v2391 = vpop.f32.mrf.mxu0
  %v2392 = vadd.f32 0.0, %v2391
  %v2393 = vpop.f32.mrf.mxu0
  %2394 = vdwg.mxu0
  %v2396 = vsel %vm79, %v2313, 0
  %2398 = vmatprep.subr.mxu0 0.0
  %2399 = vmatpush1.msra.mxu0 0.0
  %2400 = vmatprep.subr.mxu0 0.0
  %2401 = vmatpush1.msra.mxu0 0.0
  %2402 = vmatprep.subr.mxu0 0.0
  %2403 = vmatpush1.msra.mxu0 0.0
  %2404 = vmatprep.subr.mxu0 0.0
  %2405 = vmatpush1.msra.mxu0 0.0
  %2406 = vmatprep.subr.mxu0 0.0
  %2407 = vmatpush1.msra.mxu0 0.0
  %2408 = vmatprep.subr.mxu0 0.0
  %2409 = vmatpush1.msra.mxu0 0.0
  %2410 = vmatprep.subr.mxu0 0.0
  %2411 = vmatpush1.msra.mxu0 0.0
  %2412 = vmatprep.subr.mxu0 0.0
  %2413 = vmatpush1.msra.mxu0 0.0
  %2414 = vmatprep.subr.mxu0 0.0
  %2415 = vmatpush1.msra.mxu0 0.0
  %2416 = vmatprep.subr.mxu0 0.0
  %2417 = vmatpush1.msra.mxu0 0.0
  %2418 = vmatprep.subr.mxu0 0.0
  %2419 = vmatpush1.msra.mxu0 0.0
  %2420 = vmatprep.subr.mxu0 0.0
  %2421 = vmatpush1.msra.mxu0 0.0
  %2422 = vmatprep.subr.mxu0 0.0
  %2423 = vmatpush1.msra.mxu0 0.0
  %2424 = vmatprep.subr.mxu0 0.0
  %2425 = vmatpush1.msra.mxu0 0.0
  %2426 = vmatprep.subr.mxu0 0.0
  %2427 = vmatpush1.msra.mxu0 0.0
  %2428 = vmatprep.subr.mxu0 0.0
  %2429 = vmatpush1.msra.mxu0 %v20
  %2430 = vmatprep.subr.mxu0 0.0
  %2431 = vmatpush2.msra.mxu0 0.0
  %2432 = vmatprep.subr.mxu0 0.0
  %2433 = vmatpush2.msra.mxu0 0.0
  %2434 = vmatprep.subr.mxu0 0.0
  %2435 = vmatpush2.msra.mxu0 0.0
  %2436 = vmatprep.subr.mxu0 0.0
  %2437 = vmatpush2.msra.mxu0 0.0
  %2438 = vmatprep.subr.mxu0 0.0
  %2439 = vmatpush2.msra.mxu0 0.0
  %2440 = vmatprep.subr.mxu0 0.0
  %2441 = vmatpush2.msra.mxu0 0.0
  %2442 = vmatprep.subr.mxu0 0.0
  %2443 = vmatpush2.msra.mxu0 0.0
  %2444 = vmatprep.subr.mxu0 0.0
  %2445 = vmatpush2.msra.mxu0 0.0
  %2446 = vmatprep.subr.mxu0 0.0
  %2447 = vmatpush2.msra.mxu0 0.0
  %2448 = vmatprep.subr.mxu0 0.0
  %2449 = vmatpush2.msra.mxu0 0.0
  %2450 = vmatprep.subr.mxu0 0.0
  %2451 = vmatpush2.msra.mxu0 0.0
  %2452 = vmatprep.subr.mxu0 0.0
  %2453 = vmatpush2.msra.mxu0 0.0
  %2454 = vmatprep.subr.mxu0 0.0
  %2455 = vmatpush2.msra.mxu0 0.0
  %2456 = vmatprep.subr.mxu0 0.0
  %2457 = vmatpush2.msra.mxu0 0.0
  %2458 = vmatprep.subr.mxu0 0.0
  %2459 = vmatpush2.msra.mxu0 0.0
  %2460 = vmatprep.subr.mxu0 0.0
  %2461 = vmatpush2.msra.mxu0 0.0
  %2462 = vmatprep.mubr.f32.mxu0 0.0
  %2463 = vmatmul.mubr.f32.gmra.mxu0 %v2396
  %v2464 = vpop.f32.mrf.mxu0
  %v2465 = vadd.f32 %v2392, %v2464
  %v2466 = vpop.f32.mrf.mxu0
  %2467 = vdwg.mxu0
  %v2468 = vadd.f32 %v2465, %v2149
  %v2469 = vxor.u32 %v2468, 2147483648
  %v2470 = vmul.f32 %v2469, 1.442695
  %v2471 = vpow.pop %v2470
  %v2472 = vadd.f32 %v2471, 1.0
  %v2473 = vrcp.pop %v2472
  %v2474 = vmul.f32 1.0, %v2473
  %v2475 = vtanh.pop %v2468
  %v2476 = vmul.f32 %v2474, %v2139
  %2478 = vrot.lane.b32.xlu0 %v2475, 64
  %v2479 = vpop.permute.xlu0 %2478
  %v2481 = vmul.f32 %v2474, %v2479
  %2483 = vrot.lane.b32.xlu0 %v2481, 32
  %v2484 = vpop.permute.xlu0 %2483
  %v2486 = vadd.f32 %v2476, %v2484
  %v2487 = vtanh.pop %v2486
  %2489 = vrot.lane.b32.xlu0 %v2487, 64
  %v2490 = vpop.permute.xlu0 %2489
  %v2492 = vmul.f32 %v2474, %v2490
  %v2493 = vld [vmem:[%s0 + $0x20] sm:$0xff]
  %v2494 = vld [vmem:[%s0 + $0x60] sm:$0xff]
  %v2495 = vld [vmem:[#allocation2 + $0x20] sm:$0xff]
  %v2496 = vld [vmem:[#allocation3 + $0x20] sm:$0xff]
  %v2497 = vld [vmem:[#allocation4 + $0x20] sm:$0xff]
  %v2498 = vld [vmem:[#allocation5 + $0x20] sm:$0xff]
  %v2499 = vld [vmem:[#allocation6 + $0x20] sm:$0xff]
  %v2500 = vld [vmem:[#allocation7 + $0x20] sm:$0xff]
  %v2501 = vsub.f32 1.0, %v2494
  %v2502 = vmul.f32 %v2494, %v2493
  %2504 = vrot.lane.b32.xlu0 %v2495, 96
  %v2505 = vpop.permute.xlu0 %2504
  %v2507 = vmul.f32 %v2492, %v2505
  %2509 = vrot.lane.b32.xlu0 %v2507, 32
  %v2510 = vpop.permute.xlu0 %2509
  %v2511 = vsel %vm922, %v2510, 0
  %2513 = vmatprep.subr.mxu0 0.0
  %2514 = vmatpush1.msra.mxu0 0.0
  %2515 = vmatprep.subr.mxu0 0.0
  %2516 = vmatpush1.msra.mxu0 0.0
  %2517 = vmatprep.subr.mxu0 0.0
  %2518 = vmatpush1.msra.mxu0 0.0
  %2519 = vmatprep.subr.mxu0 0.0
  %2520 = vmatpush1.msra.mxu0 0.0
  %2521 = vmatprep.subr.mxu0 0.0
  %2522 = vmatpush1.msra.mxu0 0.0
  %2523 = vmatprep.subr.mxu0 0.0
  %2524 = vmatpush1.msra.mxu0 0.0
  %2525 = vmatprep.subr.mxu0 0.0
  %2526 = vmatpush1.msra.mxu0 0.0
  %2527 = vmatprep.subr.mxu0 0.0
  %2528 = vmatpush1.msra.mxu0 0.0
  %2529 = vmatprep.subr.mxu0 0.0
  %2530 = vmatpush1.msra.mxu0 0.0
  %2531 = vmatprep.subr.mxu0 0.0
  %2532 = vmatpush1.msra.mxu0 0.0
  %2533 = vmatprep.subr.mxu0 0.0
  %2534 = vmatpush1.msra.mxu0 0.0
  %2535 = vmatprep.subr.mxu0 0.0
  %2536 = vmatpush1.msra.mxu0 0.0
  %2537 = vmatprep.subr.mxu0 0.0
  %2538 = vmatpush1.msra.mxu0 %v33
  %2539 = vmatprep.subr.mxu0 0.0
  %2540 = vmatpush1.msra.mxu0 %v32
  %2541 = vmatprep.subr.mxu0 0.0
  %2542 = vmatpush1.msra.mxu0 %v31
  %2543 = vmatprep.subr.mxu0 0.0
  %2544 = vmatpush1.msra.mxu0 %v30
  %2545 = vmatprep.subr.mxu0 0.0
  %2546 = vmatpush2.msra.mxu0 0.0
  %2547 = vmatprep.subr.mxu0 0.0
  %2548 = vmatpush2.msra.mxu0 0.0
  %2549 = vmatprep.subr.mxu0 0.0
  %2550 = vmatpush2.msra.mxu0 0.0
  %2551 = vmatprep.subr.mxu0 0.0
  %2552 = vmatpush2.msra.mxu0 0.0
  %2553 = vmatprep.subr.mxu0 0.0
  %2554 = vmatpush2.msra.mxu0 0.0
  %2555 = vmatprep.subr.mxu0 0.0
  %2556 = vmatpush2.msra.mxu0 0.0
  %2557 = vmatprep.subr.mxu0 0.0
  %2558 = vmatpush2.msra.mxu0 0.0
  %2559 = vmatprep.subr.mxu0 0.0
  %2560 = vmatpush2.msra.mxu0 0.0
  %2561 = vmatprep.subr.mxu0 0.0
  %2562 = vmatpush2.msra.mxu0 0.0
  %2563 = vmatprep.subr.mxu0 0.0
  %2564 = vmatpush2.msra.mxu0 0.0
  %2565 = vmatprep.subr.mxu0 0.0
  %2566 = vmatpush2.msra.mxu0 0.0
  %2567 = vmatprep.subr.mxu0 0.0
  %2568 = vmatpush2.msra.mxu0 0.0
  %2569 = vmatprep.subr.mxu0 0.0
  %2570 = vmatpush2.msra.mxu0 0.0
  %2571 = vmatprep.subr.mxu0 0.0
  %2572 = vmatpush2.msra.mxu0 0.0
  %2573 = vmatprep.subr.mxu0 0.0
  %2574 = vmatpush2.msra.mxu0 0.0
  %2575 = vmatprep.subr.mxu0 0.0
  %2576 = vmatpush2.msra.mxu0 0.0
  %2577 = vmatprep.mubr.f32.mxu0 0.0
  %2578 = vmatmul.mubr.f32.gmra.mxu0 %v2511
  %v2579 = vpop.f32.mrf.mxu0
  %v2580 = vadd.f32 %v1110, %v2579
  %v2581 = vpop.f32.mrf.mxu0
  %2582 = vdwg.mxu0
  %v2583 = vmul.f32 %v2501, %v2580
  %v2585 = vsel %vm79, %v2583, 0
  %2587 = vmatprep.subr.mxu0 0.0
  %2588 = vmatpush1.msra.mxu0 0.0
  %2589 = vmatprep.subr.mxu0 0.0
  %2590 = vmatpush1.msra.mxu0 0.0
  %2591 = vmatprep.subr.mxu0 0.0
  %2592 = vmatpush1.msra.mxu0 0.0
  %2593 = vmatprep.subr.mxu0 0.0
  %2594 = vmatpush1.msra.mxu0 0.0
  %2595 = vmatprep.subr.mxu0 0.0
  %2596 = vmatpush1.msra.mxu0 0.0
  %2597 = vmatprep.subr.mxu0 0.0
  %2598 = vmatpush1.msra.mxu0 0.0
  %2599 = vmatprep.subr.mxu0 0.0
  %2600 = vmatpush1.msra.mxu0 0.0
  %2601 = vmatprep.subr.mxu0 0.0
  %2602 = vmatpush1.msra.mxu0 0.0
  %2603 = vmatprep.subr.mxu0 0.0
  %2604 = vmatpush1.msra.mxu0 0.0
  %2605 = vmatprep.subr.mxu0 0.0
  %2606 = vmatpush1.msra.mxu0 0.0
  %2607 = vmatprep.subr.mxu0 0.0
  %2608 = vmatpush1.msra.mxu0 0.0
  %2609 = vmatprep.subr.mxu0 0.0
  %2610 = vmatpush1.msra.mxu0 0.0
  %2611 = vmatprep.subr.mxu0 0.0
  %2612 = vmatpush1.msra.mxu0 0.0
  %2613 = vmatprep.subr.mxu0 0.0
  %2614 = vmatpush1.msra.mxu0 0.0
  %2615 = vmatprep.subr.mxu0 0.0
  %2616 = vmatpush1.msra.mxu0 0.0
  %2617 = vmatprep.subr.mxu0 0.0
  %2618 = vmatpush1.msra.mxu0 %v34
  %2619 = vmatprep.subr.mxu0 0.0
  %2620 = vmatpush2.msra.mxu0 0.0
  %2621 = vmatprep.subr.mxu0 0.0
  %2622 = vmatpush2.msra.mxu0 0.0
  %2623 = vmatprep.subr.mxu0 0.0
  %2624 = vmatpush2.msra.mxu0 0.0
  %2625 = vmatprep.subr.mxu0 0.0
  %2626 = vmatpush2.msra.mxu0 0.0
  %2627 = vmatprep.subr.mxu0 0.0
  %2628 = vmatpush2.msra.mxu0 0.0
  %2629 = vmatprep.subr.mxu0 0.0
  %2630 = vmatpush2.msra.mxu0 0.0
  %2631 = vmatprep.subr.mxu0 0.0
  %2632 = vmatpush2.msra.mxu0 0.0
  %2633 = vmatprep.subr.mxu0 0.0
  %2634 = vmatpush2.msra.mxu0 0.0
  %2635 = vmatprep.subr.mxu0 0.0
  %2636 = vmatpush2.msra.mxu0 0.0
  %2637 = vmatprep.subr.mxu0 0.0
  %2638 = vmatpush2.msra.mxu0 0.0
  %2639 = vmatprep.subr.mxu0 0.0
  %2640 = vmatpush2.msra.mxu0 0.0
  %2641 = vmatprep.subr.mxu0 0.0
  %2642 = vmatpush2.msra.mxu0 0.0
  %2643 = vmatprep.subr.mxu0 0.0
  %2644 = vmatpush2.msra.mxu0 0.0
  %2645 = vmatprep.subr.mxu0 0.0
  %2646 = vmatpush2.msra.mxu0 0.0
  %2647 = vmatprep.subr.mxu0 0.0
  %2648 = vmatpush2.msra.mxu0 0.0
  %2649 = vmatprep.subr.mxu0 0.0
  %2650 = vmatpush2.msra.mxu0 0.0
  %2651 = vmatprep.mubr.f32.mxu0 0.0
  %2652 = vmatmul.mubr.f32.gmra.mxu0 %v2585
  %v2653 = vpop.f32.mrf.mxu0
  %v2654 = vadd.f32 %v2499, %v2653
  %v2655 = vpop.f32.mrf.mxu0
  %2656 = vdwg.mxu0
  %v2657 = vmul.f32 %v2497, %v2654
  %v2658 = vmul.f32 %v2498, %v2580
  %v2659 = vadd.f32 %v2657, %v2658
  %v2660 = vmul.f32 %v2501, %v2659
  %v2661 = vadd.f32 %v2502, %v2660
  %v2662 = vsub.f32 %v2493, %v2580
  %v2663 = vand.u32 2147483647, %v2662
  %v2664 = vsub.f32 %v2493, %v2654
  %v2665 = vand.u32 2147483647, %v2664
  %v2666 = vadd.f32 %v2663, %v2665
  %v2667 = vsub.f32 %v2493, %v2659
  %v2668 = vand.u32 2147483647, %v2667
  %v2669 = vadd.f32 %v2666, %v2668
  %v2670 = vmul.f32 %v2669, %v2500
  %v2671 = vadd.f32 %v2324, %v2670
  %2672 = vmatprep.subr.mxu0 0.0
  %2673 = vmatpush1.msra.mxu0 0.0
  %2674 = vmatprep.subr.mxu0 0.0
  %2675 = vmatpush1.msra.mxu0 0.0
  %2676 = vmatprep.subr.mxu0 0.0
  %2677 = vmatpush1.msra.mxu0 0.0
  %2678 = vmatprep.subr.mxu0 0.0
  %2679 = vmatpush1.msra.mxu0 0.0
  %2680 = vmatprep.subr.mxu0 0.0
  %2681 = vmatpush1.msra.mxu0 0.0
  %2682 = vmatprep.subr.mxu0 0.0
  %2683 = vmatpush1.msra.mxu0 0.0
  %2684 = vmatprep.subr.mxu0 0.0
  %2685 = vmatpush1.msra.mxu0 0.0
  %2686 = vmatprep.subr.mxu0 0.0
  %2687 = vmatpush1.msra.mxu0 0.0
  %2688 = vmatprep.subr.mxu0 0.0
  %2689 = vmatpush1.msra.mxu0 0.0
  %2690 = vmatprep.subr.mxu0 0.0
  %2691 = vmatpush1.msra.mxu0 0.0
  %2692 = vmatprep.subr.mxu0 0.0
  %2693 = vmatpush1.msra.mxu0 0.0
  %2694 = vmatprep.subr.mxu0 0.0
  %2695 = vmatpush1.msra.mxu0 0.0
  %2696 = vmatprep.subr.mxu0 0.0
  %2697 = vmatpush1.msra.mxu0 %v25
  %2698 = vmatprep.subr.mxu0 0.0
  %2699 = vmatpush1.msra.mxu0 %v24
  %2700 = vmatprep.subr.mxu0 0.0
  %2701 = vmatpush1.msra.mxu0 %v23
  %2702 = vmatprep.subr.mxu0 0.0
  %2703 = vmatpush1.msra.mxu0 %v22
  %2704 = vmatprep.subr.mxu0 0.0
  %2705 = vmatpush2.msra.mxu0 0.0
  %2706 = vmatprep.subr.mxu0 0.0
  %2707 = vmatpush2.msra.mxu0 0.0
  %2708 = vmatprep.subr.mxu0 0.0
  %2709 = vmatpush2.msra.mxu0 0.0
  %2710 = vmatprep.subr.mxu0 0.0
  %2711 = vmatpush2.msra.mxu0 0.0
  %2712 = vmatprep.subr.mxu0 0.0
  %2713 = vmatpush2.msra.mxu0 0.0
  %2714 = vmatprep.subr.mxu0 0.0
  %2715 = vmatpush2.msra.mxu0 0.0
  %2716 = vmatprep.subr.mxu0 0.0
  %2717 = vmatpush2.msra.mxu0 0.0
  %2718 = vmatprep.subr.mxu0 0.0
  %2719 = vmatpush2.msra.mxu0 0.0
  %2720 = vmatprep.subr.mxu0 0.0
  %2721 = vmatpush2.msra.mxu0 0.0
  %2722 = vmatprep.subr.mxu0 0.0
  %2723 = vmatpush2.msra.mxu0 0.0
  %2724 = vmatprep.subr.mxu0 0.0
  %2725 = vmatpush2.msra.mxu0 0.0
  %2726 = vmatprep.subr.mxu0 0.0
  %2727 = vmatpush2.msra.mxu0 0.0
  %2728 = vmatprep.subr.mxu0 0.0
  %2729 = vmatpush2.msra.mxu0 0.0
  %2730 = vmatprep.subr.mxu0 0.0
  %2731 = vmatpush2.msra.mxu0 0.0
  %2732 = vmatprep.subr.mxu0 0.0
  %2733 = vmatpush2.msra.mxu0 0.0
  %2734 = vmatprep.subr.mxu0 0.0
  %2735 = vmatpush2.msra.mxu0 0.0
  %2736 = vmatprep.mubr.f32.mxu0 0.0
  %2737 = vmatmul.mubr.f32.gmra.mxu0 %v2511
  %v2738 = vpop.f32.mrf.mxu0
  %v2739 = vadd.f32 0.0, %v2738
  %v2740 = vpop.f32.mrf.mxu0
  %2741 = vdwg.mxu0
  %v2743 = vsel %vm79, %v2660, 0
  %2745 = vmatprep.subr.mxu0 0.0
  %2746 = vmatpush1.msra.mxu0 0.0
  %2747 = vmatprep.subr.mxu0 0.0
  %2748 = vmatpush1.msra.mxu0 0.0
  %2749 = vmatprep.subr.mxu0 0.0
  %2750 = vmatpush1.msra.mxu0 0.0
  %2751 = vmatprep.subr.mxu0 0.0
  %2752 = vmatpush1.msra.mxu0 0.0
  %2753 = vmatprep.subr.mxu0 0.0
  %2754 = vmatpush1.msra.mxu0 0.0
  %2755 = vmatprep.subr.mxu0 0.0
  %2756 = vmatpush1.msra.mxu0 0.0
  %2757 = vmatprep.subr.mxu0 0.0
  %2758 = vmatpush1.msra.mxu0 0.0
  %2759 = vmatprep.subr.mxu0 0.0
  %2760 = vmatpush1.msra.mxu0 0.0
  %2761 = vmatprep.subr.mxu0 0.0
  %2762 = vmatpush1.msra.mxu0 0.0
  %2763 = vmatprep.subr.mxu0 0.0
  %2764 = vmatpush1.msra.mxu0 0.0
  %2765 = vmatprep.subr.mxu0 0.0
  %2766 = vmatpush1.msra.mxu0 0.0
  %2767 = vmatprep.subr.mxu0 0.0
  %2768 = vmatpush1.msra.mxu0 0.0
  %2769 = vmatprep.subr.mxu0 0.0
  %2770 = vmatpush1.msra.mxu0 0.0
  %2771 = vmatprep.subr.mxu0 0.0
  %2772 = vmatpush1.msra.mxu0 0.0
  %2773 = vmatprep.subr.mxu0 0.0
  %2774 = vmatpush1.msra.mxu0 0.0
  %2775 = vmatprep.subr.mxu0 0.0
  %2776 = vmatpush1.msra.mxu0 %v20
  %2777 = vmatprep.subr.mxu0 0.0
  %2778 = vmatpush2.msra.mxu0 0.0
  %2779 = vmatprep.subr.mxu0 0.0
  %2780 = vmatpush2.msra.mxu0 0.0
  %2781 = vmatprep.subr.mxu0 0.0
  %2782 = vmatpush2.msra.mxu0 0.0
  %2783 = vmatprep.subr.mxu0 0.0
  %2784 = vmatpush2.msra.mxu0 0.0
  %2785 = vmatprep.subr.mxu0 0.0
  %2786 = vmatpush2.msra.mxu0 0.0
  %2787 = vmatprep.subr.mxu0 0.0
  %2788 = vmatpush2.msra.mxu0 0.0
  %2789 = vmatprep.subr.mxu0 0.0
  %2790 = vmatpush2.msra.mxu0 0.0
  %2791 = vmatprep.subr.mxu0 0.0
  %2792 = vmatpush2.msra.mxu0 0.0
  %2793 = vmatprep.subr.mxu0 0.0
  %2794 = vmatpush2.msra.mxu0 0.0
  %2795 = vmatprep.subr.mxu0 0.0
  %2796 = vmatpush2.msra.mxu0 0.0
  %2797 = vmatprep.subr.mxu0 0.0
  %2798 = vmatpush2.msra.mxu0 0.0
  %2799 = vmatprep.subr.mxu0 0.0
  %2800 = vmatpush2.msra.mxu0 0.0
  %2801 = vmatprep.subr.mxu0 0.0
  %2802 = vmatpush2.msra.mxu0 0.0
  %2803 = vmatprep.subr.mxu0 0.0
  %2804 = vmatpush2.msra.mxu0 0.0
  %2805 = vmatprep.subr.mxu0 0.0
  %2806 = vmatpush2.msra.mxu0 0.0
  %2807 = vmatprep.subr.mxu0 0.0
  %2808 = vmatpush2.msra.mxu0 0.0
  %2809 = vmatprep.mubr.f32.mxu0 0.0
  %2810 = vmatmul.mubr.f32.gmra.mxu0 %v2743
  %v2811 = vpop.f32.mrf.mxu0
  %v2812 = vadd.f32 %v2739, %v2811
  %v2813 = vpop.f32.mrf.mxu0
  %2814 = vdwg.mxu0
  %v2815 = vadd.f32 %v2812, %v2496
  %v2816 = vxor.u32 %v2815, 2147483648
  %v2817 = vmul.f32 %v2816, 1.442695
  %v2818 = vpow.pop %v2817
  %v2819 = vadd.f32 %v2818, 1.0
  %v2820 = vrcp.pop %v2819
  %v2821 = vmul.f32 1.0, %v2820
  %v2822 = vtanh.pop %v2815
  %v2823 = vmul.f32 %v2821, %v2486
  %2825 = vrot.lane.b32.xlu0 %v2822, 64
  %v2826 = vpop.permute.xlu0 %2825
  %v2828 = vmul.f32 %v2821, %v2826
  %2830 = vrot.lane.b32.xlu0 %v2828, 32
  %v2831 = vpop.permute.xlu0 %2830
  %v2833 = vadd.f32 %v2823, %v2831
  %v2834 = vtanh.pop %v2833
  %2836 = vrot.lane.b32.xlu0 %v2834, 64
  %v2837 = vpop.permute.xlu0 %2836
  %v2839 = vmul.f32 %v2821, %v2837
  %v2840 = vld [vmem:[%s0 + $0x28] sm:$0xff]
  %v2841 = vld [vmem:[%s0 + $0x68] sm:$0xff]
  %v2842 = vld [vmem:[#allocation2 + $0x28] sm:$0xff]
  %v2843 = vld [vmem:[#allocation3 + $0x28] sm:$0xff]
  %v2844 = vld [vmem:[#allocation4 + $0x28] sm:$0xff]
  %v2845 = vld [vmem:[#allocation5 + $0x28] sm:$0xff]
  %v2846 = vld [vmem:[#allocation6 + $0x28] sm:$0xff]
  %v2847 = vld [vmem:[#allocation7 + $0x28] sm:$0xff]
  %v2848 = vsub.f32 1.0, %v2841
  %v2849 = vmul.f32 %v2841, %v2840
  %2851 = vrot.lane.b32.xlu0 %v2842, 96
  %v2852 = vpop.permute.xlu0 %2851
  %v2854 = vmul.f32 %v2839, %v2852
  %2856 = vrot.lane.b32.xlu0 %v2854, 32
  %v2857 = vpop.permute.xlu0 %2856
  %v2858 = vsel %vm922, %v2857, 0
  %2860 = vmatprep.subr.mxu0 0.0
  %2861 = vmatpush1.msra.mxu0 0.0
  %2862 = vmatprep.subr.mxu0 0.0
  %2863 = vmatpush1.msra.mxu0 0.0
  %2864 = vmatprep.subr.mxu0 0.0
  %2865 = vmatpush1.msra.mxu0 0.0
  %2866 = vmatprep.subr.mxu0 0.0
  %2867 = vmatpush1.msra.mxu0 0.0
  %2868 = vmatprep.subr.mxu0 0.0
  %2869 = vmatpush1.msra.mxu0 0.0
  %2870 = vmatprep.subr.mxu0 0.0
  %2871 = vmatpush1.msra.mxu0 0.0
  %2872 = vmatprep.subr.mxu0 0.0
  %2873 = vmatpush1.msra.mxu0 0.0
  %2874 = vmatprep.subr.mxu0 0.0
  %2875 = vmatpush1.msra.mxu0 0.0
  %2876 = vmatprep.subr.mxu0 0.0
  %2877 = vmatpush1.msra.mxu0 0.0
  %2878 = vmatprep.subr.mxu0 0.0
  %2879 = vmatpush1.msra.mxu0 0.0
  %2880 = vmatprep.subr.mxu0 0.0
  %2881 = vmatpush1.msra.mxu0 0.0
  %2882 = vmatprep.subr.mxu0 0.0
  %2883 = vmatpush1.msra.mxu0 0.0
  %2884 = vmatprep.subr.mxu0 0.0
  %2885 = vmatpush1.msra.mxu0 %v33
  %2886 = vmatprep.subr.mxu0 0.0
  %2887 = vmatpush1.msra.mxu0 %v32
  %2888 = vmatprep.subr.mxu0 0.0
  %2889 = vmatpush1.msra.mxu0 %v31
  %2890 = vmatprep.subr.mxu0 0.0
  %2891 = vmatpush1.msra.mxu0 %v30
  %2892 = vmatprep.subr.mxu0 0.0
  %2893 = vmatpush2.msra.mxu0 0.0
  %2894 = vmatprep.subr.mxu0 0.0
  %2895 = vmatpush2.msra.mxu0 0.0
  %2896 = vmatprep.subr.mxu0 0.0
  %2897 = vmatpush2.msra.mxu0 0.0
  %2898 = vmatprep.subr.mxu0 0.0
  %2899 = vmatpush2.msra.mxu0 0.0
  %2900 = vmatprep.subr.mxu0 0.0
  %2901 = vmatpush2.msra.mxu0 0.0
  %2902 = vmatprep.subr.mxu0 0.0
  %2903 = vmatpush2.msra.mxu0 0.0
  %2904 = vmatprep.subr.mxu0 0.0
  %2905 = vmatpush2.msra.mxu0 0.0
  %2906 = vmatprep.subr.mxu0 0.0
  %2907 = vmatpush2.msra.mxu0 0.0
  %2908 = vmatprep.subr.mxu0 0.0
  %2909 = vmatpush2.msra.mxu0 0.0
  %2910 = vmatprep.subr.mxu0 0.0
  %2911 = vmatpush2.msra.mxu0 0.0
  %2912 = vmatprep.subr.mxu0 0.0
  %2913 = vmatpush2.msra.mxu0 0.0
  %2914 = vmatprep.subr.mxu0 0.0
  %2915 = vmatpush2.msra.mxu0 0.0
  %2916 = vmatprep.subr.mxu0 0.0
  %2917 = vmatpush2.msra.mxu0 0.0
  %2918 = vmatprep.subr.mxu0 0.0
  %2919 = vmatpush2.msra.mxu0 0.0
  %2920 = vmatprep.subr.mxu0 0.0
  %2921 = vmatpush2.msra.mxu0 0.0
  %2922 = vmatprep.subr.mxu0 0.0
  %2923 = vmatpush2.msra.mxu0 0.0
  %2924 = vmatprep.mubr.f32.mxu0 0.0
  %2925 = vmatmul.mubr.f32.gmra.mxu0 %v2858
  %v2926 = vpop.f32.mrf.mxu0
  %v2927 = vadd.f32 %v1110, %v2926
  %v2928 = vpop.f32.mrf.mxu0
  %2929 = vdwg.mxu0
  %v2930 = vmul.f32 %v2848, %v2927
  %v2932 = vsel %vm79, %v2930, 0
  %2934 = vmatprep.subr.mxu0 0.0
  %2935 = vmatpush1.msra.mxu0 0.0
  %2936 = vmatprep.subr.mxu0 0.0
  %2937 = vmatpush1.msra.mxu0 0.0
  %2938 = vmatprep.subr.mxu0 0.0
  %2939 = vmatpush1.msra.mxu0 0.0
  %2940 = vmatprep.subr.mxu0 0.0
  %2941 = vmatpush1.msra.mxu0 0.0
  %2942 = vmatprep.subr.mxu0 0.0
  %2943 = vmatpush1.msra.mxu0 0.0
  %2944 = vmatprep.subr.mxu0 0.0
  %2945 = vmatpush1.msra.mxu0 0.0
  %2946 = vmatprep.subr.mxu0 0.0
  %2947 = vmatpush1.msra.mxu0 0.0
  %2948 = vmatprep.subr.mxu0 0.0
  %2949 = vmatpush1.msra.mxu0 0.0
  %2950 = vmatprep.subr.mxu0 0.0
  %2951 = vmatpush1.msra.mxu0 0.0
  %2952 = vmatprep.subr.mxu0 0.0
  %2953 = vmatpush1.msra.mxu0 0.0
  %2954 = vmatprep.subr.mxu0 0.0
  %2955 = vmatpush1.msra.mxu0 0.0
  %2956 = vmatprep.subr.mxu0 0.0
  %2957 = vmatpush1.msra.mxu0 0.0
  %2958 = vmatprep.subr.mxu0 0.0
  %2959 = vmatpush1.msra.mxu0 0.0
  %2960 = vmatprep.subr.mxu0 0.0
  %2961 = vmatpush1.msra.mxu0 0.0
  %2962 = vmatprep.subr.mxu0 0.0
  %2963 = vmatpush1.msra.mxu0 0.0
  %2964 = vmatprep.subr.mxu0 0.0
  %2965 = vmatpush1.msra.mxu0 %v34
  %2966 = vmatprep.subr.mxu0 0.0
  %2967 = vmatpush2.msra.mxu0 0.0
  %2968 = vmatprep.subr.mxu0 0.0
  %2969 = vmatpush2.msra.mxu0 0.0
  %2970 = vmatprep.subr.mxu0 0.0
  %2971 = vmatpush2.msra.mxu0 0.0
  %2972 = vmatprep.subr.mxu0 0.0
  %2973 = vmatpush2.msra.mxu0 0.0
  %2974 = vmatprep.subr.mxu0 0.0
  %2975 = vmatpush2.msra.mxu0 0.0
  %2976 = vmatprep.subr.mxu0 0.0
  %2977 = vmatpush2.msra.mxu0 0.0
  %2978 = vmatprep.subr.mxu0 0.0
  %2979 = vmatpush2.msra.mxu0 0.0
  %2980 = vmatprep.subr.mxu0 0.0
  %2981 = vmatpush2.msra.mxu0 0.0
  %2982 = vmatprep.subr.mxu0 0.0
  %2983 = vmatpush2.msra.mxu0 0.0
  %2984 = vmatprep.subr.mxu0 0.0
  %2985 = vmatpush2.msra.mxu0 0.0
  %2986 = vmatprep.subr.mxu0 0.0
  %2987 = vmatpush2.msra.mxu0 0.0
  %2988 = vmatprep.subr.mxu0 0.0
  %2989 = vmatpush2.msra.mxu0 0.0
  %2990 = vmatprep.subr.mxu0 0.0
  %2991 = vmatpush2.msra.mxu0 0.0
  %2992 = vmatprep.subr.mxu0 0.0
  %2993 = vmatpush2.msra.mxu0 0.0
  %2994 = vmatprep.subr.mxu0 0.0
  %2995 = vmatpush2.msra.mxu0 0.0
  %2996 = vmatprep.subr.mxu0 0.0
  %2997 = vmatpush2.msra.mxu0 0.0
  %2998 = vmatprep.mubr.f32.mxu0 0.0
  %2999 = vmatmul.mubr.f32.gmra.mxu0 %v2932
  %v3000 = vpop.f32.mrf.mxu0
  %v3001 = vadd.f32 %v2846, %v3000
  %v3002 = vpop.f32.mrf.mxu0
  %3003 = vdwg.mxu0
  %v3004 = vmul.f32 %v2844, %v3001
  %v3005 = vmul.f32 %v2845, %v2927
  %v3006 = vadd.f32 %v3004, %v3005
  %v3007 = vmul.f32 %v2848, %v3006
  %v3008 = vadd.f32 %v2849, %v3007
  %v3009 = vsub.f32 %v2840, %v2927
  %v3010 = vand.u32 2147483647, %v3009
  %v3011 = vsub.f32 %v2840, %v3001
  %v3012 = vand.u32 2147483647, %v3011
  %v3013 = vadd.f32 %v3010, %v3012
  %v3014 = vsub.f32 %v2840, %v3006
  %v3015 = vand.u32 2147483647, %v3014
  %v3016 = vadd.f32 %v3013, %v3015
  %v3017 = vmul.f32 %v3016, %v2847
  %v3018 = vadd.f32 %v2671, %v3017
  %3019 = vmatprep.subr.mxu0 0.0
  %3020 = vmatpush1.msra.mxu0 0.0
  %3021 = vmatprep.subr.mxu0 0.0
  %3022 = vmatpush1.msra.mxu0 0.0
  %3023 = vmatprep.subr.mxu0 0.0
  %3024 = vmatpush1.msra.mxu0 0.0
  %3025 = vmatprep.subr.mxu0 0.0
  %3026 = vmatpush1.msra.mxu0 0.0
  %3027 = vmatprep.subr.mxu0 0.0
  %3028 = vmatpush1.msra.mxu0 0.0
  %3029 = vmatprep.subr.mxu0 0.0
  %3030 = vmatpush1.msra.mxu0 0.0
  %3031 = vmatprep.subr.mxu0 0.0
  %3032 = vmatpush1.msra.mxu0 0.0
  %3033 = vmatprep.subr.mxu0 0.0
  %3034 = vmatpush1.msra.mxu0 0.0
  %3035 = vmatprep.subr.mxu0 0.0
  %3036 = vmatpush1.msra.mxu0 0.0
  %3037 = vmatprep.subr.mxu0 0.0
  %3038 = vmatpush1.msra.mxu0 0.0
  %3039 = vmatprep.subr.mxu0 0.0
  %3040 = vmatpush1.msra.mxu0 0.0
  %3041 = vmatprep.subr.mxu0 0.0
  %3042 = vmatpush1.msra.mxu0 0.0
  %3043 = vmatprep.subr.mxu0 0.0
  %3044 = vmatpush1.msra.mxu0 %v25
  %3045 = vmatprep.subr.mxu0 0.0
  %3046 = vmatpush1.msra.mxu0 %v24
  %3047 = vmatprep.subr.mxu0 0.0
  %3048 = vmatpush1.msra.mxu0 %v23
  %3049 = vmatprep.subr.mxu0 0.0
  %3050 = vmatpush1.msra.mxu0 %v22
  %3051 = vmatprep.subr.mxu0 0.0
  %3052 = vmatpush2.msra.mxu0 0.0
  %3053 = vmatprep.subr.mxu0 0.0
  %3054 = vmatpush2.msra.mxu0 0.0
  %3055 = vmatprep.subr.mxu0 0.0
  %3056 = vmatpush2.msra.mxu0 0.0
  %3057 = vmatprep.subr.mxu0 0.0
  %3058 = vmatpush2.msra.mxu0 0.0
  %3059 = vmatprep.subr.mxu0 0.0
  %3060 = vmatpush2.msra.mxu0 0.0
  %3061 = vmatprep.subr.mxu0 0.0
  %3062 = vmatpush2.msra.mxu0 0.0
  %3063 = vmatprep.subr.mxu0 0.0
  %3064 = vmatpush2.msra.mxu0 0.0
  %3065 = vmatprep.subr.mxu0 0.0
  %3066 = vmatpush2.msra.mxu0 0.0
  %3067 = vmatprep.subr.mxu0 0.0
  %3068 = vmatpush2.msra.mxu0 0.0
  %3069 = vmatprep.subr.mxu0 0.0
  %3070 = vmatpush2.msra.mxu0 0.0
  %3071 = vmatprep.subr.mxu0 0.0
  %3072 = vmatpush2.msra.mxu0 0.0
  %3073 = vmatprep.subr.mxu0 0.0
  %3074 = vmatpush2.msra.mxu0 0.0
  %3075 = vmatprep.subr.mxu0 0.0
  %3076 = vmatpush2.msra.mxu0 0.0
  %3077 = vmatprep.subr.mxu0 0.0
  %3078 = vmatpush2.msra.mxu0 0.0
  %3079 = vmatprep.subr.mxu0 0.0
  %3080 = vmatpush2.msra.mxu0 0.0
  %3081 = vmatprep.subr.mxu0 0.0
  %3082 = vmatpush2.msra.mxu0 0.0
  %3083 = vmatprep.mubr.f32.mxu0 0.0
  %3084 = vmatmul.mubr.f32.gmra.mxu0 %v2858
  %v3085 = vpop.f32.mrf.mxu0
  %v3086 = vadd.f32 0.0, %v3085
  %v3087 = vpop.f32.mrf.mxu0
  %3088 = vdwg.mxu0
  %v3090 = vsel %vm79, %v3007, 0
  %3092 = vmatprep.subr.mxu0 0.0
  %3093 = vmatpush1.msra.mxu0 0.0
  %3094 = vmatprep.subr.mxu0 0.0
  %3095 = vmatpush1.msra.mxu0 0.0
  %3096 = vmatprep.subr.mxu0 0.0
  %3097 = vmatpush1.msra.mxu0 0.0
  %3098 = vmatprep.subr.mxu0 0.0
  %3099 = vmatpush1.msra.mxu0 0.0
  %3100 = vmatprep.subr.mxu0 0.0
  %3101 = vmatpush1.msra.mxu0 0.0
  %3102 = vmatprep.subr.mxu0 0.0
  %3103 = vmatpush1.msra.mxu0 0.0
  %3104 = vmatprep.subr.mxu0 0.0
  %3105 = vmatpush1.msra.mxu0 0.0
  %3106 = vmatprep.subr.mxu0 0.0
  %3107 = vmatpush1.msra.mxu0 0.0
  %3108 = vmatprep.subr.mxu0 0.0
  %3109 = vmatpush1.msra.mxu0 0.0
  %3110 = vmatprep.subr.mxu0 0.0
  %3111 = vmatpush1.msra.mxu0 0.0
  %3112 = vmatprep.subr.mxu0 0.0
  %3113 = vmatpush1.msra.mxu0 0.0
  %3114 = vmatprep.subr.mxu0 0.0
  %3115 = vmatpush1.msra.mxu0 0.0
  %3116 = vmatprep.subr.mxu0 0.0
  %3117 = vmatpush1.msra.mxu0 0.0
  %3118 = vmatprep.subr.mxu0 0.0
  %3119 = vmatpush1.msra.mxu0 0.0
  %3120 = vmatprep.subr.mxu0 0.0
  %3121 = vmatpush1.msra.mxu0 0.0
  %3122 = vmatprep.subr.mxu0 0.0
  %3123 = vmatpush1.msra.mxu0 %v20
  %3124 = vmatprep.subr.mxu0 0.0
  %3125 = vmatpush2.msra.mxu0 0.0
  %3126 = vmatprep.subr.mxu0 0.0
  %3127 = vmatpush2.msra.mxu0 0.0
  %3128 = vmatprep.subr.mxu0 0.0
  %3129 = vmatpush2.msra.mxu0 0.0
  %3130 = vmatprep.subr.mxu0 0.0
  %3131 = vmatpush2.msra.mxu0 0.0
  %3132 = vmatprep.subr.mxu0 0.0
  %3133 = vmatpush2.msra.mxu0 0.0
  %3134 = vmatprep.subr.mxu0 0.0
  %3135 = vmatpush2.msra.mxu0 0.0
  %3136 = vmatprep.subr.mxu0 0.0
  %3137 = vmatpush2.msra.mxu0 0.0
  %3138 = vmatprep.subr.mxu0 0.0
  %3139 = vmatpush2.msra.mxu0 0.0
  %3140 = vmatprep.subr.mxu0 0.0
  %3141 = vmatpush2.msra.mxu0 0.0
  %3142 = vmatprep.subr.mxu0 0.0
  %3143 = vmatpush2.msra.mxu0 0.0
  %3144 = vmatprep.subr.mxu0 0.0
  %3145 = vmatpush2.msra.mxu0 0.0
  %3146 = vmatprep.subr.mxu0 0.0
  %3147 = vmatpush2.msra.mxu0 0.0
  %3148 = vmatprep.subr.mxu0 0.0
  %3149 = vmatpush2.msra.mxu0 0.0
  %3150 = vmatprep.subr.mxu0 0.0
  %3151 = vmatpush2.msra.mxu0 0.0
  %3152 = vmatprep.subr.mxu0 0.0
  %3153 = vmatpush2.msra.mxu0 0.0
  %3154 = vmatprep.subr.mxu0 0.0
  %3155 = vmatpush2.msra.mxu0 0.0
  %3156 = vmatprep.mubr.f32.mxu0 0.0
  %3157 = vmatmul.mubr.f32.gmra.mxu0 %v3090
  %v3158 = vpop.f32.mrf.mxu0
  %v3159 = vadd.f32 %v3086, %v3158
  %v3160 = vpop.f32.mrf.mxu0
  %3161 = vdwg.mxu0
  %v3162 = vadd.f32 %v3159, %v2843
  %v3163 = vxor.u32 %v3162, 2147483648
  %v3164 = vmul.f32 %v3163, 1.442695
  %v3165 = vpow.pop %v3164
  %v3166 = vadd.f32 %v3165, 1.0
  %v3167 = vrcp.pop %v3166
  %v3168 = vmul.f32 1.0, %v3167
  %v3169 = vtanh.pop %v3162
  %v3170 = vmul.f32 %v3168, %v2833
  %3172 = vrot.lane.b32.xlu0 %v3169, 64
  %v3173 = vpop.permute.xlu0 %3172
  %v3175 = vmul.f32 %v3168, %v3173
  %3177 = vrot.lane.b32.xlu0 %v3175, 32
  %v3178 = vpop.permute.xlu0 %3177
  %v3180 = vadd.f32 %v3170, %v3178
  %v3181 = vtanh.pop %v3180
  %3183 = vrot.lane.b32.xlu0 %v3181, 64
  %v3184 = vpop.permute.xlu0 %3183
  %v3186 = vmul.f32 %v3168, %v3184
  %v3187 = vld [vmem:[%s0 + $0x30] sm:$0xff]
  %v3188 = vld [vmem:[%s0 + $0x70] sm:$0xff]
  %v3189 = vld [vmem:[#allocation2 + $0x30] sm:$0xff]
  %v3190 = vld [vmem:[#allocation3 + $0x30] sm:$0xff]
  %v3191 = vld [vmem:[#allocation4 + $0x30] sm:$0xff]
  %v3192 = vld [vmem:[#allocation5 + $0x30] sm:$0xff]
  %v3193 = vld [vmem:[#allocation6 + $0x30] sm:$0xff]
  %v3194 = vld [vmem:[#allocation7 + $0x30] sm:$0xff]
  %v3195 = vsub.f32 1.0, %v3188
  %v3196 = vmul.f32 %v3188, %v3187
  %3198 = vrot.lane.b32.xlu0 %v3189, 96
  %v3199 = vpop.permute.xlu0 %3198
  %v3201 = vmul.f32 %v3186, %v3199
  %3203 = vrot.lane.b32.xlu0 %v3201, 32
  %v3204 = vpop.permute.xlu0 %3203
  %v3205 = vsel %vm922, %v3204, 0
  %3207 = vmatprep.subr.mxu0 0.0
  %3208 = vmatpush1.msra.mxu0 0.0
  %3209 = vmatprep.subr.mxu0 0.0
  %3210 = vmatpush1.msra.mxu0 0.0
  %3211 = vmatprep.subr.mxu0 0.0
  %3212 = vmatpush1.msra.mxu0 0.0
  %3213 = vmatprep.subr.mxu0 0.0
  %3214 = vmatpush1.msra.mxu0 0.0
  %3215 = vmatprep.subr.mxu0 0.0
  %3216 = vmatpush1.msra.mxu0 0.0
  %3217 = vmatprep.subr.mxu0 0.0
  %3218 = vmatpush1.msra.mxu0 0.0
  %3219 = vmatprep.subr.mxu0 0.0
  %3220 = vmatpush1.msra.mxu0 0.0
  %3221 = vmatprep.subr.mxu0 0.0
  %3222 = vmatpush1.msra.mxu0 0.0
  %3223 = vmatprep.subr.mxu0 0.0
  %3224 = vmatpush1.msra.mxu0 0.0
  %3225 = vmatprep.subr.mxu0 0.0
  %3226 = vmatpush1.msra.mxu0 0.0
  %3227 = vmatprep.subr.mxu0 0.0
  %3228 = vmatpush1.msra.mxu0 0.0
  %3229 = vmatprep.subr.mxu0 0.0
  %3230 = vmatpush1.msra.mxu0 0.0
  %3231 = vmatprep.subr.mxu0 0.0
  %3232 = vmatpush1.msra.mxu0 %v33
  %3233 = vmatprep.subr.mxu0 0.0
  %3234 = vmatpush1.msra.mxu0 %v32
  %3235 = vmatprep.subr.mxu0 0.0
  %3236 = vmatpush1.msra.mxu0 %v31
  %3237 = vmatprep.subr.mxu0 0.0
  %3238 = vmatpush1.msra.mxu0 %v30
  %3239 = vmatprep.subr.mxu0 0.0
  %3240 = vmatpush2.msra.mxu0 0.0
  %3241 = vmatprep.subr.mxu0 0.0
  %3242 = vmatpush2.msra.mxu0 0.0
  %3243 = vmatprep.subr.mxu0 0.0
  %3244 = vmatpush2.msra.mxu0 0.0
  %3245 = vmatprep.subr.mxu0 0.0
  %3246 = vmatpush2.msra.mxu0 0.0
  %3247 = vmatprep.subr.mxu0 0.0
  %3248 = vmatpush2.msra.mxu0 0.0
  %3249 = vmatprep.subr.mxu0 0.0
  %3250 = vmatpush2.msra.mxu0 0.0
  %3251 = vmatprep.subr.mxu0 0.0
  %3252 = vmatpush2.msra.mxu0 0.0
  %3253 = vmatprep.subr.mxu0 0.0
  %3254 = vmatpush2.msra.mxu0 0.0
  %3255 = vmatprep.subr.mxu0 0.0
  %3256 = vmatpush2.msra.mxu0 0.0
  %3257 = vmatprep.subr.mxu0 0.0
  %3258 = vmatpush2.msra.mxu0 0.0
  %3259 = vmatprep.subr.mxu0 0.0
  %3260 = vmatpush2.msra.mxu0 0.0
  %3261 = vmatprep.subr.mxu0 0.0
  %3262 = vmatpush2.msra.mxu0 0.0
  %3263 = vmatprep.subr.mxu0 0.0
  %3264 = vmatpush2.msra.mxu0 0.0
  %3265 = vmatprep.subr.mxu0 0.0
  %3266 = vmatpush2.msra.mxu0 0.0
  %3267 = vmatprep.subr.mxu0 0.0
  %3268 = vmatpush2.msra.mxu0 0.0
  %3269 = vmatprep.subr.mxu0 0.0
  %3270 = vmatpush2.msra.mxu0 0.0
  %3271 = vmatprep.mubr.f32.mxu0 0.0
  %3272 = vmatmul.mubr.f32.gmra.mxu0 %v3205
  %v3273 = vpop.f32.mrf.mxu0
  %v3274 = vadd.f32 %v1110, %v3273
  %v3275 = vpop.f32.mrf.mxu0
  %3276 = vdwg.mxu0
  %v3277 = vmul.f32 %v3195, %v3274
  %v3279 = vsel %vm79, %v3277, 0
  %3281 = vmatprep.subr.mxu0 0.0
  %3282 = vmatpush1.msra.mxu0 0.0
  %3283 = vmatprep.subr.mxu0 0.0
  %3284 = vmatpush1.msra.mxu0 0.0
  %3285 = vmatprep.subr.mxu0 0.0
  %3286 = vmatpush1.msra.mxu0 0.0
  %3287 = vmatprep.subr.mxu0 0.0
  %3288 = vmatpush1.msra.mxu0 0.0
  %3289 = vmatprep.subr.mxu0 0.0
  %3290 = vmatpush1.msra.mxu0 0.0
  %3291 = vmatprep.subr.mxu0 0.0
  %3292 = vmatpush1.msra.mxu0 0.0
  %3293 = vmatprep.subr.mxu0 0.0
  %3294 = vmatpush1.msra.mxu0 0.0
  %3295 = vmatprep.subr.mxu0 0.0
  %3296 = vmatpush1.msra.mxu0 0.0
  %3297 = vmatprep.subr.mxu0 0.0
  %3298 = vmatpush1.msra.mxu0 0.0
  %3299 = vmatprep.subr.mxu0 0.0
  %3300 = vmatpush1.msra.mxu0 0.0
  %3301 = vmatprep.subr.mxu0 0.0
  %3302 = vmatpush1.msra.mxu0 0.0
  %3303 = vmatprep.subr.mxu0 0.0
  %3304 = vmatpush1.msra.mxu0 0.0
  %3305 = vmatprep.subr.mxu0 0.0
  %3306 = vmatpush1.msra.mxu0 0.0
  %3307 = vmatprep.subr.mxu0 0.0
  %3308 = vmatpush1.msra.mxu0 0.0
  %3309 = vmatprep.subr.mxu0 0.0
  %3310 = vmatpush1.msra.mxu0 0.0
  %3311 = vmatprep.subr.mxu0 0.0
  %3312 = vmatpush1.msra.mxu0 %v34
  %3313 = vmatprep.subr.mxu0 0.0
  %3314 = vmatpush2.msra.mxu0 0.0
  %3315 = vmatprep.subr.mxu0 0.0
  %3316 = vmatpush2.msra.mxu0 0.0
  %3317 = vmatprep.subr.mxu0 0.0
  %3318 = vmatpush2.msra.mxu0 0.0
  %3319 = vmatprep.subr.mxu0 0.0
  %3320 = vmatpush2.msra.mxu0 0.0
  %3321 = vmatprep.subr.mxu0 0.0
  %3322 = vmatpush2.msra.mxu0 0.0
  %3323 = vmatprep.subr.mxu0 0.0
  %3324 = vmatpush2.msra.mxu0 0.0
  %3325 = vmatprep.subr.mxu0 0.0
  %3326 = vmatpush2.msra.mxu0 0.0
  %3327 = vmatprep.subr.mxu0 0.0
  %3328 = vmatpush2.msra.mxu0 0.0
  %3329 = vmatprep.subr.mxu0 0.0
  %3330 = vmatpush2.msra.mxu0 0.0
  %3331 = vmatprep.subr.mxu0 0.0
  %3332 = vmatpush2.msra.mxu0 0.0
  %3333 = vmatprep.subr.mxu0 0.0
  %3334 = vmatpush2.msra.mxu0 0.0
  %3335 = vmatprep.subr.mxu0 0.0
  %3336 = vmatpush2.msra.mxu0 0.0
  %3337 = vmatprep.subr.mxu0 0.0
  %3338 = vmatpush2.msra.mxu0 0.0
  %3339 = vmatprep.subr.mxu0 0.0
  %3340 = vmatpush2.msra.mxu0 0.0
  %3341 = vmatprep.subr.mxu0 0.0
  %3342 = vmatpush2.msra.mxu0 0.0
  %3343 = vmatprep.subr.mxu0 0.0
  %3344 = vmatpush2.msra.mxu0 0.0
  %3345 = vmatprep.mubr.f32.mxu0 0.0
  %3346 = vmatmul.mubr.f32.gmra.mxu0 %v3279
  %v3347 = vpop.f32.mrf.mxu0
  %v3348 = vadd.f32 %v3193, %v3347
  %v3349 = vpop.f32.mrf.mxu0
  %3350 = vdwg.mxu0
  %v3351 = vmul.f32 %v3191, %v3348
  %v3352 = vmul.f32 %v3192, %v3274
  %v3353 = vadd.f32 %v3351, %v3352
  %v3354 = vmul.f32 %v3195, %v3353
  %v3355 = vadd.f32 %v3196, %v3354
  %v3356 = vsub.f32 %v3187, %v3274
  %v3357 = vand.u32 2147483647, %v3356
  %v3358 = vsub.f32 %v3187, %v3348
  %v3359 = vand.u32 2147483647, %v3358
  %v3360 = vadd.f32 %v3357, %v3359
  %v3361 = vsub.f32 %v3187, %v3353
  %v3362 = vand.u32 2147483647, %v3361
  %v3363 = vadd.f32 %v3360, %v3362
  %v3364 = vmul.f32 %v3363, %v3194
  %v3365 = vadd.f32 %v3018, %v3364
  %3366 = vmatprep.subr.mxu0 0.0
  %3367 = vmatpush1.msra.mxu0 0.0
  %3368 = vmatprep.subr.mxu0 0.0
  %3369 = vmatpush1.msra.mxu0 0.0
  %3370 = vmatprep.subr.mxu0 0.0
  %3371 = vmatpush1.msra.mxu0 0.0
  %3372 = vmatprep.subr.mxu0 0.0
  %3373 = vmatpush1.msra.mxu0 0.0
  %3374 = vmatprep.subr.mxu0 0.0
  %3375 = vmatpush1.msra.mxu0 0.0
  %3376 = vmatprep.subr.mxu0 0.0
  %3377 = vmatpush1.msra.mxu0 0.0
  %3378 = vmatprep.subr.mxu0 0.0
  %3379 = vmatpush1.msra.mxu0 0.0
  %3380 = vmatprep.subr.mxu0 0.0
  %3381 = vmatpush1.msra.mxu0 0.0
  %3382 = vmatprep.subr.mxu0 0.0
  %3383 = vmatpush1.msra.mxu0 0.0
  %3384 = vmatprep.subr.mxu0 0.0
  %3385 = vmatpush1.msra.mxu0 0.0
  %3386 = vmatprep.subr.mxu0 0.0
  %3387 = vmatpush1.msra.mxu0 0.0
  %3388 = vmatprep.subr.mxu0 0.0
  %3389 = vmatpush1.msra.mxu0 0.0
  %3390 = vmatprep.subr.mxu0 0.0
  %3391 = vmatpush1.msra.mxu0 %v25
  %3392 = vmatprep.subr.mxu0 0.0
  %3393 = vmatpush1.msra.mxu0 %v24
  %3394 = vmatprep.subr.mxu0 0.0
  %3395 = vmatpush1.msra.mxu0 %v23
  %3396 = vmatprep.subr.mxu0 0.0
  %3397 = vmatpush1.msra.mxu0 %v22
  %3398 = vmatprep.subr.mxu0 0.0
  %3399 = vmatpush2.msra.mxu0 0.0
  %3400 = vmatprep.subr.mxu0 0.0
  %3401 = vmatpush2.msra.mxu0 0.0
  %3402 = vmatprep.subr.mxu0 0.0
  %3403 = vmatpush2.msra.mxu0 0.0
  %3404 = vmatprep.subr.mxu0 0.0
  %3405 = vmatpush2.msra.mxu0 0.0
  %3406 = vmatprep.subr.mxu0 0.0
  %3407 = vmatpush2.msra.mxu0 0.0
  %3408 = vmatprep.subr.mxu0 0.0
  %3409 = vmatpush2.msra.mxu0 0.0
  %3410 = vmatprep.subr.mxu0 0.0
  %3411 = vmatpush2.msra.mxu0 0.0
  %3412 = vmatprep.subr.mxu0 0.0
  %3413 = vmatpush2.msra.mxu0 0.0
  %3414 = vmatprep.subr.mxu0 0.0
  %3415 = vmatpush2.msra.mxu0 0.0
  %3416 = vmatprep.subr.mxu0 0.0
  %3417 = vmatpush2.msra.mxu0 0.0
  %3418 = vmatprep.subr.mxu0 0.0
  %3419 = vmatpush2.msra.mxu0 0.0
  %3420 = vmatprep.subr.mxu0 0.0
  %3421 = vmatpush2.msra.mxu0 0.0
  %3422 = vmatprep.subr.mxu0 0.0
  %3423 = vmatpush2.msra.mxu0 0.0
  %3424 = vmatprep.subr.mxu0 0.0
  %3425 = vmatpush2.msra.mxu0 0.0
  %3426 = vmatprep.subr.mxu0 0.0
  %3427 = vmatpush2.msra.mxu0 0.0
  %3428 = vmatprep.subr.mxu0 0.0
  %3429 = vmatpush2.msra.mxu0 0.0
  %3430 = vmatprep.mubr.f32.mxu0 0.0
  %3431 = vmatmul.mubr.f32.gmra.mxu0 %v3205
  %v3432 = vpop.f32.mrf.mxu0
  %v3433 = vadd.f32 0.0, %v3432
  %v3434 = vpop.f32.mrf.mxu0
  %3435 = vdwg.mxu0
  %v3437 = vsel %vm79, %v3354, 0
  %3439 = vmatprep.subr.mxu0 0.0
  %3440 = vmatpush1.msra.mxu0 0.0
  %3441 = vmatprep.subr.mxu0 0.0
  %3442 = vmatpush1.msra.mxu0 0.0
  %3443 = vmatprep.subr.mxu0 0.0
  %3444 = vmatpush1.msra.mxu0 0.0
  %3445 = vmatprep.subr.mxu0 0.0
  %3446 = vmatpush1.msra.mxu0 0.0
  %3447 = vmatprep.subr.mxu0 0.0
  %3448 = vmatpush1.msra.mxu0 0.0
  %3449 = vmatprep.subr.mxu0 0.0
  %3450 = vmatpush1.msra.mxu0 0.0
  %3451 = vmatprep.subr.mxu0 0.0
  %3452 = vmatpush1.msra.mxu0 0.0
  %3453 = vmatprep.subr.mxu0 0.0
  %3454 = vmatpush1.msra.mxu0 0.0
  %3455 = vmatprep.subr.mxu0 0.0
  %3456 = vmatpush1.msra.mxu0 0.0
  %3457 = vmatprep.subr.mxu0 0.0
  %3458 = vmatpush1.msra.mxu0 0.0
  %3459 = vmatprep.subr.mxu0 0.0
  %3460 = vmatpush1.msra.mxu0 0.0
  %3461 = vmatprep.subr.mxu0 0.0
  %3462 = vmatpush1.msra.mxu0 0.0
  %3463 = vmatprep.subr.mxu0 0.0
  %3464 = vmatpush1.msra.mxu0 0.0
  %3465 = vmatprep.subr.mxu0 0.0
  %3466 = vmatpush1.msra.mxu0 0.0
  %3467 = vmatprep.subr.mxu0 0.0
  %3468 = vmatpush1.msra.mxu0 0.0
  %3469 = vmatprep.subr.mxu0 0.0
  %3470 = vmatpush1.msra.mxu0 %v20
  %3471 = vmatprep.subr.mxu0 0.0
  %3472 = vmatpush2.msra.mxu0 0.0
  %3473 = vmatprep.subr.mxu0 0.0
  %3474 = vmatpush2.msra.mxu0 0.0
  %3475 = vmatprep.subr.mxu0 0.0
  %3476 = vmatpush2.msra.mxu0 0.0
  %3477 = vmatprep.subr.mxu0 0.0
  %3478 = vmatpush2.msra.mxu0 0.0
  %3479 = vmatprep.subr.mxu0 0.0
  %3480 = vmatpush2.msra.mxu0 0.0
  %3481 = vmatprep.subr.mxu0 0.0
  %3482 = vmatpush2.msra.mxu0 0.0
  %3483 = vmatprep.subr.mxu0 0.0
  %3484 = vmatpush2.msra.mxu0 0.0
  %3485 = vmatprep.subr.mxu0 0.0
  %3486 = vmatpush2.msra.mxu0 0.0
  %3487 = vmatprep.subr.mxu0 0.0
  %3488 = vmatpush2.msra.mxu0 0.0
  %3489 = vmatprep.subr.mxu0 0.0
  %3490 = vmatpush2.msra.mxu0 0.0
  %3491 = vmatprep.subr.mxu0 0.0
  %3492 = vmatpush2.msra.mxu0 0.0
  %3493 = vmatprep.subr.mxu0 0.0
  %3494 = vmatpush2.msra.mxu0 0.0
  %3495 = vmatprep.subr.mxu0 0.0
  %3496 = vmatpush2.msra.mxu0 0.0
  %3497 = vmatprep.subr.mxu0 0.0
  %3498 = vmatpush2.msra.mxu0 0.0
  %3499 = vmatprep.subr.mxu0 0.0
  %3500 = vmatpush2.msra.mxu0 0.0
  %3501 = vmatprep.subr.mxu0 0.0
  %3502 = vmatpush2.msra.mxu0 0.0
  %3503 = vmatprep.mubr.f32.mxu0 0.0
  %3504 = vmatmul.mubr.f32.gmra.mxu0 %v3437
  %v3505 = vpop.f32.mrf.mxu0
  %v3506 = vadd.f32 %v3433, %v3505
  %v3507 = vpop.f32.mrf.mxu0
  %3508 = vdwg.mxu0
  %v3509 = vadd.f32 %v3506, %v3190
  %v3510 = vxor.u32 %v3509, 2147483648
  %v3511 = vmul.f32 %v3510, 1.442695
  %v3512 = vpow.pop %v3511
  %v3513 = vadd.f32 %v3512, 1.0
  %v3514 = vrcp.pop %v3513
  %v3515 = vmul.f32 1.0, %v3514
  %v3516 = vtanh.pop %v3509
  %v3517 = vmul.f32 %v3515, %v3180
  %3519 = vrot.lane.b32.xlu0 %v3516, 64
  %v3520 = vpop.permute.xlu0 %3519
  %v3522 = vmul.f32 %v3515, %v3520
  %3524 = vrot.lane.b32.xlu0 %v3522, 32
  %v3525 = vpop.permute.xlu0 %3524
  %v3527 = vadd.f32 %v3517, %v3525
  %v3528 = vtanh.pop %v3527
  %3530 = vrot.lane.b32.xlu0 %v3528, 64
  %v3531 = vpop.permute.xlu0 %3530
  %v3533 = vmul.f32 %v3515, %v3531
  %v3534 = vld [vmem:[%s0 + $0x38] sm:$0xff]
  %v3535 = vld [vmem:[%s0 + $0x78] sm:$0xff]
  %v3536 = vld [vmem:[#allocation2 + $0x38] sm:$0xff]
  %v3537 = vld [vmem:[#allocation3 + $0x38] sm:$0xff]
  %v3538 = vld [vmem:[#allocation4 + $0x38] sm:$0xff]
  %v3539 = vld [vmem:[#allocation5 + $0x38] sm:$0xff]
  %v3540 = vld [vmem:[#allocation6 + $0x38] sm:$0xff]
  %v3541 = vld [vmem:[#allocation7 + $0x38] sm:$0xff]
  %v3542 = vsub.f32 1.0, %v3535
  %v3543 = vmul.f32 %v3535, %v3534
  %3545 = vrot.lane.b32.xlu0 %v3536, 96
  %v3546 = vpop.permute.xlu0 %3545
  %v3548 = vmul.f32 %v3533, %v3546
  %3550 = vrot.lane.b32.xlu0 %v3548, 32
  %v3551 = vpop.permute.xlu0 %3550
  %v3552 = vsel %vm922, %v3551, 0
  %3554 = vmatprep.subr.mxu0 0.0
  %3555 = vmatpush1.msra.mxu0 0.0
  %3556 = vmatprep.subr.mxu0 0.0
  %3557 = vmatpush1.msra.mxu0 0.0
  %3558 = vmatprep.subr.mxu0 0.0
  %3559 = vmatpush1.msra.mxu0 0.0
  %3560 = vmatprep.subr.mxu0 0.0
  %3561 = vmatpush1.msra.mxu0 0.0
  %3562 = vmatprep.subr.mxu0 0.0
  %3563 = vmatpush1.msra.mxu0 0.0
  %3564 = vmatprep.subr.mxu0 0.0
  %3565 = vmatpush1.msra.mxu0 0.0
  %3566 = vmatprep.subr.mxu0 0.0
  %3567 = vmatpush1.msra.mxu0 0.0
  %3568 = vmatprep.subr.mxu0 0.0
  %3569 = vmatpush1.msra.mxu0 0.0
  %3570 = vmatprep.subr.mxu0 0.0
  %3571 = vmatpush1.msra.mxu0 0.0
  %3572 = vmatprep.subr.mxu0 0.0
  %3573 = vmatpush1.msra.mxu0 0.0
  %3574 = vmatprep.subr.mxu0 0.0
  %3575 = vmatpush1.msra.mxu0 0.0
  %3576 = vmatprep.subr.mxu0 0.0
  %3577 = vmatpush1.msra.mxu0 0.0
  %3578 = vmatprep.subr.mxu0 0.0
  %3579 = vmatpush1.msra.mxu0 %v33
  %3580 = vmatprep.subr.mxu0 0.0
  %3581 = vmatpush1.msra.mxu0 %v32
  %3582 = vmatprep.subr.mxu0 0.0
  %3583 = vmatpush1.msra.mxu0 %v31
  %3584 = vmatprep.subr.mxu0 0.0
  %3585 = vmatpush1.msra.mxu0 %v30
  %3586 = vmatprep.subr.mxu0 0.0
  %3587 = vmatpush2.msra.mxu0 0.0
  %3588 = vmatprep.subr.mxu0 0.0
  %3589 = vmatpush2.msra.mxu0 0.0
  %3590 = vmatprep.subr.mxu0 0.0
  %3591 = vmatpush2.msra.mxu0 0.0
  %3592 = vmatprep.subr.mxu0 0.0
  %3593 = vmatpush2.msra.mxu0 0.0
  %3594 = vmatprep.subr.mxu0 0.0
  %3595 = vmatpush2.msra.mxu0 0.0
  %3596 = vmatprep.subr.mxu0 0.0
  %3597 = vmatpush2.msra.mxu0 0.0
  %3598 = vmatprep.subr.mxu0 0.0
  %3599 = vmatpush2.msra.mxu0 0.0
  %3600 = vmatprep.subr.mxu0 0.0
  %3601 = vmatpush2.msra.mxu0 0.0
  %3602 = vmatprep.subr.mxu0 0.0
  %3603 = vmatpush2.msra.mxu0 0.0
  %3604 = vmatprep.subr.mxu0 0.0
  %3605 = vmatpush2.msra.mxu0 0.0
  %3606 = vmatprep.subr.mxu0 0.0
  %3607 = vmatpush2.msra.mxu0 0.0
  %3608 = vmatprep.subr.mxu0 0.0
  %3609 = vmatpush2.msra.mxu0 0.0
  %3610 = vmatprep.subr.mxu0 0.0
  %3611 = vmatpush2.msra.mxu0 0.0
  %3612 = vmatprep.subr.mxu0 0.0
  %3613 = vmatpush2.msra.mxu0 0.0
  %3614 = vmatprep.subr.mxu0 0.0
  %3615 = vmatpush2.msra.mxu0 0.0
  %3616 = vmatprep.subr.mxu0 0.0
  %3617 = vmatpush2.msra.mxu0 0.0
  %3618 = vmatprep.mubr.f32.mxu0 0.0
  %3619 = vmatmul.mubr.f32.gmra.mxu0 %v3552
  %v3620 = vpop.f32.mrf.mxu0
  %v3621 = vadd.f32 %v1110, %v3620
  %v3622 = vpop.f32.mrf.mxu0
  %3623 = vdwg.mxu0
  %v3624 = vmul.f32 %v3542, %v3621
  %v3626 = vsel %vm79, %v3624, 0
  %3628 = vmatprep.subr.mxu0 0.0
  %3629 = vmatpush1.msra.mxu0 0.0
  %3630 = vmatprep.subr.mxu0 0.0
  %3631 = vmatpush1.msra.mxu0 0.0
  %3632 = vmatprep.subr.mxu0 0.0
  %3633 = vmatpush1.msra.mxu0 0.0
  %3634 = vmatprep.subr.mxu0 0.0
  %3635 = vmatpush1.msra.mxu0 0.0
  %3636 = vmatprep.subr.mxu0 0.0
  %3637 = vmatpush1.msra.mxu0 0.0
  %3638 = vmatprep.subr.mxu0 0.0
  %3639 = vmatpush1.msra.mxu0 0.0
  %3640 = vmatprep.subr.mxu0 0.0
  %3641 = vmatpush1.msra.mxu0 0.0
  %3642 = vmatprep.subr.mxu0 0.0
  %3643 = vmatpush1.msra.mxu0 0.0
  %3644 = vmatprep.subr.mxu0 0.0
  %3645 = vmatpush1.msra.mxu0 0.0
  %3646 = vmatprep.subr.mxu0 0.0
  %3647 = vmatpush1.msra.mxu0 0.0
  %3648 = vmatprep.subr.mxu0 0.0
  %3649 = vmatpush1.msra.mxu0 0.0
  %3650 = vmatprep.subr.mxu0 0.0
  %3651 = vmatpush1.msra.mxu0 0.0
  %3652 = vmatprep.subr.mxu0 0.0
  %3653 = vmatpush1.msra.mxu0 0.0
  %3654 = vmatprep.subr.mxu0 0.0
  %3655 = vmatpush1.msra.mxu0 0.0
  %3656 = vmatprep.subr.mxu0 0.0
  %3657 = vmatpush1.msra.mxu0 0.0
  %3658 = vmatprep.subr.mxu0 0.0
  %3659 = vmatpush1.msra.mxu0 %v34
  %3660 = vmatprep.subr.mxu0 0.0
  %3661 = vmatpush2.msra.mxu0 0.0
  %3662 = vmatprep.subr.mxu0 0.0
  %3663 = vmatpush2.msra.mxu0 0.0
  %3664 = vmatprep.subr.mxu0 0.0
  %3665 = vmatpush2.msra.mxu0 0.0
  %3666 = vmatprep.subr.mxu0 0.0
  %3667 = vmatpush2.msra.mxu0 0.0
  %3668 = vmatprep.subr.mxu0 0.0
  %3669 = vmatpush2.msra.mxu0 0.0
  %3670 = vmatprep.subr.mxu0 0.0
  %3671 = vmatpush2.msra.mxu0 0.0
  %3672 = vmatprep.subr.mxu0 0.0
  %3673 = vmatpush2.msra.mxu0 0.0
  %3674 = vmatprep.subr.mxu0 0.0
  %3675 = vmatpush2.msra.mxu0 0.0
  %3676 = vmatprep.subr.mxu0 0.0
  %3677 = vmatpush2.msra.mxu0 0.0
  %3678 = vmatprep.subr.mxu0 0.0
  %3679 = vmatpush2.msra.mxu0 0.0
  %3680 = vmatprep.subr.mxu0 0.0
  %3681 = vmatpush2.msra.mxu0 0.0
  %3682 = vmatprep.subr.mxu0 0.0
  %3683 = vmatpush2.msra.mxu0 0.0
  %3684 = vmatprep.subr.mxu0 0.0
  %3685 = vmatpush2.msra.mxu0 0.0
  %3686 = vmatprep.subr.mxu0 0.0
  %3687 = vmatpush2.msra.mxu0 0.0
  %3688 = vmatprep.subr.mxu0 0.0
  %3689 = vmatpush2.msra.mxu0 0.0
  %3690 = vmatprep.subr.mxu0 0.0
  %3691 = vmatpush2.msra.mxu0 0.0
  %3692 = vmatprep.mubr.f32.mxu0 0.0
  %3693 = vmatmul.mubr.f32.gmra.mxu0 %v3626
  %v3694 = vpop.f32.mrf.mxu0
  %v3695 = vadd.f32 %v3540, %v3694
  %v3696 = vpop.f32.mrf.mxu0
  %3697 = vdwg.mxu0
  %v3698 = vmul.f32 %v3538, %v3695
  %v3699 = vmul.f32 %v3539, %v3621
  %v3700 = vadd.f32 %v3698, %v3699
  %v3701 = vmul.f32 %v3542, %v3700
  %v3702 = vadd.f32 %v3543, %v3701
  %v3703 = vsub.f32 %v3534, %v3621
  %v3704 = vand.u32 2147483647, %v3703
  %v3705 = vsub.f32 %v3534, %v3695
  %v3706 = vand.u32 2147483647, %v3705
  %v3707 = vadd.f32 %v3704, %v3706
  %v3708 = vsub.f32 %v3534, %v3700
  %v3709 = vand.u32 2147483647, %v3708
  %v3710 = vadd.f32 %v3707, %v3709
  %v3711 = vmul.f32 %v3710, %v3541
  %v3712 = vadd.f32 %v3365, %v3711
  %3713 = vmatprep.subr.mxu0 0.0
  %3714 = vmatpush1.msra.mxu0 0.0
  %3715 = vmatprep.subr.mxu0 0.0
  %3716 = vmatpush1.msra.mxu0 0.0
  %3717 = vmatprep.subr.mxu0 0.0
  %3718 = vmatpush1.msra.mxu0 0.0
  %3719 = vmatprep.subr.mxu0 0.0
  %3720 = vmatpush1.msra.mxu0 0.0
  %3721 = vmatprep.subr.mxu0 0.0
  %3722 = vmatpush1.msra.mxu0 0.0
  %3723 = vmatprep.subr.mxu0 0.0
  %3724 = vmatpush1.msra.mxu0 0.0
  %3725 = vmatprep.subr.mxu0 0.0
  %3726 = vmatpush1.msra.mxu0 0.0
  %3727 = vmatprep.subr.mxu0 0.0
  %3728 = vmatpush1.msra.mxu0 0.0
  %3729 = vmatprep.subr.mxu0 0.0
  %3730 = vmatpush1.msra.mxu0 0.0
  %3731 = vmatprep.subr.mxu0 0.0
  %3732 = vmatpush1.msra.mxu0 0.0
  %3733 = vmatprep.subr.mxu0 0.0
  %3734 = vmatpush1.msra.mxu0 0.0
  %3735 = vmatprep.subr.mxu0 0.0
  %3736 = vmatpush1.msra.mxu0 0.0
  %3737 = vmatprep.subr.mxu0 0.0
  %3738 = vmatpush1.msra.mxu0 %v25
  %3739 = vmatprep.subr.mxu0 0.0
  %3740 = vmatpush1.msra.mxu0 %v24
  %3741 = vmatprep.subr.mxu0 0.0
  %3742 = vmatpush1.msra.mxu0 %v23
  %3743 = vmatprep.subr.mxu0 0.0
  %3744 = vmatpush1.msra.mxu0 %v22
  %3745 = vmatprep.subr.mxu0 0.0
  %3746 = vmatpush2.msra.mxu0 0.0
  %3747 = vmatprep.subr.mxu0 0.0
  %3748 = vmatpush2.msra.mxu0 0.0
  %3749 = vmatprep.subr.mxu0 0.0
  %3750 = vmatpush2.msra.mxu0 0.0
  %3751 = vmatprep.subr.mxu0 0.0
  %3752 = vmatpush2.msra.mxu0 0.0
  %3753 = vmatprep.subr.mxu0 0.0
  %3754 = vmatpush2.msra.mxu0 0.0
  %3755 = vmatprep.subr.mxu0 0.0
  %3756 = vmatpush2.msra.mxu0 0.0
  %3757 = vmatprep.subr.mxu0 0.0
  %3758 = vmatpush2.msra.mxu0 0.0
  %3759 = vmatprep.subr.mxu0 0.0
  %3760 = vmatpush2.msra.mxu0 0.0
  %3761 = vmatprep.subr.mxu0 0.0
  %3762 = vmatpush2.msra.mxu0 0.0
  %3763 = vmatprep.subr.mxu0 0.0
  %3764 = vmatpush2.msra.mxu0 0.0
  %3765 = vmatprep.subr.mxu0 0.0
  %3766 = vmatpush2.msra.mxu0 0.0
  %3767 = vmatprep.subr.mxu0 0.0
  %3768 = vmatpush2.msra.mxu0 0.0
  %3769 = vmatprep.subr.mxu0 0.0
  %3770 = vmatpush2.msra.mxu0 0.0
  %3771 = vmatprep.subr.mxu0 0.0
  %3772 = vmatpush2.msra.mxu0 0.0
  %3773 = vmatprep.subr.mxu0 0.0
  %3774 = vmatpush2.msra.mxu0 0.0
  %3775 = vmatprep.subr.mxu0 0.0
  %3776 = vmatpush2.msra.mxu0 0.0
  %3777 = vmatprep.mubr.f32.mxu0 0.0
  %3778 = vmatmul.mubr.f32.gmra.mxu0 %v3552
  %v3779 = vpop.f32.mrf.mxu0
  %v3780 = vadd.f32 0.0, %v3779
  %v3781 = vpop.f32.mrf.mxu0
  %3782 = vdwg.mxu0
  %v3784 = vsel %vm79, %v3701, 0
  %3786 = vmatprep.subr.mxu0 0.0
  %3787 = vmatpush1.msra.mxu0 0.0
  %3788 = vmatprep.subr.mxu0 0.0
  %3789 = vmatpush1.msra.mxu0 0.0
  %3790 = vmatprep.subr.mxu0 0.0
  %3791 = vmatpush1.msra.mxu0 0.0
  %3792 = vmatprep.subr.mxu0 0.0
  %3793 = vmatpush1.msra.mxu0 0.0
  %3794 = vmatprep.subr.mxu0 0.0
  %3795 = vmatpush1.msra.mxu0 0.0
  %3796 = vmatprep.subr.mxu0 0.0
  %3797 = vmatpush1.msra.mxu0 0.0
  %3798 = vmatprep.subr.mxu0 0.0
  %3799 = vmatpush1.msra.mxu0 0.0
  %3800 = vmatprep.subr.mxu0 0.0
  %3801 = vmatpush1.msra.mxu0 0.0
  %3802 = vmatprep.subr.mxu0 0.0
  %3803 = vmatpush1.msra.mxu0 0.0
  %3804 = vmatprep.subr.mxu0 0.0
  %3805 = vmatpush1.msra.mxu0 0.0
  %3806 = vmatprep.subr.mxu0 0.0
  %3807 = vmatpush1.msra.mxu0 0.0
  %3808 = vmatprep.subr.mxu0 0.0
  %3809 = vmatpush1.msra.mxu0 0.0
  %3810 = vmatprep.subr.mxu0 0.0
  %3811 = vmatpush1.msra.mxu0 0.0
  %3812 = vmatprep.subr.mxu0 0.0
  %3813 = vmatpush1.msra.mxu0 0.0
  %3814 = vmatprep.subr.mxu0 0.0
  %3815 = vmatpush1.msra.mxu0 0.0
  %3816 = vmatprep.subr.mxu0 0.0
  %3817 = vmatpush1.msra.mxu0 %v20
  %3818 = vmatprep.subr.mxu0 0.0
  %3819 = vmatpush2.msra.mxu0 0.0
  %3820 = vmatprep.subr.mxu0 0.0
  %3821 = vmatpush2.msra.mxu0 0.0
  %3822 = vmatprep.subr.mxu0 0.0
  %3823 = vmatpush2.msra.mxu0 0.0
  %3824 = vmatprep.subr.mxu0 0.0
  %3825 = vmatpush2.msra.mxu0 0.0
  %3826 = vmatprep.subr.mxu0 0.0
  %3827 = vmatpush2.msra.mxu0 0.0
  %3828 = vmatprep.subr.mxu0 0.0
  %3829 = vmatpush2.msra.mxu0 0.0
  %3830 = vmatprep.subr.mxu0 0.0
  %3831 = vmatpush2.msra.mxu0 0.0
  %3832 = vmatprep.subr.mxu0 0.0
  %3833 = vmatpush2.msra.mxu0 0.0
  %3834 = vmatprep.subr.mxu0 0.0
  %3835 = vmatpush2.msra.mxu0 0.0
  %3836 = vmatprep.subr.mxu0 0.0
  %3837 = vmatpush2.msra.mxu0 0.0
  %3838 = vmatprep.subr.mxu0 0.0
  %3839 = vmatpush2.msra.mxu0 0.0
  %3840 = vmatprep.subr.mxu0 0.0
  %3841 = vmatpush2.msra.mxu0 0.0
  %3842 = vmatprep.subr.mxu0 0.0
  %3843 = vmatpush2.msra.mxu0 0.0
  %3844 = vmatprep.subr.mxu0 0.0
  %3845 = vmatpush2.msra.mxu0 0.0
  %3846 = vmatprep.subr.mxu0 0.0
  %3847 = vmatpush2.msra.mxu0 0.0
  %3848 = vmatprep.subr.mxu0 0.0
  %3849 = vmatpush2.msra.mxu0 0.0
  %3850 = vmatprep.mubr.f32.mxu0 0.0
  %3851 = vmatmul.mubr.f32.gmra.mxu0 %v3784
  %v3852 = vpop.f32.mrf.mxu0
  %v3853 = vadd.f32 %v3780, %v3852
  %v3854 = vpop.f32.mrf.mxu0
  %3855 = vdwg.mxu0
  %v3856 = vadd.f32 %v3853, %v3537
  %v3857 = vxor.u32 %v3856, 2147483648
  %v3858 = vmul.f32 %v3857, 1.442695
  %v3859 = vpow.pop %v3858
  %v3860 = vadd.f32 %v3859, 1.0
  %v3861 = vrcp.pop %v3860
  %v3862 = vmul.f32 1.0, %v3861
  %v3863 = vtanh.pop %v3856
  %v3864 = vmul.f32 %v3862, %v3527
  %3866 = vrot.lane.b32.xlu0 %v3863, 64
  %v3867 = vpop.permute.xlu0 %3866
  %v3869 = vmul.f32 %v3862, %v3867
  %3871 = vrot.lane.b32.xlu0 %v3869, 32
  %v3872 = vpop.permute.xlu0 %3871
  %v3874 = vadd.f32 %v3864, %v3872
  %v3875 = vtanh.pop %v3874
  %3877 = vrot.lane.b32.xlu0 %v3875, 64
  %v3878 = vpop.permute.xlu0 %3877
  %v3880 = vmul.f32 %v3862, %v3878
  %v3881 = vsel %vm79, %v3712, 0.0
  %3882 = vadd.xlane.f32.xlu0 %v3881
  %v3883 = vpop.xlane.xlu0 %3882
  %v3884 = vrot.slane %v3883, 4
  %v3885 = vadd.f32 %v3883, %v3884
  %v3886 = vrot.slane %v3885, 2
  %v3887 = vadd.f32 %v3885, %v3886
  %v3888 = vrot.slane %v3887, 1
  %v3889 = vadd.f32 %v3887, %v3888
  %s3890 = vtos %v3889
  %v3891 = vld [vmem:[%s1] sm:$0xff]
  %v3892 = vlaneseq
  %v3893 = vshrl.u32 %v3892, 7
  %v3894 = vsub.s32 0, %v3893
  %v3895 = vrot.slane %v29, %v3894
  %3897 = vrot.lane.b32.xlu0 %v3895, 96
  %v3898 = vpop.permute.xlu0 %3897
  %v3900 = vmul.f32 %v3880, %v3898
  %3902 = vrot.lane.b32.xlu0 %v3900, 32
  %v3903 = vpop.permute.xlu0 %3902
  %v3905 = vsel %vm922, %v3903, 0.0
  %3906 = vadd.xlane.f32.xlu0 %v3905
  %v3907 = vpop.xlane.xlu0 %3906
  %v3908 = vlaneseq
  %v3909 = vshrl.u32 %v3908, 7
  %v3910 = vsub.s32 0, %v3909
  %v3911 = vrot.slane %v42, %v3910
  %v3912 = vadd.f32 %v3907, %v3911
  %v3913 = vsub.f32 0.0, %v3912
  %v3914 = vmax.f32 %v3913, 0.0
  %v3915 = vmul.f32 %v3912, %v3891
  %v3916 = vsub.f32 %v3912, %v3915
  %v3917 = vadd.f32 %v3916, %v3914
  %v3918 = vsub.f32 0.0, %v3914
  %v3919 = vmul.f32 %v3918, 1.442695
  %v3920 = vpow.pop %v3919
  %v3921 = vsub.f32 %v3913, %v3914
  %v3922 = vmul.f32 %v3921, 1.442695
  %v3923 = vpow.pop %v3922
  %v3924 = vadd.f32 %v3920, %v3923
  %v3925 = vlog2.pop %v3924
  %v3926 = vmul.f32 %v3925, 0.6931472
  %v3927 = vadd.f32 %v3917, %v3926
  %3929 = vrot.lane.b32.xlu0 %v3891, 127
  %v3930 = vpop.permute.xlu0 %3929
  %v3932 = vmul.f32 %v3927, %v3930
  %vm3933 = vcmask 7168
  %v3934 = vsel %vm3933, %v3932, 0.0
  %3935 = vadd.xlane.f32.xlu0 %v3934
  %v3936 = vpop.xlane.xlu0 %3935
  %v3937 = vrot.slane %v3936, 4
  %v3938 = vadd.f32 %v3936, %v3937
  %v3939 = vrot.slane %v3938, 2
  %v3940 = vadd.f32 %v3938, %v3939
  %v3941 = vrot.slane %v3940, 1
  %v3942 = vadd.f32 %v3940, %v3941
  %s3943 = vtos %v3942
  %v3944 = vsel %vm3933, %v3930, 0.0
  %3945 = vadd.xlane.f32.xlu0 %v3944
  %v3946 = vpop.xlane.xlu0 %3945
  %v3947 = vrot.slane %v3946, 4
  %v3948 = vadd.f32 %v3946, %v3947
  %v3949 = vrot.slane %v3948, 2
  %v3950 = vadd.f32 %v3948, %v3949
  %v3951 = vrot.slane %v3950, 1
  %v3952 = vadd.f32 %v3950, %v3951
  %s3953 = vtos %v3952
  %s3954 = sadd.f32 %s3953, 1e-05
  %v3955 = vstv %s3954
  %v3956 = vrcp.pop %v3955
  %s3957 = vtos %v3956
  %s3958 = smul.f32 %s3943, %s3957
  %v3959 = vrcp.pop 8.0
  %s3960 = vtos %v3959
  %s3961 = smul.f32 %s3890, %s3960
  %s3962 = smul.f32 %s3958, 0.1
  %s3963 = sadd.f32 %s3961, %s3962
  %v3964 = vxor.u32 %v3912, 2147483648
  %v3965 = vmul.f32 %v3964, 1.442695
  %v3966 = vpow.pop %v3965
  %v3967 = vadd.f32 %v3966, 1.0
  %v3968 = vrcp.pop %v3967
  %v3969 = vmul.f32 1.0, %v3968
  %v3970 = vlaneseq
  %v3971 = vand.u32 %v3970, 127
  %vm3972 = vcmp.eq.s32.totalorder %v3971, 0
  %vm3973 = vcmp.eq.s32.totalorder %v3971, 1
  %v3974 = vstv %s3963
  %v3975 = vsel %vm3973, %v3974, 0.0
  %3977 = vset.pattern.permute.xlu0 0
  %3978 = vperm.xlu0 %3977, %v3969
  %v3979 = vpop.permute.xlu0 %3978
  %v3981 = vsel %vm3972, %v3979, %v3975
  %3982 = vst.msk [vmem:[%s5] sm:$0xff] %vm79, %v1273
  %3983 = vst.msk [vmem:[%s5 + $0x8] sm:$0xff] %vm79, %v1620
  %3984 = vst.msk [vmem:[%s5 + $0x10] sm:$0xff] %vm79, %v1967
  %3985 = vst.msk [vmem:[%s5 + $0x18] sm:$0xff] %vm79, %v2314
  %3986 = vst.msk [vmem:[%s5 + $0x20] sm:$0xff] %vm79, %v2661
  %3987 = vst.msk [vmem:[%s5 + $0x28] sm:$0xff] %vm79, %v3008
  %3988 = vst.msk [vmem:[%s5 + $0x30] sm:$0xff] %vm79, %v3355
  %3989 = vst.msk [vmem:[%s5 + $0x38] sm:$0xff] %vm79, %v3702
  %3990 = vst.msk [vmem:[%s5 + $0x40] sm:$0xff] %vm79, %v3981
  // Predicated region
  $region22: #{rits_forward.1} parent=0 // pred_check
    _
  $region23: #{rits_forward.1} parent=0 // pred_check_branch
    %3992 = sbr.rel (0) target = $region25
  $region24: #{rits_forward.1} parent=0 // pred_region
    _
  $region25: #{rits_forward.1} parent=0 // pred_fallthru
    _
  // Predicated region
  $region26: #{rits_forward.1} parent=0 // pred_check
    _
  $region27: #{rits_forward.1} parent=0 // pred_check_branch
    %3994 = sbr.rel (0) target = $region29
  $region28: #{rits_forward.1} parent=0 // pred_region
    _
  $region29: #{rits_forward.1} parent=0 // pred_fallthru
    _

</llo_original>
